<compile_context>
chip_gen: v7x
topology: tpu7x:2x2x1
jax: 0.10.0
libtpu: 0.0.40
codegen_flags: <defaults>
</compile_context>

<pallas_src>
import functools

import jax
import jax.numpy as jnp
from jax import lax
from jax.experimental import pallas as pl
from jax.experimental.pallas import tpu as pltpu


def fused_forward_kernel(x_ref, wc1_ref, bc1_ref, s1_ref, t1_ref,
                         wc2_ref, bc2_ref, s2_ref, t2_ref,
                         wl1_hbm, bl1_ref, wl2_ref, bl2_ref, wl3_ref, bl3_ref,
                         o_ref,
                         wl1_vmem, wl1_sem,
                         *, B, L, L2, C1, C2):
    R = L * B                     # merged rows, l-major / b-minor: row = l*B + b

    # Stream the big classifier weight HBM -> VMEM; overlapped with conv work.
    wl1_copy = pltpu.make_async_copy(wl1_hbm, wl1_vmem, wl1_sem)
    wl1_copy.start()

    # ---- conv_block_1: Conv1d(Cin->64, k=3, p=1) -> ReLU -> BN -> MaxPool(2) ----
    # Conv1 taps were concatenated in the XLA wrapper (x_ref is (R, 3*Cin)),
    # so the whole conv is a single MXU dot.
    a1 = jnp.dot(x_ref[...], wc1_ref[...],
                 preferred_element_type=jnp.float32) + bc1_ref[...]
    a1 = jnp.maximum(a1, 0.0)                        # ReLU
    a1 = a1 * s1_ref[...] + t1_ref[...]              # BatchNorm (eval, folded)
    # MaxPool1d(2,2), stride-preserving: pooled value for position l1 lives at
    # row 2*B*l1 + b; other rows carry don't-care data that never reaches a
    # valid downstream row.
    h1 = jnp.maximum(a1, pltpu.roll(a1, R - B, 0))   # h1[r] = max(a1[r], a1[r+B])

    # ---- conv_block_2: Conv1d(64->128, k=3, p=1) -> BN -> ReLU -> MaxPool(2) ----
    step = 2 * B                                     # row distance between pooled positions
    rows = lax.broadcasted_iota(jnp.int32, (R, C1), 0)
    h1_prev = jnp.where(rows < step, 0.0,
                        pltpu.roll(h1, step, 0))         # tap k=0: h1 at l1-1
    h1_next = jnp.where(rows >= R - step, 0.0,
                        pltpu.roll(h1, R - step, 0))     # tap k=2: h1 at l1+1
    x2 = jnp.concatenate([h1_prev, h1, h1_next], axis=1)  # (R, 3*C1) tap concat
    a2 = jnp.dot(x2, wc2_ref[...],
                 preferred_element_type=jnp.float32) + bc2_ref[...]
    a2 = a2 * s2_ref[...] + t2_ref[...]              # BatchNorm (eval, folded)
    a2 = jnp.maximum(a2, 0.0)                        # ReLU
    h2 = jnp.maximum(a2, pltpu.roll(a2, R - step, 0))    # MaxPool1d(2,2)
    # valid pooled-twice rows: r = 4*B*l2 + b  (sublanes 0..B-1 of each 4B group)

    # ---- classifier: Linear(F->H1) -> Dropout -> Linear -> Dropout -> Linear ----
    # Tile-aligned view (L2, 4B, C2); sublanes 0..B-1 hold the real batch rows.
    h2_t = h2.reshape(L2, 4 * B, C2).astype(jnp.bfloat16)
    wl1_copy.wait()                                  # DMA hidden behind conv work
    # Flatten(l-major,c-minor) @ w_l1 expressed as a batched contraction over C2
    # with L2 as the batch dim, then a reduction over L2 -- no lane reshape.
    part = jnp.einsum('lsc,lhc->lsh', h2_t, wl1_vmem[...],
                      preferred_element_type=jnp.float32)      # (L2, 4B, H1)
    z1 = jnp.sum(part, axis=0)[:B] + bl1_ref[...]              # (B, H1)
    # TODO(synk): Dropout(0.5) layers are eval-mode identity; no stochastic mask.
    z2 = jnp.dot(z1, wl2_ref[...], preferred_element_type=jnp.float32) + bl2_ref[...]
    z3 = jnp.dot(z2, wl3_ref[...], preferred_element_type=jnp.float32) + bl3_ref[...]
    o_ref[...] = z3.astype(o_ref.dtype)


@jax.jit
def speech_accent_forward(x, params):
    B, C, H, W = x.shape
    L = H * W                       # sequence length after view(B, C, H*W)
    L2 = L // 4                     # length after the two MaxPool1d(2) stages
    C1 = params["w_c1"].shape[1]    # 64
    C2 = params["w_c2"].shape[1]    # 128
    H1 = params["b_l1"].shape[1]
    n_out = params["b_l3"].shape[1]

    # NCL -> (L, B, C) l-major rows, and conv1 tap-concat built in XLA (24 KiB).
    x_lbc = x.reshape(B, C, L).transpose(2, 0, 1)               # (L, B, C)
    zero = jnp.zeros((1, B, C), x.dtype)
    x_prev = jnp.concatenate([zero, x_lbc[:-1]], axis=0)        # row l holds x[l-1]
    x_next = jnp.concatenate([x_lbc[1:], zero], axis=0)         # row l holds x[l+1]
    x_cat = jnp.concatenate([x_prev, x_lbc, x_next], axis=-1)   # (L, B, 3C)
    x_cat = x_cat.reshape(L * B, 3 * C)

    kernel = functools.partial(fused_forward_kernel,
                               B=B, L=L, L2=L2, C1=C1, C2=C2)

    grid_spec = pltpu.PrefetchScalarGridSpec(
        num_scalar_prefetch=0,
        grid=(1,),
        in_specs=[
            pl.BlockSpec((L * B, 3 * C), lambda i: (0, 0)),     # conv1 tap-concat input
            pl.BlockSpec((3 * C, C1), lambda i: (0, 0)),        # conv1 weight (tap-concat)
            pl.BlockSpec((1, C1), lambda i: (0, 0)),            # conv1 bias
            pl.BlockSpec((1, C1), lambda i: (0, 0)),            # bn1 scale
            pl.BlockSpec((1, C1), lambda i: (0, 0)),            # bn1 shift
            pl.BlockSpec((3 * C1, C2), lambda i: (0, 0)),       # conv2 weight (tap-concat)
            pl.BlockSpec((1, C2), lambda i: (0, 0)),            # conv2 bias
            pl.BlockSpec((1, C2), lambda i: (0, 0)),            # bn2 scale
            pl.BlockSpec((1, C2), lambda i: (0, 0)),            # bn2 shift
            pl.BlockSpec(memory_space=pl.ANY),                  # w_l1 stays in HBM
            pl.BlockSpec((1, H1), lambda i: (0, 0)),            # b_l1
            pl.BlockSpec((H1, H1), lambda i: (0, 0)),           # w_l2
            pl.BlockSpec((1, H1), lambda i: (0, 0)),            # b_l2
            pl.BlockSpec((H1, n_out), lambda i: (0, 0)),        # w_l3
            pl.BlockSpec((1, n_out), lambda i: (0, 0)),         # b_l3
        ],
        out_specs=pl.BlockSpec((B, n_out), lambda i: (0, 0)),
        scratch_shapes=[
            pltpu.VMEM((L2, H1, C2), jnp.bfloat16),   # lane-dense w_l1 copy (512 KiB)
            pltpu.SemaphoreType.DMA,                  # its completion semaphore
        ],
    )

    return pl.pallas_call(
        kernel,
        out_shape=jax.ShapeDtypeStruct((B, n_out), jnp.float32),
        grid_spec=grid_spec,
        compiler_params=pltpu.CompilerParams(
            dimension_semantics=("arbitrary",)),
    )(x_cat,
      params["w_c1"], params["b_c1"], params["scale1"], params["shift1"],
      params["w_c2"], params["b_c2"], params["scale2"], params["shift2"],
      params["w_l1"], params["b_l1"],
      params["w_l2"], params["b_l2"],
      params["w_l3"], params["b_l3"])


def init_params(key, in_channels, seq_len, hidden_units, output_shape):
    ks = jax.random.split(key, 14)
    eps = 1e-5
    C1, C2 = 64, 128
    L2 = seq_len // 4

    def bn_fold(gamma, beta, mean, var):
        # Eval-mode BatchNorm1d folded to scale/shift from running statistics.
        scale = gamma / jnp.sqrt(var + eps)
        return scale, beta - mean * scale

    gamma1 = 1.0 + 0.1 * jax.random.normal(ks[2], (1, C1), jnp.float32)
    beta1 = 0.1 * jax.random.normal(ks[3], (1, C1), jnp.float32)
    scale1, shift1 = bn_fold(gamma1, beta1,
                             jnp.zeros((1, C1), jnp.float32),
                             jnp.ones((1, C1), jnp.float32))
    gamma2 = 1.0 + 0.1 * jax.random.normal(ks[6], (1, C2), jnp.float32)
    beta2 = 0.1 * jax.random.normal(ks[7], (1, C2), jnp.float32)
    scale2, shift2 = bn_fold(gamma2, beta2,
                             jnp.zeros((1, C2), jnp.float32),
                             jnp.ones((1, C2), jnp.float32))

    # LazyLinear weight in PyTorch flatten order (feature = c*L2 + l), permuted
    # ONCE to the kernel's lane-dense (L2, H1, C2) layout (C2 = 128 lanes).
    w_l1_torch = 0.02 * jax.random.normal(
        ks[8], (C2 * L2, hidden_units), jnp.float32)
    w_l1 = (w_l1_torch.reshape(C2, L2, hidden_units)
            .transpose(1, 2, 0)).astype(jnp.bfloat16)         # (L2, H1, C2)

    return {
        # conv weights in tap-concat layout: row (k*Cin + c), col = out channel
        # (a PyTorch checkpoint W[o, c, k] maps to w[(k*Cin + c), o]).
        "w_c1": 0.1 * jax.random.normal(ks[0], (3 * in_channels, C1), jnp.float32),
        "b_c1": 0.1 * jax.random.normal(ks[1], (1, C1), jnp.float32),
        "scale1": scale1, "shift1": shift1,
        "w_c2": 0.05 * jax.random.normal(ks[4], (3 * C1, C2), jnp.float32),
        "b_c2": 0.1 * jax.random.normal(ks[5], (1, C2), jnp.float32),
        "scale2": scale2, "shift2": shift2,
        # classifier: w_l1 bf16 (dominant HBM fetch, f32 accumulation); rest f32
        "w_l1": w_l1,
        "b_l1": 0.1 * jax.random.normal(ks[9], (1, hidden_units), jnp.float32),
        "w_l2": 0.1 * jax.random.normal(ks[10], (hidden_units, hidden_units),
                                        jnp.float32),
        "b_l2": 0.1 * jax.random.normal(ks[11], (1, hidden_units), jnp.float32),
        "w_l3": 0.1 * jax.random.normal(ks[12], (hidden_units, output_shape),
                                        jnp.float32),
        "b_l3": 0.1 * jax.random.normal(ks[13], (1, output_shape), jnp.float32),
    }


@jax.jit
def reference_forward(x, params):
    """Pure-XLA reference with identical semantics (for a tolerance check)."""
    B, C, H, W = x.shape
    L = H * W
    xl = x.reshape(B, C, L)
    w1 = params["w_c1"].reshape(3, C, -1)
    C1 = w1.shape[-1]
    xp = jnp.pad(xl, ((0, 0), (0, 0), (1, 1)))
    a1 = sum(jnp.einsum('bcl,co->bol', xp[:, :, k:k + L], w1[k]) for k in range(3))
    a1 = a1 + params["b_c1"].reshape(1, C1, 1)
    a1 = jnp.maximum(a1, 0.0)
    a1 = a1 * params["scale1"].reshape(1, C1, 1) + params["shift1"].reshape(1, C1, 1)
    h1 = jnp.max(a1.reshape(B, C1, L // 2, 2), axis=-1)
    w2 = params["w_c2"].reshape(3, C1, -1)
    C2 = w2.shape[-1]
    hp = jnp.pad(h1, ((0, 0), (0, 0), (1, 1)))
    a2 = sum(jnp.einsum('bcl,co->bol', hp[:, :, k:k + L // 2], w2[k]) for k in range(3))
    a2 = a2 + params["b_c2"].reshape(1, C2, 1)
    a2 = a2 * params["scale2"].reshape(1, C2, 1) + params["shift2"].reshape(1, C2, 1)
    a2 = jnp.maximum(a2, 0.0)
    h2 = jnp.max(a2.reshape(B, C2, L // 4, 2), axis=-1)          # (B, C2, L2)
    wl1 = params["w_l1"].astype(jnp.float32)                     # (L2, H1, C2)
    z1 = jnp.einsum('bcl,lhc->bh', h2, wl1) + params["b_l1"]
    z2 = z1 @ params["w_l2"] + params["b_l2"]
    return z2 @ params["w_l3"] + params["b_l3"]


if __name__ == "__main__":
    B, C, H, W = 2, 4, 16, 16          # input: (batch, channels, height, width)
    hidden_units, output_shape = 32, 8
    seq_len = H * W                    # 256 after view(B, C, H*W)

    key = jax.random.PRNGKey(0)
    k_x, k_p = jax.random.split(key)
    x = jax.random.normal(k_x, (B, C, H, W), jnp.float32)
    params = init_params(k_p, C, seq_len, hidden_units, output_shape)

    out = jax.block_until_ready(speech_accent_forward(x, params))
    ref = jax.block_until_ready(reference_forward(x, params))

    assert out.shape == (B, output_shape), out.shape
    assert jnp.all(jnp.isfinite(out))
    assert jnp.allclose(out, ref, atol=2e-2, rtol=2e-2), float(jnp.max(jnp.abs(out - ref)))
    print("KERNEL_OK")
</pallas_src>

<mosaic_0001>
module attributes {stable_mosaic.version = 11 : i64} {
  func.func @fused_forward_kernel(%arg0: i32, %arg1: memref<512x12xf32, #tpu.memory_space<vmem>>, %arg2: memref<12x64xf32, #tpu.memory_space<vmem>>, %arg3: memref<1x64xf32, #tpu.memory_space<vmem>>, %arg4: memref<1x64xf32, #tpu.memory_space<vmem>>, %arg5: memref<1x64xf32, #tpu.memory_space<vmem>>, %arg6: memref<192x128xf32, #tpu.memory_space<vmem>>, %arg7: memref<1x128xf32, #tpu.memory_space<vmem>>, %arg8: memref<1x128xf32, #tpu.memory_space<vmem>>, %arg9: memref<1x128xf32, #tpu.memory_space<vmem>>, %arg10: memref<64x32x128xbf16, #tpu.memory_space<any>>, %arg11: memref<1x32xf32, #tpu.memory_space<vmem>>, %arg12: memref<32x32xf32, #tpu.memory_space<vmem>>, %arg13: memref<1x32xf32, #tpu.memory_space<vmem>>, %arg14: memref<32x8xf32, #tpu.memory_space<vmem>>, %arg15: memref<1x8xf32, #tpu.memory_space<vmem>>, %arg16: memref<2x8xf32, #tpu.memory_space<vmem>>, %arg17: memref<64x32x128xbf16, #tpu.memory_space<vmem>>, %arg18: memref<!tpu.dma_semaphore, #tpu.memory_space<semaphore_mem>>) attributes {dimension_semantics = [#tpu.dimension_semantics<arbitrary>], iteration_bounds = array<i64: 1>, scalar_prefetch = 0 : i64, scratch_operands = 2 : i64, tpu.core_type = #tpu.core_type<tc>, window_params = [{pipeline_mode = #tpu.pipeline_mode<synchronous>, transform_indices = @transform_0, window_bounds = array<i64: 512, 12>}, {pipeline_mode = #tpu.pipeline_mode<synchronous>, transform_indices = @transform_1, window_bounds = array<i64: 12, 64>}, {pipeline_mode = #tpu.pipeline_mode<synchronous>, transform_indices = @transform_2, window_bounds = array<i64: 1, 64>}, {pipeline_mode = #tpu.pipeline_mode<synchronous>, transform_indices = @transform_3, window_bounds = array<i64: 1, 64>}, {pipeline_mode = #tpu.pipeline_mode<synchronous>, transform_indices = @transform_4, window_bounds = array<i64: 1, 64>}, {pipeline_mode = #tpu.pipeline_mode<synchronous>, transform_indices = @transform_5, window_bounds = array<i64: 192, 128>}, {pipeline_mode = #tpu.pipeline_mode<synchronous>, transform_indices = @transform_6, window_bounds = array<i64: 1, 128>}, {pipeline_mode = #tpu.pipeline_mode<synchronous>, transform_indices = @transform_7, window_bounds = array<i64: 1, 128>}, {pipeline_mode = #tpu.pipeline_mode<synchronous>, transform_indices = @transform_8, window_bounds = array<i64: 1, 128>}, {}, {pipeline_mode = #tpu.pipeline_mode<synchronous>, transform_indices = @transform_10, window_bounds = array<i64: 1, 32>}, {pipeline_mode = #tpu.pipeline_mode<synchronous>, transform_indices = @transform_11, window_bounds = array<i64: 32, 32>}, {pipeline_mode = #tpu.pipeline_mode<synchronous>, transform_indices = @transform_12, window_bounds = array<i64: 1, 32>}, {pipeline_mode = #tpu.pipeline_mode<synchronous>, transform_indices = @transform_13, window_bounds = array<i64: 32, 8>}, {pipeline_mode = #tpu.pipeline_mode<synchronous>, transform_indices = @transform_14, window_bounds = array<i64: 1, 8>}, {pipeline_mode = #tpu.pipeline_mode<synchronous>, transform_indices = @transform_15, window_bounds = array<i64: 2, 8>}]} {
    tpu.enqueue_dma source(%arg10 : memref<64x32x128xbf16, #tpu.memory_space<any>>) target(%arg17 : memref<64x32x128xbf16, #tpu.memory_space<vmem>>) target_semaphore(%arg18 : memref<!tpu.dma_semaphore, #tpu.memory_space<semaphore_mem>>)
    %c0 = arith.constant 0 : index
    %c0_0 = arith.constant 0 : index
    %0 = vector.load %arg1[%c0, %c0_0] : memref<512x12xf32, #tpu.memory_space<vmem>>, vector<512x12xf32>
    %c0_1 = arith.constant 0 : index
    %c0_2 = arith.constant 0 : index
    %1 = vector.load %arg2[%c0_1, %c0_2] : memref<12x64xf32, #tpu.memory_space<vmem>>, vector<12x64xf32>
    %cst = arith.constant dense<0.000000e+00> : vector<512x64xf32>
    %2 = tpu.matmul %0, %1, %cst {dimension_numbers = #tpu.dot_dimension_numbers<[1], [0], [0], [1], [0, 0, 1, 1], [], []>} : vector<512x12xf32>, vector<12x64xf32>, vector<512x64xf32> -> vector<512x64xf32>
    %c0_3 = arith.constant 0 : index
    %c0_4 = arith.constant 0 : index
    %3 = vector.load %arg3[%c0_3, %c0_4] : memref<1x64xf32, #tpu.memory_space<vmem>>, vector<1x64xf32>
    %4 = vector.broadcast %3 : vector<1x64xf32> to vector<512x64xf32>
    %5 = arith.addf %2, %4 : vector<512x64xf32>
    %cst_5 = arith.constant 0.000000e+00 : f32
    %6 = vector.broadcast %cst_5 : f32 to vector<512x64xf32>
    %7 = arith.maximumf %5, %6 : vector<512x64xf32>
    %c0_6 = arith.constant 0 : index
    %c0_7 = arith.constant 0 : index
    %8 = vector.load %arg4[%c0_6, %c0_7] : memref<1x64xf32, #tpu.memory_space<vmem>>, vector<1x64xf32>
    %9 = vector.broadcast %8 : vector<1x64xf32> to vector<512x64xf32>
    %10 = arith.mulf %7, %9 : vector<512x64xf32>
    %c0_8 = arith.constant 0 : index
    %c0_9 = arith.constant 0 : index
    %11 = vector.load %arg5[%c0_8, %c0_9] : memref<1x64xf32, #tpu.memory_space<vmem>>, vector<1x64xf32>
    %12 = vector.broadcast %11 : vector<1x64xf32> to vector<512x64xf32>
    %13 = arith.addf %10, %12 : vector<512x64xf32>
    %c510_i32 = arith.constant 510 : i32
    %14 = tpu.dynamic_rotate %13 by %c510_i32 dim 0 : vector<512x64xf32>, i32 -> vector<512x64xf32>
    %15 = arith.maximumf %13, %14 : vector<512x64xf32>
    %16 = tpu.iota {dimensions = array<i32: 0>} : vector<512x64xi32>
    %c4_i32 = arith.constant 4 : i32
    %17 = vector.broadcast %c4_i32 : i32 to vector<512x64xi32>
    %18 = arith.cmpi slt, %16, %17 : vector<512x64xi32>
    %c4_i32_10 = arith.constant 4 : i32
    %19 = tpu.dynamic_rotate %15 by %c4_i32_10 dim 0 : vector<512x64xf32>, i32 -> vector<512x64xf32>
    %cst_11 = arith.constant 0.000000e+00 : f32
    %20 = vector.broadcast %cst_11 : f32 to vector<512x64xf32>
    %21 = arith.select %18, %20, %19 : vector<512x64xi1>, vector<512x64xf32>
    %c508_i32 = arith.constant 508 : i32
    %22 = vector.broadcast %c508_i32 : i32 to vector<512x64xi32>
    %23 = arith.cmpi sge, %16, %22 : vector<512x64xi32>
    %c508_i32_12 = arith.constant 508 : i32
    %24 = tpu.dynamic_rotate %15 by %c508_i32_12 dim 0 : vector<512x64xf32>, i32 -> vector<512x64xf32>
    %cst_13 = arith.constant 0.000000e+00 : f32
    %25 = vector.broadcast %cst_13 : f32 to vector<512x64xf32>
    %26 = arith.select %23, %25, %24 : vector<512x64xi1>, vector<512x64xf32>
    %27 = tpu.concatenate %21, %15, %26 in 1 : vector<512x64xf32>, vector<512x64xf32>, vector<512x64xf32> -> vector<512x192xf32>
    %c0_14 = arith.constant 0 : index
    %c0_15 = arith.constant 0 : index
    %28 = vector.load %arg6[%c0_14, %c0_15] : memref<192x128xf32, #tpu.memory_space<vmem>>, vector<192x128xf32>
    %cst_16 = arith.constant dense<0.000000e+00> : vector<512x128xf32>
    %29 = tpu.matmul %27, %28, %cst_16 {dimension_numbers = #tpu.dot_dimension_numbers<[1], [0], [0], [1], [0, 0, 1, 1], [], []>} : vector<512x192xf32>, vector<192x128xf32>, vector<512x128xf32> -> vector<512x128xf32>
    %c0_17 = arith.constant 0 : index
    %c0_18 = arith.constant 0 : index
    %30 = vector.load %arg7[%c0_17, %c0_18] : memref<1x128xf32, #tpu.memory_space<vmem>>, vector<1x128xf32>
    %31 = vector.broadcast %30 : vector<1x128xf32> to vector<512x128xf32>
    %32 = arith.addf %29, %31 : vector<512x128xf32>
    %c0_19 = arith.constant 0 : index
    %c0_20 = arith.constant 0 : index
    %33 = vector.load %arg8[%c0_19, %c0_20] : memref<1x128xf32, #tpu.memory_space<vmem>>, vector<1x128xf32>
    %34 = vector.broadcast %33 : vector<1x128xf32> to vector<512x128xf32>
    %35 = arith.mulf %32, %34 : vector<512x128xf32>
    %c0_21 = arith.constant 0 : index
    %c0_22 = arith.constant 0 : index
    %36 = vector.load %arg9[%c0_21, %c0_22] : memref<1x128xf32, #tpu.memory_space<vmem>>, vector<1x128xf32>
    %37 = vector.broadcast %36 : vector<1x128xf32> to vector<512x128xf32>
    %38 = arith.addf %35, %37 : vector<512x128xf32>
    %cst_23 = arith.constant 0.000000e+00 : f32
    %39 = vector.broadcast %cst_23 : f32 to vector<512x128xf32>
    %40 = arith.maximumf %38, %39 : vector<512x128xf32>
    %c508_i32_24 = arith.constant 508 : i32
    %41 = tpu.dynamic_rotate %40 by %c508_i32_24 dim 0 : vector<512x128xf32>, i32 -> vector<512x128xf32>
    %42 = arith.maximumf %40, %41 : vector<512x128xf32>
    %43 = vector.shape_cast %42 : vector<512x128xf32> to vector<64x8x128xf32>
    %44 = arith.truncf %43 : vector<64x8x128xf32> to vector<64x8x128xbf16>
    tpu.wait_dma2 semaphore(%arg18 : memref<!tpu.dma_semaphore, #tpu.memory_space<semaphore_mem>>) src(%arg10 : memref<64x32x128xbf16, #tpu.memory_space<any>>) dst(%arg17 : memref<64x32x128xbf16, #tpu.memory_space<vmem>>)
    %c0_25 = arith.constant 0 : index
    %c0_26 = arith.constant 0 : index
    %c0_27 = arith.constant 0 : index
    %45 = vector.load %arg17[%c0_25, %c0_26, %c0_27] : memref<64x32x128xbf16, #tpu.memory_space<vmem>>, vector<64x32x128xbf16>
    "tpu.trace_start"() <{level = 10 : i32, message = "lsc,lhc->lsh"}> : () -> ()
    %cst_28 = arith.constant dense<0.000000e+00> : vector<64x8x32xf32>
    %46 = tpu.matmul %44, %45, %cst_28 {dimension_numbers = #tpu.dot_dimension_numbers<[2], [2], [1], [1], [0, 0, 0, 1, 1, 1], [0], [0]>} : vector<64x8x128xbf16>, vector<64x32x128xbf16>, vector<64x8x32xf32> -> vector<64x8x32xf32>
    "tpu.trace_stop"() : () -> ()
    %cst_29 = arith.constant dense<0.000000e+00> : vector<8x32xf32>
    %47 = vector.multi_reduction <add>, %46, %cst_29 [0] : vector<64x8x32xf32> to vector<8x32xf32>
    %48 = vector.extract_strided_slice %47 {offsets = [0, 0], sizes = [2, 32], strides = [1, 1]} : vector<8x32xf32> to vector<2x32xf32>
    %c0_30 = arith.constant 0 : index
    %c0_31 = arith.constant 0 : index
    %49 = vector.load %arg11[%c0_30, %c0_31] : memref<1x32xf32, #tpu.memory_space<vmem>>, vector<1x32xf32>
    %50 = vector.broadcast %49 : vector<1x32xf32> to vector<2x32xf32>
    %51 = arith.addf %48, %50 : vector<2x32xf32>
    %c0_32 = arith.constant 0 : index
    %c0_33 = arith.constant 0 : index
    %52 = vector.load %arg12[%c0_32, %c0_33] : memref<32x32xf32, #tpu.memory_space<vmem>>, vector<32x32xf32>
    %cst_34 = arith.constant dense<0.000000e+00> : vector<2x32xf32>
    %53 = tpu.matmul %51, %52, %cst_34 {dimension_numbers = #tpu.dot_dimension_numbers<[1], [0], [0], [1], [0, 0, 1, 1], [], []>} : vector<2x32xf32>, vector<32x32xf32>, vector<2x32xf32> -> vector<2x32xf32>
    %c0_35 = arith.constant 0 : index
    %c0_36 = arith.constant 0 : index
    %54 = vector.load %arg13[%c0_35, %c0_36] : memref<1x32xf32, #tpu.memory_space<vmem>>, vector<1x32xf32>
    %55 = vector.broadcast %54 : vector<1x32xf32> to vector<2x32xf32>
    %56 = arith.addf %53, %55 : vector<2x32xf32>
    %c0_37 = arith.constant 0 : index
    %c0_38 = arith.constant 0 : index
    %57 = vector.load %arg14[%c0_37, %c0_38] : memref<32x8xf32, #tpu.memory_space<vmem>>, vector<32x8xf32>
    %cst_39 = arith.constant dense<0.000000e+00> : vector<2x8xf32>
    %58 = tpu.matmul %56, %57, %cst_39 {dimension_numbers = #tpu.dot_dimension_numbers<[1], [0], [0], [1], [0, 0, 1, 1], [], []>} : vector<2x32xf32>, vector<32x8xf32>, vector<2x8xf32> -> vector<2x8xf32>
    %c0_40 = arith.constant 0 : index
    %c0_41 = arith.constant 0 : index
    %59 = vector.load %arg15[%c0_40, %c0_41] : memref<1x8xf32, #tpu.memory_space<vmem>>, vector<1x8xf32>
    %60 = vector.broadcast %59 : vector<1x8xf32> to vector<2x8xf32>
    %61 = arith.addf %58, %60 : vector<2x8xf32>
    %c0_42 = arith.constant 0 : index
    %c0_43 = arith.constant 0 : index
    %62 = vector.load %arg16[%c0_42, %c0_43] : memref<2x8xf32, #tpu.memory_space<vmem>>, vector<2x8xf32>
    tpu.vector_store %arg16[%c0_42, %c0_43], %61 {strides = array<i32>} : memref<2x8xf32, #tpu.memory_space<vmem>>, vector<2x8xf32>,
    return
  }
  func.func @transform_0(%arg0: i32) -> (i32, i32) {
    %c0_i32 = arith.constant 0 : i32
    %c0_i32_0 = arith.constant 0 : i32
    %c0_i32_1 = arith.constant 0 : i32
    return %c0_i32, %c0_i32_0 : i32, i32
  }
  func.func @transform_1(%arg0: i32) -> (i32, i32) {
    %c0_i32 = arith.constant 0 : i32
    %c0_i32_0 = arith.constant 0 : i32
    %c0_i32_1 = arith.constant 0 : i32
    return %c0_i32, %c0_i32_0 : i32, i32
  }
  func.func @transform_2(%arg0: i32) -> (i32, i32) {
    %c0_i32 = arith.constant 0 : i32
    %c0_i32_0 = arith.constant 0 : i32
    %c0_i32_1 = arith.constant 0 : i32
    return %c0_i32, %c0_i32_0 : i32, i32
  }
  func.func @transform_3(%arg0: i32) -> (i32, i32) {
    %c0_i32 = arith.constant 0 : i32
    %c0_i32_0 = arith.constant 0 : i32
    %c0_i32_1 = arith.constant 0 : i32
    return %c0_i32, %c0_i32_0 : i32, i32
  }
  func.func @transform_4(%arg0: i32) -> (i32, i32) {
    %c0_i32 = arith.constant 0 : i32
    %c0_i32_0 = arith.constant 0 : i32
    %c0_i32_1 = arith.constant 0 : i32
    return %c0_i32, %c0_i32_0 : i32, i32
  }
  func.func @transform_5(%arg0: i32) -> (i32, i32) {
    %c0_i32 = arith.constant 0 : i32
    %c0_i32_0 = arith.constant 0 : i32
    %c0_i32_1 = arith.constant 0 : i32
    return %c0_i32, %c0_i32_0 : i32, i32
  }
  func.func @transform_6(%arg0: i32) -> (i32, i32) {
    %c0_i32 = arith.constant 0 : i32
    %c0_i32_0 = arith.constant 0 : i32
    %c0_i32_1 = arith.constant 0 : i32
    return %c0_i32, %c0_i32_0 : i32, i32
  }
  func.func @transform_7(%arg0: i32) -> (i32, i32) {
    %c0_i32 = arith.constant 0 : i32
    %c0_i32_0 = arith.constant 0 : i32
    %c0_i32_1 = arith.constant 0 : i32
    return %c0_i32, %c0_i32_0 : i32, i32
  }
  func.func @transform_8(%arg0: i32) -> (i32, i32) {
    %c0_i32 = arith.constant 0 : i32
    %c0_i32_0 = arith.constant 0 : i32
    %c0_i32_1 = arith.constant 0 : i32
    return %c0_i32, %c0_i32_0 : i32, i32
  }
  func.func @transform_10(%arg0: i32) -> (i32, i32) {
    %c0_i32 = arith.constant 0 : i32
    %c0_i32_0 = arith.constant 0 : i32
    %c0_i32_1 = arith.constant 0 : i32
    return %c0_i32, %c0_i32_0 : i32, i32
  }
  func.func @transform_11(%arg0: i32) -> (i32, i32) {
    %c0_i32 = arith.constant 0 : i32
    %c0_i32_0 = arith.constant 0 : i32
    %c0_i32_1 = arith.constant 0 : i32
    return %c0_i32, %c0_i32_0 : i32, i32
  }
  func.func @transform_12(%arg0: i32) -> (i32, i32) {
    %c0_i32 = arith.constant 0 : i32
    %c0_i32_0 = arith.constant 0 : i32
    %c0_i32_1 = arith.constant 0 : i32
    return %c0_i32, %c0_i32_0 : i32, i32
  }
  func.func @transform_13(%arg0: i32) -> (i32, i32) {
    %c0_i32 = arith.constant 0 : i32
    %c0_i32_0 = arith.constant 0 : i32
    %c0_i32_1 = arith.constant 0 : i32
    return %c0_i32, %c0_i32_0 : i32, i32
  }
  func.func @transform_14(%arg0: i32) -> (i32, i32) {
    %c0_i32 = arith.constant 0 : i32
    %c0_i32_0 = arith.constant 0 : i32
    %c0_i32_1 = arith.constant 0 : i32
    return %c0_i32, %c0_i32_0 : i32, i32
  }
  func.func @transform_15(%arg0: i32) -> (i32, i32) {
    %c0_i32 = arith.constant 0 : i32
    %c0_i32_0 = arith.constant 0 : i32
    %c0_i32_1 = arith.constant 0 : i32
    return %c0_i32, %c0_i32_0 : i32, i32
  }
}

</mosaic_0001>

<llo_original>
// kernel: speech_accent_forward.1
$region0: #{speech_accent_forward.1}
  #allocation0 [shape = 'u32[]', space=smem, size = 0x4, offset = 0x4, fixed_abs, tag = 'smem constant byte address 0x4 - core index']
  #allocation1 [shape = 'u32[144,128]{1,0:T(1,128)}', space=vmem, size = 0x12000, scoped, tag = 'internal scratch']
  #allocation2 [shape = 'bf16[64,32,128]{2,1,0:T(16,128)(2,1)}', space=vmem, size = 0x80000, scoped, tag = 'scratch operand']
  #allocation3 [shape = 's32[1]{0}', space=sflag, size = 0x4, scoped, tag = 'scratch operand']
  #allocation6 [shape = 's32[]', space=sflag, size = 0x4, offset = 0, fixed_abs, tag = 'sflag constant byte address 0x0 - dummy sync flag']
  #allocation7 [shape = 's32[]', space=sflag, size = 0x4, offset = 0, fixed_abs, tag = 'sflag constant byte address 0x0 - dummy sync flag']
  #allocation8 [shape = 'u32[]', space=smem, size = 0x4, offset = 0x44, fixed_abs, tag = 'smem constant byte address 0x44 - assertion arg 0']
  #allocation9 [shape = 'u32[]', space=smem, size = 0x4, offset = 0x48, fixed_abs, tag = 'smem constant byte address 0x48 - assertion arg 1']
  %s0 = inlined_call_operand.vmem [shape: f32[512,12], index: 0, kind: input, shape index: {}]
  %s1 = inlined_call_operand.vmem [shape: f32[12,64], index: 1, kind: input, shape index: {}]
  %s2 = inlined_call_operand.vmem [shape: f32[1,64], index: 2, kind: input, shape index: {}]
  %s3 = inlined_call_operand.vmem [shape: f32[1,64], index: 3, kind: input, shape index: {}]
  %s4 = inlined_call_operand.vmem [shape: f32[1,64], index: 4, kind: input, shape index: {}]
  %s5 = inlined_call_operand.vmem [shape: f32[192,128], index: 5, kind: input, shape index: {}]
  %s6 = inlined_call_operand.vmem [shape: f32[1,128], index: 6, kind: input, shape index: {}]
  %s7 = inlined_call_operand.vmem [shape: f32[1,128], index: 7, kind: input, shape index: {}]
  %s8 = inlined_call_operand.vmem [shape: f32[1,128], index: 8, kind: input, shape index: {}]
  %s9 = inlined_call_operand.hbm [shape: bf16[64,32,128], index: 9, kind: input, shape index: {}]
  %s10 = inlined_call_operand.vmem [shape: f32[1,32], index: 10, kind: input, shape index: {}]
  %s11 = inlined_call_operand.vmem [shape: f32[32,32], index: 11, kind: input, shape index: {}]
  %s12 = inlined_call_operand.vmem [shape: f32[1,32], index: 12, kind: input, shape index: {}]
  %s13 = inlined_call_operand.vmem [shape: f32[32,8], index: 13, kind: input, shape index: {}]
  %s14 = inlined_call_operand.vmem [shape: f32[1,8], index: 14, kind: input, shape index: {}]
  %s15 = inlined_call_operand.hbm [shape: f32[2,8], index: 15, kind: output, shape index: {}]
  %s16 = sld [smem:[#allocation0]]
  $region70: #{speech_accent_forward.1} parent=0
    _
  %s18 = ssub.s32 1, %s16
  %s19 = scalar_select 0, %s18, %s16
  $region1: #{speech_accent_forward.1} parent=0
    #allocation4 [shape = 'u8[1024]{0}', space=vmem, size = 0x400, scoped, tag = 'output window, operand 0, single buffered']
    #allocation5 [shape = 's32[1]{0}', space=sflag, size = 0x4, scoped, tag = 'scoped memory for speech_accent_forward.1']
    %20 = vsyncpa [#allocation5], 0
    // Predicated region
    $region2: #{speech_accent_forward.1} parent=1 // pred_check
      _
    $region3: #{speech_accent_forward.1} parent=1 // pred_check_branch
      %22 = sbr.rel (0) target = $region5
    $region4: #{speech_accent_forward.1} parent=1 // pred_region
      _
    $region5: #{speech_accent_forward.1} parent=1 // pred_fallthru
      _
    // Predicated region
    $region6: #{speech_accent_forward.1} parent=1 // pred_check
      _
    $region7: #{speech_accent_forward.1} parent=1 // pred_check_branch
      %24 = sbr.rel (0) target = $region9
    $region8: #{speech_accent_forward.1} parent=1 // pred_region
      _
    $region9: #{speech_accent_forward.1} parent=1 // pred_fallthru
      _
    // Predicated region
    $region10: #{speech_accent_forward.1} parent=1 // pred_check
      _
    $region11: #{speech_accent_forward.1} parent=1 // pred_check_branch
      %26 = sbr.rel (0) target = $region13
    $region12: #{speech_accent_forward.1} parent=1 // pred_region
      _
    $region13: #{speech_accent_forward.1} parent=1 // pred_fallthru
      _
    // Predicated region
    $region14: #{speech_accent_forward.1} parent=1 // pred_check
      _
    $region15: #{speech_accent_forward.1} parent=1 // pred_check_branch
      %28 = sbr.rel (0) target = $region17
    $region16: #{speech_accent_forward.1} parent=1 // pred_region
      _
    $region17: #{speech_accent_forward.1} parent=1 // pred_fallthru
      _
    // Predicated region
    $region18: #{speech_accent_forward.1} parent=1 // pred_check
      _
    $region19: #{speech_accent_forward.1} parent=1 // pred_check_branch
      %30 = sbr.rel (0) target = $region21
    $region20: #{speech_accent_forward.1} parent=1 // pred_region
      _
    $region21: #{speech_accent_forward.1} parent=1 // pred_fallthru
      _
    // Predicated region
    $region22: #{speech_accent_forward.1} parent=1 // pred_check
      _
    $region23: #{speech_accent_forward.1} parent=1 // pred_check_branch
      %32 = sbr.rel (0) target = $region25
    $region24: #{speech_accent_forward.1} parent=1 // pred_region
      _
    $region25: #{speech_accent_forward.1} parent=1 // pred_fallthru
      _
    // Predicated region
    $region26: #{speech_accent_forward.1} parent=1 // pred_check
      _
    $region27: #{speech_accent_forward.1} parent=1 // pred_check_branch
      %34 = sbr.rel (0) target = $region29
    $region28: #{speech_accent_forward.1} parent=1 // pred_region
      _
    $region29: #{speech_accent_forward.1} parent=1 // pred_fallthru
      _
    // Predicated region
    $region30: #{speech_accent_forward.1} parent=1 // pred_check
      _
    $region31: #{speech_accent_forward.1} parent=1 // pred_check_branch
      %36 = sbr.rel (0) target = $region33
    $region32: #{speech_accent_forward.1} parent=1 // pred_region
      _
    $region33: #{speech_accent_forward.1} parent=1 // pred_fallthru
      _
    // Predicated region
    $region34: #{speech_accent_forward.1} parent=1 // pred_check
      _
    $region35: #{speech_accent_forward.1} parent=1 // pred_check_branch
      %38 = sbr.rel (0) target = $region37
    $region36: #{speech_accent_forward.1} parent=1 // pred_region
      _
    $region37: #{speech_accent_forward.1} parent=1 // pred_fallthru
      _
    // Predicated region
    $region38: #{speech_accent_forward.1} parent=1 // pred_check
      _
    $region39: #{speech_accent_forward.1} parent=1 // pred_check_branch
      %40 = sbr.rel (0) target = $region41
    $region40: #{speech_accent_forward.1} parent=1 // pred_region
      _
    $region41: #{speech_accent_forward.1} parent=1 // pred_fallthru
      _
    // Predicated region
    $region42: #{speech_accent_forward.1} parent=1 // pred_check
      _
    $region43: #{speech_accent_forward.1} parent=1 // pred_check_branch
      %42 = sbr.rel (0) target = $region45
    $region44: #{speech_accent_forward.1} parent=1 // pred_region
      _
    $region45: #{speech_accent_forward.1} parent=1 // pred_fallthru
      _
    // Predicated region
    $region46: #{speech_accent_forward.1} parent=1 // pred_check
      _
    $region47: #{speech_accent_forward.1} parent=1 // pred_check_branch
      %44 = sbr.rel (0) target = $region49
    $region48: #{speech_accent_forward.1} parent=1 // pred_region
      _
    $region49: #{speech_accent_forward.1} parent=1 // pred_fallthru
      _
    // Predicated region
    $region50: #{speech_accent_forward.1} parent=1 // pred_check
      _
    $region51: #{speech_accent_forward.1} parent=1 // pred_check_branch
      %46 = sbr.rel (0) target = $region53
    $region52: #{speech_accent_forward.1} parent=1 // pred_region
      _
    $region53: #{speech_accent_forward.1} parent=1 // pred_fallthru
      _
    // Predicated region
    $region54: #{speech_accent_forward.1} parent=1 // pred_check
      _
    $region55: #{speech_accent_forward.1} parent=1 // pred_check_branch
      %48 = sbr.rel (0) target = $region57
    $region56: #{speech_accent_forward.1} parent=1 // pred_region
      _
    $region57: #{speech_accent_forward.1} parent=1 // pred_fallthru
      _
    // Predicated region
    $region58: #{speech_accent_forward.1} parent=1 // pred_check
      _
    $region59: #{speech_accent_forward.1} parent=1 // pred_check_branch
      %51 = sbr.rel target = $region61
    $region60: #{speech_accent_forward.1} parent=1 // pred_region
      %52 = sst [smem:[#allocation8]] [#allocation7]
      %53 = sst [smem:[#allocation9]] [#allocation6]
    $region61: #{speech_accent_forward.1} parent=1 // pred_fallthru
      _
    %55 = shalt.err (0)
    %s57 = sshll.u32 [#allocation2], 4
    %s58 = int_to_ptr.vmem [resolvable:$true] %s57
    %60 = dma.hbm_to_vmem [thread:$0]  %s9, 16384, %s58, [#allocation3]
    %v61 = vld [vmem:[%s0] sm:$0xff]
    %v62 = vld [vmem:[%s0 + $0x8] sm:$0xff]
    %v63 = vld [vmem:[%s0 + $0x10] sm:$0xff]
    %v64 = vld [vmem:[%s0 + $0x18] sm:$0xff]
    %v65 = vld [vmem:[%s0 + $0x20] sm:$0xff]
    %v66 = vld [vmem:[%s0 + $0x28] sm:$0xff]
    %v67 = vld [vmem:[%s0 + $0x30] sm:$0xff]
    %v68 = vld [vmem:[%s0 + $0x38] sm:$0xff]
    %v69 = vld [vmem:[%s0 + $0x40] sm:$0xff]
    %v70 = vld [vmem:[%s0 + $0x48] sm:$0xff]
    %v71 = vld [vmem:[%s0 + $0x50] sm:$0xff]
    %v72 = vld [vmem:[%s0 + $0x58] sm:$0xff]
    %v73 = vld [vmem:[%s0 + $0x60] sm:$0xff]
    %v74 = vld [vmem:[%s0 + $0x68] sm:$0xff]
    %v75 = vld [vmem:[%s0 + $0x70] sm:$0xff]
    %v76 = vld [vmem:[%s0 + $0x78] sm:$0xff]
    %v77 = vld [vmem:[%s0 + $0x80] sm:$0xff]
    %v78 = vld [vmem:[%s0 + $0x88] sm:$0xff]
    %v79 = vld [vmem:[%s0 + $0x90] sm:$0xff]
    %v80 = vld [vmem:[%s0 + $0x98] sm:$0xff]
    %v81 = vld [vmem:[%s0 + $0xa0] sm:$0xff]
    %v82 = vld [vmem:[%s0 + $0xa8] sm:$0xff]
    %v83 = vld [vmem:[%s0 + $0xb0] sm:$0xff]
    %v84 = vld [vmem:[%s0 + $0xb8] sm:$0xff]
    %v85 = vld [vmem:[%s0 + $0xc0] sm:$0xff]
    %v86 = vld [vmem:[%s0 + $0xc8] sm:$0xff]
    %v87 = vld [vmem:[%s0 + $0xd0] sm:$0xff]
    %v88 = vld [vmem:[%s0 + $0xd8] sm:$0xff]
    %v89 = vld [vmem:[%s0 + $0xe0] sm:$0xff]
    %v90 = vld [vmem:[%s0 + $0xe8] sm:$0xff]
    %v91 = vld [vmem:[%s0 + $0xf0] sm:$0xff]
    %v92 = vld [vmem:[%s0 + $0xf8] sm:$0xff]
    %v93 = vld [vmem:[%s0 + $0x100] sm:$0xff]
    %v94 = vld [vmem:[%s0 + $0x108] sm:$0xff]
    %v95 = vld [vmem:[%s0 + $0x110] sm:$0xff]
    %v96 = vld [vmem:[%s0 + $0x118] sm:$0xff]
    %v97 = vld [vmem:[%s0 + $0x120] sm:$0xff]
    %v98 = vld [vmem:[%s0 + $0x128] sm:$0xff]
    %v99 = vld [vmem:[%s0 + $0x130] sm:$0xff]
    %v100 = vld [vmem:[%s0 + $0x138] sm:$0xff]
    %v101 = vld [vmem:[%s0 + $0x140] sm:$0xff]
    %v102 = vld [vmem:[%s0 + $0x148] sm:$0xff]
    %v103 = vld [vmem:[%s0 + $0x150] sm:$0xff]
    %v104 = vld [vmem:[%s0 + $0x158] sm:$0xff]
    %v105 = vld [vmem:[%s0 + $0x160] sm:$0xff]
    %v106 = vld [vmem:[%s0 + $0x168] sm:$0xff]
    %v107 = vld [vmem:[%s0 + $0x170] sm:$0xff]
    %v108 = vld [vmem:[%s0 + $0x178] sm:$0xff]
    %v109 = vld [vmem:[%s0 + $0x180] sm:$0xff]
    %v110 = vld [vmem:[%s0 + $0x188] sm:$0xff]
    %v111 = vld [vmem:[%s0 + $0x190] sm:$0xff]
    %v112 = vld [vmem:[%s0 + $0x198] sm:$0xff]
    %v113 = vld [vmem:[%s0 + $0x1a0] sm:$0xff]
    %v114 = vld [vmem:[%s0 + $0x1a8] sm:$0xff]
    %v115 = vld [vmem:[%s0 + $0x1b0] sm:$0xff]
    %v116 = vld [vmem:[%s0 + $0x1b8] sm:$0xff]
    %v117 = vld [vmem:[%s0 + $0x1c0] sm:$0xff]
    %v118 = vld [vmem:[%s0 + $0x1c8] sm:$0xff]
    %v119 = vld [vmem:[%s0 + $0x1d0] sm:$0xff]
    %v120 = vld [vmem:[%s0 + $0x1d8] sm:$0xff]
    %v121 = vld [vmem:[%s0 + $0x1e0] sm:$0xff]
    %v122 = vld [vmem:[%s0 + $0x1e8] sm:$0xff]
    %v123 = vld [vmem:[%s0 + $0x1f0] sm:$0xff]
    %v124 = vld [vmem:[%s0 + $0x1f8] sm:$0xff]
    %v125 = vld [vmem:[%s1] sm:$0xff]
    %v126 = vld [vmem:[%s1 + $0x8] sm:$0xf]
    %v127 = vld [vmem:[%s2] sm:$0x1]
    %v129 = vlaneseq
    %v130 = vshrl.u32 %v129, 7
    %v131 = vsub.s32 0, %v130
    %v132 = vrot.slane %v127, %v131
    %vm134 = vcmask 97280
    %v136 = vsel %vm134, %v61, 0
    %v139 = vsel %vm134, %v62, 0
    %v142 = vsel %vm134, %v63, 0
    %v145 = vsel %vm134, %v64, 0
    %v148 = vsel %vm134, %v65, 0
    %v151 = vsel %vm134, %v66, 0
    %v154 = vsel %vm134, %v67, 0
    %v157 = vsel %vm134, %v68, 0
    %v160 = vsel %vm134, %v69, 0
    %v163 = vsel %vm134, %v70, 0
    %v166 = vsel %vm134, %v71, 0
    %v169 = vsel %vm134, %v72, 0
    %v172 = vsel %vm134, %v73, 0
    %v175 = vsel %vm134, %v74, 0
    %v178 = vsel %vm134, %v75, 0
    %v181 = vsel %vm134, %v76, 0
    %v184 = vsel %vm134, %v77, 0
    %v187 = vsel %vm134, %v78, 0
    %v190 = vsel %vm134, %v79, 0
    %v193 = vsel %vm134, %v80, 0
    %v196 = vsel %vm134, %v81, 0
    %v199 = vsel %vm134, %v82, 0
    %v202 = vsel %vm134, %v83, 0
    %v205 = vsel %vm134, %v84, 0
    %v208 = vsel %vm134, %v85, 0
    %v211 = vsel %vm134, %v86, 0
    %v214 = vsel %vm134, %v87, 0
    %v217 = vsel %vm134, %v88, 0
    %v220 = vsel %vm134, %v89, 0
    %v223 = vsel %vm134, %v90, 0
    %v226 = vsel %vm134, %v91, 0
    %v229 = vsel %vm134, %v92, 0
    %v232 = vsel %vm134, %v93, 0
    %v235 = vsel %vm134, %v94, 0
    %v238 = vsel %vm134, %v95, 0
    %v241 = vsel %vm134, %v96, 0
    %v244 = vsel %vm134, %v97, 0
    %v247 = vsel %vm134, %v98, 0
    %v250 = vsel %vm134, %v99, 0
    %v253 = vsel %vm134, %v100, 0
    %v256 = vsel %vm134, %v101, 0
    %v259 = vsel %vm134, %v102, 0
    %v262 = vsel %vm134, %v103, 0
    %v265 = vsel %vm134, %v104, 0
    %v268 = vsel %vm134, %v105, 0
    %v271 = vsel %vm134, %v106, 0
    %v274 = vsel %vm134, %v107, 0
    %v277 = vsel %vm134, %v108, 0
    %v280 = vsel %vm134, %v109, 0
    %v283 = vsel %vm134, %v110, 0
    %v286 = vsel %vm134, %v111, 0
    %v289 = vsel %vm134, %v112, 0
    %v292 = vsel %vm134, %v113, 0
    %v295 = vsel %vm134, %v114, 0
    %v298 = vsel %vm134, %v115, 0
    %v301 = vsel %vm134, %v116, 0
    %v304 = vsel %vm134, %v117, 0
    %v307 = vsel %vm134, %v118, 0
    %v310 = vsel %vm134, %v119, 0
    %v313 = vsel %vm134, %v120, 0
    %v316 = vsel %vm134, %v121, 0
    %v319 = vsel %vm134, %v122, 0
    %v322 = vsel %vm134, %v123, 0
    %v325 = vsel %vm134, %v124, 0
    %vm327 = vcmask 1043456
    %v329 = vsel %vm327, %v126, 0
    %331 = vmatprep.subr.mxu0 0.0
    %332 = vmatpush1.msra.mxu0 %v125
    %333 = vmatprep.subr.mxu0 0.0
    %334 = vmatpush1.msra.mxu0 %v329
    %335 = vmatprep.subr.mxu0 0.0
    %336 = vmatpush1.msra.mxu0 0.0
    %337 = vmatprep.subr.mxu0 0.0
    %338 = vmatpush1.msra.mxu0 0.0
    %339 = vmatprep.subr.mxu0 0.0
    %340 = vmatpush1.msra.mxu0 0.0
    %341 = vmatprep.subr.mxu0 0.0
    %342 = vmatpush1.msra.mxu0 0.0
    %343 = vmatprep.subr.mxu0 0.0
    %344 = vmatpush1.msra.mxu0 0.0
    %345 = vmatprep.subr.mxu0 0.0
    %346 = vmatpush1.msra.mxu0 0.0
    %347 = vmatprep.subr.mxu0 0.0
    %348 = vmatpush1.msra.mxu0 0.0
    %349 = vmatprep.subr.mxu0 0.0
    %350 = vmatpush1.msra.mxu0 0.0
    %351 = vmatprep.subr.mxu0 0.0
    %352 = vmatpush1.msra.mxu0 0.0
    %353 = vmatprep.subr.mxu0 0.0
    %354 = vmatpush1.msra.mxu0 0.0
    %355 = vmatprep.subr.mxu0 0.0
    %356 = vmatpush1.msra.mxu0 0.0
    %357 = vmatprep.subr.mxu0 0.0
    %358 = vmatpush1.msra.mxu0 0.0
    %359 = vmatprep.subr.mxu0 0.0
    %360 = vmatpush1.msra.mxu0 0.0
    %361 = vmatprep.subr.mxu0 0.0
    %362 = vmatpush1.msra.mxu0 0.0
    %363 = vmatprep.subr.mxu0 0.0
    %364 = vmatpush1.msra.mxu0 0.0
    %365 = vmatprep.subr.mxu0 0.0
    %366 = vmatpush1.msra.mxu0 0.0
    %367 = vmatprep.subr.mxu0 0.0
    %368 = vmatpush1.msra.mxu0 0.0
    %369 = vmatprep.subr.mxu0 0.0
    %370 = vmatpush1.msra.mxu0 0.0
    %371 = vmatprep.subr.mxu0 0.0
    %372 = vmatpush1.msra.mxu0 0.0
    %373 = vmatprep.subr.mxu0 0.0
    %374 = vmatpush1.msra.mxu0 0.0
    %375 = vmatprep.subr.mxu0 0.0
    %376 = vmatpush1.msra.mxu0 0.0
    %377 = vmatprep.subr.mxu0 0.0
    %378 = vmatpush1.msra.mxu0 0.0
    %379 = vmatprep.subr.mxu0 0.0
    %380 = vmatpush1.msra.mxu0 0.0
    %381 = vmatprep.subr.mxu0 0.0
    %382 = vmatpush1.msra.mxu0 0.0
    %383 = vmatprep.subr.mxu0 0.0
    %384 = vmatpush1.msra.mxu0 0.0
    %385 = vmatprep.subr.mxu0 0.0
    %386 = vmatpush1.msra.mxu0 0.0
    %387 = vmatprep.subr.mxu0 0.0
    %388 = vmatpush1.msra.mxu0 0.0
    %389 = vmatprep.subr.mxu0 0.0
    %390 = vmatpush1.msra.mxu0 0.0
    %391 = vmatprep.subr.mxu0 0.0
    %392 = vmatpush1.msra.mxu0 0.0
    %393 = vmatprep.subr.mxu0 0.0
    %394 = vmatpush1.msra.mxu0 0.0
    %395 = vmatprep.mubr.f32.mxu0 0.0
    %396 = vmatmul.mubr.f32.gmra.mrb[0].mxu0 %v136
    %v397 = vpop.f32.mrb[0].mxu0
    %v398 = vadd.f32 %v132, %v397
    %v399 = vpop.f32.mrb[0].mxu0
    %400 = vmatprep.mubr.f32.mxu0 0.0
    %401 = vmatmul.mubr.f32.gmra.mrb[0].mxu0 %v139
    %v402 = vpop.f32.mrb[0].mxu0
    %v403 = vadd.f32 %v132, %v402
    %v404 = vpop.f32.mrb[0].mxu0
    %405 = vmatprep.mubr.f32.mxu0 0.0
    %406 = vmatmul.mubr.f32.gmra.mrb[0].mxu0 %v142
    %v407 = vpop.f32.mrb[0].mxu0
    %v408 = vadd.f32 %v132, %v407
    %v409 = vpop.f32.mrb[0].mxu0
    %410 = vmatprep.mubr.f32.mxu0 0.0
    %411 = vmatmul.mubr.f32.gmra.mrb[0].mxu0 %v145
    %v412 = vpop.f32.mrb[0].mxu0
    %v413 = vadd.f32 %v132, %v412
    %v414 = vpop.f32.mrb[0].mxu0
    %415 = vmatprep.mubr.f32.mxu0 0.0
    %416 = vmatmul.mubr.f32.gmra.mrb[0].mxu0 %v148
    %v417 = vpop.f32.mrb[0].mxu0
    %v418 = vadd.f32 %v132, %v417
    %v419 = vpop.f32.mrb[0].mxu0
    %420 = vmatprep.mubr.f32.mxu0 0.0
    %421 = vmatmul.mubr.f32.gmra.mrb[0].mxu0 %v151
    %v422 = vpop.f32.mrb[0].mxu0
    %v423 = vadd.f32 %v132, %v422
    %v424 = vpop.f32.mrb[0].mxu0
    %425 = vmatprep.mubr.f32.mxu0 0.0
    %426 = vmatmul.mubr.f32.gmra.mrb[0].mxu0 %v154
    %v427 = vpop.f32.mrb[0].mxu0
    %v428 = vadd.f32 %v132, %v427
    %v429 = vpop.f32.mrb[0].mxu0
    %430 = vmatprep.mubr.f32.mxu0 0.0
    %431 = vmatmul.mubr.f32.gmra.mrb[0].mxu0 %v157
    %v432 = vpop.f32.mrb[0].mxu0
    %v433 = vadd.f32 %v132, %v432
    %v434 = vpop.f32.mrb[0].mxu0
    %435 = vmatprep.mubr.f32.mxu0 0.0
    %436 = vmatmul.mubr.f32.gmra.mrb[0].mxu0 %v160
    %v437 = vpop.f32.mrb[0].mxu0
    %v438 = vadd.f32 %v132, %v437
    %v439 = vpop.f32.mrb[0].mxu0
    %440 = vmatprep.mubr.f32.mxu0 0.0
    %441 = vmatmul.mubr.f32.gmra.mrb[0].mxu0 %v163
    %v442 = vpop.f32.mrb[0].mxu0
    %v443 = vadd.f32 %v132, %v442
    %v444 = vpop.f32.mrb[0].mxu0
    %445 = vmatprep.mubr.f32.mxu0 0.0
    %446 = vmatmul.mubr.f32.gmra.mrb[0].mxu0 %v166
    %v447 = vpop.f32.mrb[0].mxu0
    %v448 = vadd.f32 %v132, %v447
    %v449 = vpop.f32.mrb[0].mxu0
    %450 = vmatprep.mubr.f32.mxu0 0.0
    %451 = vmatmul.mubr.f32.gmra.mrb[0].mxu0 %v169
    %v452 = vpop.f32.mrb[0].mxu0
    %v453 = vadd.f32 %v132, %v452
    %v454 = vpop.f32.mrb[0].mxu0
    %455 = vmatprep.mubr.f32.mxu0 0.0
    %456 = vmatmul.mubr.f32.gmra.mrb[0].mxu0 %v172
    %v457 = vpop.f32.mrb[0].mxu0
    %v458 = vadd.f32 %v132, %v457
    %v459 = vpop.f32.mrb[0].mxu0
    %460 = vmatprep.mubr.f32.mxu0 0.0
    %461 = vmatmul.mubr.f32.gmra.mrb[0].mxu0 %v175
    %v462 = vpop.f32.mrb[0].mxu0
    %v463 = vadd.f32 %v132, %v462
    %v464 = vpop.f32.mrb[0].mxu0
    %465 = vmatprep.mubr.f32.mxu0 0.0
    %466 = vmatmul.mubr.f32.gmra.mrb[0].mxu0 %v178
    %v467 = vpop.f32.mrb[0].mxu0
    %v468 = vadd.f32 %v132, %v467
    %v469 = vpop.f32.mrb[0].mxu0
    %470 = vmatprep.mubr.f32.mxu0 0.0
    %471 = vmatmul.mubr.f32.gmra.mrb[0].mxu0 %v181
    %v472 = vpop.f32.mrb[0].mxu0
    %v473 = vadd.f32 %v132, %v472
    %v474 = vpop.f32.mrb[0].mxu0
    %475 = vmatprep.mubr.f32.mxu0 0.0
    %476 = vmatmul.mubr.f32.gmra.mrb[0].mxu0 %v184
    %v477 = vpop.f32.mrb[0].mxu0
    %v478 = vadd.f32 %v132, %v477
    %v479 = vpop.f32.mrb[0].mxu0
    %480 = vmatprep.mubr.f32.mxu0 0.0
    %481 = vmatmul.mubr.f32.gmra.mrb[0].mxu0 %v187
    %v482 = vpop.f32.mrb[0].mxu0
    %v483 = vadd.f32 %v132, %v482
    %v484 = vpop.f32.mrb[0].mxu0
    %485 = vmatprep.mubr.f32.mxu0 0.0
    %486 = vmatmul.mubr.f32.gmra.mrb[0].mxu0 %v190
    %v487 = vpop.f32.mrb[0].mxu0
    %v488 = vadd.f32 %v132, %v487
    %v489 = vpop.f32.mrb[0].mxu0
    %490 = vmatprep.mubr.f32.mxu0 0.0
    %491 = vmatmul.mubr.f32.gmra.mrb[0].mxu0 %v193
    %v492 = vpop.f32.mrb[0].mxu0
    %v493 = vadd.f32 %v132, %v492
    %v494 = vpop.f32.mrb[0].mxu0
    %495 = vmatprep.mubr.f32.mxu0 0.0
    %496 = vmatmul.mubr.f32.gmra.mrb[0].mxu0 %v196
    %v497 = vpop.f32.mrb[0].mxu0
    %v498 = vadd.f32 %v132, %v497
    %v499 = vpop.f32.mrb[0].mxu0
    %500 = vmatprep.mubr.f32.mxu0 0.0
    %501 = vmatmul.mubr.f32.gmra.mrb[0].mxu0 %v199
    %v502 = vpop.f32.mrb[0].mxu0
    %v503 = vadd.f32 %v132, %v502
    %v504 = vpop.f32.mrb[0].mxu0
    %505 = vmatprep.mubr.f32.mxu0 0.0
    %506 = vmatmul.mubr.f32.gmra.mrb[0].mxu0 %v202
    %v507 = vpop.f32.mrb[0].mxu0
    %v508 = vadd.f32 %v132, %v507
    %v509 = vpop.f32.mrb[0].mxu0
    %510 = vmatprep.mubr.f32.mxu0 0.0
    %511 = vmatmul.mubr.f32.gmra.mrb[0].mxu0 %v205
    %v512 = vpop.f32.mrb[0].mxu0
    %v513 = vadd.f32 %v132, %v512
    %v514 = vpop.f32.mrb[0].mxu0
    %515 = vmatprep.mubr.f32.mxu0 0.0
    %516 = vmatmul.mubr.f32.gmra.mrb[0].mxu0 %v208
    %v517 = vpop.f32.mrb[0].mxu0
    %v518 = vadd.f32 %v132, %v517
    %v519 = vpop.f32.mrb[0].mxu0
    %520 = vmatprep.mubr.f32.mxu0 0.0
    %521 = vmatmul.mubr.f32.gmra.mrb[0].mxu0 %v211
    %v522 = vpop.f32.mrb[0].mxu0
    %v523 = vadd.f32 %v132, %v522
    %v524 = vpop.f32.mrb[0].mxu0
    %525 = vmatprep.mubr.f32.mxu0 0.0
    %526 = vmatmul.mubr.f32.gmra.mrb[0].mxu0 %v214
    %v527 = vpop.f32.mrb[0].mxu0
    %v528 = vadd.f32 %v132, %v527
    %v529 = vpop.f32.mrb[0].mxu0
    %530 = vmatprep.mubr.f32.mxu0 0.0
    %531 = vmatmul.mubr.f32.gmra.mrb[0].mxu0 %v217
    %v532 = vpop.f32.mrb[0].mxu0
    %v533 = vadd.f32 %v132, %v532
    %v534 = vpop.f32.mrb[0].mxu0
    %535 = vmatprep.mubr.f32.mxu0 0.0
    %536 = vmatmul.mubr.f32.gmra.mrb[0].mxu0 %v220
    %v537 = vpop.f32.mrb[0].mxu0
    %v538 = vadd.f32 %v132, %v537
    %v539 = vpop.f32.mrb[0].mxu0
    %540 = vmatprep.mubr.f32.mxu0 0.0
    %541 = vmatmul.mubr.f32.gmra.mrb[0].mxu0 %v223
    %v542 = vpop.f32.mrb[0].mxu0
    %v543 = vadd.f32 %v132, %v542
    %v544 = vpop.f32.mrb[0].mxu0
    %545 = vmatprep.mubr.f32.mxu0 0.0
    %546 = vmatmul.mubr.f32.gmra.mrb[0].mxu0 %v226
    %v547 = vpop.f32.mrb[0].mxu0
    %v548 = vadd.f32 %v132, %v547
    %v549 = vpop.f32.mrb[0].mxu0
    %550 = vmatprep.mubr.f32.mxu0 0.0
    %551 = vmatmul.mubr.f32.gmra.mrb[0].mxu0 %v229
    %v552 = vpop.f32.mrb[0].mxu0
    %v553 = vadd.f32 %v132, %v552
    %v554 = vpop.f32.mrb[0].mxu0
    %555 = vmatprep.mubr.f32.mxu0 0.0
    %556 = vmatmul.mubr.f32.gmra.mrb[0].mxu0 %v232
    %v557 = vpop.f32.mrb[0].mxu0
    %v558 = vadd.f32 %v132, %v557
    %v559 = vpop.f32.mrb[0].mxu0
    %560 = vmatprep.mubr.f32.mxu0 0.0
    %561 = vmatmul.mubr.f32.gmra.mrb[0].mxu0 %v235
    %v562 = vpop.f32.mrb[0].mxu0
    %v563 = vadd.f32 %v132, %v562
    %v564 = vpop.f32.mrb[0].mxu0
    %565 = vmatprep.mubr.f32.mxu0 0.0
    %566 = vmatmul.mubr.f32.gmra.mrb[0].mxu0 %v238
    %v567 = vpop.f32.mrb[0].mxu0
    %v568 = vadd.f32 %v132, %v567
    %v569 = vpop.f32.mrb[0].mxu0
    %570 = vmatprep.mubr.f32.mxu0 0.0
    %571 = vmatmul.mubr.f32.gmra.mrb[0].mxu0 %v241
    %v572 = vpop.f32.mrb[0].mxu0
    %v573 = vadd.f32 %v132, %v572
    %v574 = vpop.f32.mrb[0].mxu0
    %575 = vmatprep.mubr.f32.mxu0 0.0
    %576 = vmatmul.mubr.f32.gmra.mrb[0].mxu0 %v244
    %v577 = vpop.f32.mrb[0].mxu0
    %v578 = vadd.f32 %v132, %v577
    %v579 = vpop.f32.mrb[0].mxu0
    %580 = vmatprep.mubr.f32.mxu0 0.0
    %581 = vmatmul.mubr.f32.gmra.mrb[0].mxu0 %v247
    %v582 = vpop.f32.mrb[0].mxu0
    %v583 = vadd.f32 %v132, %v582
    %v584 = vpop.f32.mrb[0].mxu0
    %585 = vmatprep.mubr.f32.mxu0 0.0
    %586 = vmatmul.mubr.f32.gmra.mrb[0].mxu0 %v250
    %v587 = vpop.f32.mrb[0].mxu0
    %v588 = vadd.f32 %v132, %v587
    %v589 = vpop.f32.mrb[0].mxu0
    %590 = vmatprep.mubr.f32.mxu0 0.0
    %591 = vmatmul.mubr.f32.gmra.mrb[0].mxu0 %v253
    %v592 = vpop.f32.mrb[0].mxu0
    %v593 = vadd.f32 %v132, %v592
    %v594 = vpop.f32.mrb[0].mxu0
    %595 = vmatprep.mubr.f32.mxu0 0.0
    %596 = vmatmul.mubr.f32.gmra.mrb[0].mxu0 %v256
    %v597 = vpop.f32.mrb[0].mxu0
    %v598 = vadd.f32 %v132, %v597
    %v599 = vpop.f32.mrb[0].mxu0
    %600 = vmatprep.mubr.f32.mxu0 0.0
    %601 = vmatmul.mubr.f32.gmra.mrb[0].mxu0 %v259
    %v602 = vpop.f32.mrb[0].mxu0
    %v603 = vadd.f32 %v132, %v602
    %v604 = vpop.f32.mrb[0].mxu0
    %605 = vmatprep.mubr.f32.mxu0 0.0
    %606 = vmatmul.mubr.f32.gmra.mrb[0].mxu0 %v262
    %v607 = vpop.f32.mrb[0].mxu0
    %v608 = vadd.f32 %v132, %v607
    %v609 = vpop.f32.mrb[0].mxu0
    %610 = vmatprep.mubr.f32.mxu0 0.0
    %611 = vmatmul.mubr.f32.gmra.mrb[0].mxu0 %v265
    %v612 = vpop.f32.mrb[0].mxu0
    %v613 = vadd.f32 %v132, %v612
    %v614 = vpop.f32.mrb[0].mxu0
    %615 = vmatprep.mubr.f32.mxu0 0.0
    %616 = vmatmul.mubr.f32.gmra.mrb[0].mxu0 %v268
    %v617 = vpop.f32.mrb[0].mxu0
    %v618 = vadd.f32 %v132, %v617
    %v619 = vpop.f32.mrb[0].mxu0
    %620 = vmatprep.mubr.f32.mxu0 0.0
    %621 = vmatmul.mubr.f32.gmra.mrb[0].mxu0 %v271
    %v622 = vpop.f32.mrb[0].mxu0
    %v623 = vadd.f32 %v132, %v622
    %v624 = vpop.f32.mrb[0].mxu0
    %625 = vmatprep.mubr.f32.mxu0 0.0
    %626 = vmatmul.mubr.f32.gmra.mrb[0].mxu0 %v274
    %v627 = vpop.f32.mrb[0].mxu0
    %v628 = vadd.f32 %v132, %v627
    %v629 = vpop.f32.mrb[0].mxu0
    %630 = vmatprep.mubr.f32.mxu0 0.0
    %631 = vmatmul.mubr.f32.gmra.mrb[0].mxu0 %v277
    %v632 = vpop.f32.mrb[0].mxu0
    %v633 = vadd.f32 %v132, %v632
    %v634 = vpop.f32.mrb[0].mxu0
    %635 = vmatprep.mubr.f32.mxu0 0.0
    %636 = vmatmul.mubr.f32.gmra.mrb[0].mxu0 %v280
    %v637 = vpop.f32.mrb[0].mxu0
    %v638 = vadd.f32 %v132, %v637
    %v639 = vpop.f32.mrb[0].mxu0
    %640 = vmatprep.mubr.f32.mxu0 0.0
    %641 = vmatmul.mubr.f32.gmra.mrb[0].mxu0 %v283
    %v642 = vpop.f32.mrb[0].mxu0
    %v643 = vadd.f32 %v132, %v642
    %v644 = vpop.f32.mrb[0].mxu0
    %645 = vmatprep.mubr.f32.mxu0 0.0
    %646 = vmatmul.mubr.f32.gmra.mrb[0].mxu0 %v286
    %v647 = vpop.f32.mrb[0].mxu0
    %v648 = vadd.f32 %v132, %v647
    %v649 = vpop.f32.mrb[0].mxu0
    %650 = vmatprep.mubr.f32.mxu0 0.0
    %651 = vmatmul.mubr.f32.gmra.mrb[0].mxu0 %v289
    %v652 = vpop.f32.mrb[0].mxu0
    %v653 = vadd.f32 %v132, %v652
    %v654 = vpop.f32.mrb[0].mxu0
    %655 = vmatprep.mubr.f32.mxu0 0.0
    %656 = vmatmul.mubr.f32.gmra.mrb[0].mxu0 %v292
    %v657 = vpop.f32.mrb[0].mxu0
    %v658 = vadd.f32 %v132, %v657
    %v659 = vpop.f32.mrb[0].mxu0
    %660 = vmatprep.mubr.f32.mxu0 0.0
    %661 = vmatmul.mubr.f32.gmra.mrb[0].mxu0 %v295
    %v662 = vpop.f32.mrb[0].mxu0
    %v663 = vadd.f32 %v132, %v662
    %v664 = vpop.f32.mrb[0].mxu0
    %665 = vmatprep.mubr.f32.mxu0 0.0
    %666 = vmatmul.mubr.f32.gmra.mrb[0].mxu0 %v298
    %v667 = vpop.f32.mrb[0].mxu0
    %v668 = vadd.f32 %v132, %v667
    %v669 = vpop.f32.mrb[0].mxu0
    %670 = vmatprep.mubr.f32.mxu0 0.0
    %671 = vmatmul.mubr.f32.gmra.mrb[0].mxu0 %v301
    %v672 = vpop.f32.mrb[0].mxu0
    %v673 = vadd.f32 %v132, %v672
    %v674 = vpop.f32.mrb[0].mxu0
    %675 = vmatprep.mubr.f32.mxu0 0.0
    %676 = vmatmul.mubr.f32.gmra.mrb[0].mxu0 %v304
    %v677 = vpop.f32.mrb[0].mxu0
    %v678 = vadd.f32 %v132, %v677
    %v679 = vpop.f32.mrb[0].mxu0
    %680 = vmatprep.mubr.f32.mxu0 0.0
    %681 = vmatmul.mubr.f32.gmra.mrb[0].mxu0 %v307
    %v682 = vpop.f32.mrb[0].mxu0
    %v683 = vadd.f32 %v132, %v682
    %v684 = vpop.f32.mrb[0].mxu0
    %685 = vmatprep.mubr.f32.mxu0 0.0
    %686 = vmatmul.mubr.f32.gmra.mrb[0].mxu0 %v310
    %v687 = vpop.f32.mrb[0].mxu0
    %v688 = vadd.f32 %v132, %v687
    %v689 = vpop.f32.mrb[0].mxu0
    %690 = vmatprep.mubr.f32.mxu0 0.0
    %691 = vmatmul.mubr.f32.gmra.mrb[0].mxu0 %v313
    %v692 = vpop.f32.mrb[0].mxu0
    %v693 = vadd.f32 %v132, %v692
    %v694 = vpop.f32.mrb[0].mxu0
    %695 = vmatprep.mubr.f32.mxu0 0.0
    %696 = vmatmul.mubr.f32.gmra.mrb[0].mxu0 %v316
    %v697 = vpop.f32.mrb[0].mxu0
    %v698 = vadd.f32 %v132, %v697
    %v699 = vpop.f32.mrb[0].mxu0
    %700 = vmatprep.mubr.f32.mxu0 0.0
    %701 = vmatmul.mubr.f32.gmra.mrb[0].mxu0 %v319
    %v702 = vpop.f32.mrb[0].mxu0
    %v703 = vadd.f32 %v132, %v702
    %v704 = vpop.f32.mrb[0].mxu0
    %705 = vmatprep.mubr.f32.mxu0 0.0
    %706 = vmatmul.mubr.f32.gmra.mrb[0].mxu0 %v322
    %v707 = vpop.f32.mrb[0].mxu0
    %v708 = vadd.f32 %v132, %v707
    %v709 = vpop.f32.mrb[0].mxu0
    %710 = vmatprep.mubr.f32.mxu0 0.0
    %711 = vmatmul.mubr.f32.gmra.mrb[0].mxu0 %v325
    %v712 = vpop.f32.mrb[0].mxu0
    %v713 = vadd.f32 %v132, %v712
    %v714 = vpop.f32.mrb[0].mxu0
    %715 = vdwg.mxu0
    %v716 = vmax.f32 %v398, 0.0
    %v717 = vmax.f32 %v403, 0.0
    %v718 = vmax.f32 %v408, 0.0
    %v719 = vmax.f32 %v413, 0.0
    %v720 = vmax.f32 %v418, 0.0
    %v721 = vmax.f32 %v423, 0.0
    %v722 = vmax.f32 %v428, 0.0
    %v723 = vmax.f32 %v433, 0.0
    %v724 = vmax.f32 %v438, 0.0
    %v725 = vmax.f32 %v443, 0.0
    %v726 = vmax.f32 %v448, 0.0
    %v727 = vmax.f32 %v453, 0.0
    %v728 = vmax.f32 %v458, 0.0
    %v729 = vmax.f32 %v463, 0.0
    %v730 = vmax.f32 %v468, 0.0
    %v731 = vmax.f32 %v473, 0.0
    %v732 = vmax.f32 %v478, 0.0
    %v733 = vmax.f32 %v483, 0.0
    %v734 = vmax.f32 %v488, 0.0
    %v735 = vmax.f32 %v493, 0.0
    %v736 = vmax.f32 %v498, 0.0
    %v737 = vmax.f32 %v503, 0.0
    %v738 = vmax.f32 %v508, 0.0
    %v739 = vmax.f32 %v513, 0.0
    %v740 = vmax.f32 %v518, 0.0
    %v741 = vmax.f32 %v523, 0.0
    %v742 = vmax.f32 %v528, 0.0
    %v743 = vmax.f32 %v533, 0.0
    %v744 = vmax.f32 %v538, 0.0
    %v745 = vmax.f32 %v543, 0.0
    %v746 = vmax.f32 %v548, 0.0
    %v747 = vmax.f32 %v553, 0.0
    %v748 = vmax.f32 %v558, 0.0
    %v749 = vmax.f32 %v563, 0.0
    %v750 = vmax.f32 %v568, 0.0
    %v751 = vmax.f32 %v573, 0.0
    %v752 = vmax.f32 %v578, 0.0
    %v753 = vmax.f32 %v583, 0.0
    %v754 = vmax.f32 %v588, 0.0
    %v755 = vmax.f32 %v593, 0.0
    %v756 = vmax.f32 %v598, 0.0
    %v757 = vmax.f32 %v603, 0.0
    %v758 = vmax.f32 %v608, 0.0
    %v759 = vmax.f32 %v613, 0.0
    %v760 = vmax.f32 %v618, 0.0
    %v761 = vmax.f32 %v623, 0.0
    %v762 = vmax.f32 %v628, 0.0
    %v763 = vmax.f32 %v633, 0.0
    %v764 = vmax.f32 %v638, 0.0
    %v765 = vmax.f32 %v643, 0.0
    %v766 = vmax.f32 %v648, 0.0
    %v767 = vmax.f32 %v653, 0.0
    %v768 = vmax.f32 %v658, 0.0
    %v769 = vmax.f32 %v663, 0.0
    %v770 = vmax.f32 %v668, 0.0
    %v771 = vmax.f32 %v673, 0.0
    %v772 = vmax.f32 %v678, 0.0
    %v773 = vmax.f32 %v683, 0.0
    %v774 = vmax.f32 %v688, 0.0
    %v775 = vmax.f32 %v693, 0.0
    %v776 = vmax.f32 %v698, 0.0
    %v777 = vmax.f32 %v703, 0.0
    %v778 = vmax.f32 %v708, 0.0
    %v779 = vmax.f32 %v713, 0.0
    %v780 = vld [vmem:[%s3] sm:$0x1]
    %v782 = vlaneseq
    %v783 = vshrl.u32 %v782, 7
    %v784 = vsub.s32 0, %v783
    %v785 = vrot.slane %v780, %v784
    %v787 = vmul.f32 %v716, %v785
    %v788 = vmul.f32 %v717, %v785
    %v789 = vmul.f32 %v718, %v785
    %v790 = vmul.f32 %v719, %v785
    %v791 = vmul.f32 %v720, %v785
    %v792 = vmul.f32 %v721, %v785
    %v793 = vmul.f32 %v722, %v785
    %v794 = vmul.f32 %v723, %v785
    %v795 = vmul.f32 %v724, %v785
    %v796 = vmul.f32 %v725, %v785
    %v797 = vmul.f32 %v726, %v785
    %v798 = vmul.f32 %v727, %v785
    %v799 = vmul.f32 %v728, %v785
    %v800 = vmul.f32 %v729, %v785
    %v801 = vmul.f32 %v730, %v785
    %v802 = vmul.f32 %v731, %v785
    %v803 = vmul.f32 %v732, %v785
    %v804 = vmul.f32 %v733, %v785
    %v805 = vmul.f32 %v734, %v785
    %v806 = vmul.f32 %v735, %v785
    %v807 = vmul.f32 %v736, %v785
    %v808 = vmul.f32 %v737, %v785
    %v809 = vmul.f32 %v738, %v785
    %v810 = vmul.f32 %v739, %v785
    %v811 = vmul.f32 %v740, %v785
    %v812 = vmul.f32 %v741, %v785
    %v813 = vmul.f32 %v742, %v785
    %v814 = vmul.f32 %v743, %v785
    %v815 = vmul.f32 %v744, %v785
    %v816 = vmul.f32 %v745, %v785
    %v817 = vmul.f32 %v746, %v785
    %v818 = vmul.f32 %v747, %v785
    %v819 = vmul.f32 %v748, %v785
    %v820 = vmul.f32 %v749, %v785
    %v821 = vmul.f32 %v750, %v785
    %v822 = vmul.f32 %v751, %v785
    %v823 = vmul.f32 %v752, %v785
    %v824 = vmul.f32 %v753, %v785
    %v825 = vmul.f32 %v754, %v785
    %v826 = vmul.f32 %v755, %v785
    %v827 = vmul.f32 %v756, %v785
    %v828 = vmul.f32 %v757, %v785
    %v829 = vmul.f32 %v758, %v785
    %v830 = vmul.f32 %v759, %v785
    %v831 = vmul.f32 %v760, %v785
    %v832 = vmul.f32 %v761, %v785
    %v833 = vmul.f32 %v762, %v785
    %v834 = vmul.f32 %v763, %v785
    %v835 = vmul.f32 %v764, %v785
    %v836 = vmul.f32 %v765, %v785
    %v837 = vmul.f32 %v766, %v785
    %v838 = vmul.f32 %v767, %v785
    %v839 = vmul.f32 %v768, %v785
    %v840 = vmul.f32 %v769, %v785
    %v841 = vmul.f32 %v770, %v785
    %v842 = vmul.f32 %v771, %v785
    %v843 = vmul.f32 %v772, %v785
    %v844 = vmul.f32 %v773, %v785
    %v845 = vmul.f32 %v774, %v785
    %v846 = vmul.f32 %v775, %v785
    %v847 = vmul.f32 %v776, %v785
    %v848 = vmul.f32 %v777, %v785
    %v849 = vmul.f32 %v778, %v785
    %v850 = vmul.f32 %v779, %v785
    %v851 = vld [vmem:[%s4] sm:$0x1]
    %v853 = vlaneseq
    %v854 = vshrl.u32 %v853, 7
    %v855 = vsub.s32 0, %v854
    %v856 = vrot.slane %v851, %v855
    %v858 = vadd.f32 %v787, %v856
    %v859 = vadd.f32 %v788, %v856
    %v860 = vadd.f32 %v789, %v856
    %v861 = vadd.f32 %v790, %v856
    %v862 = vadd.f32 %v791, %v856
    %v863 = vadd.f32 %v792, %v856
    %v864 = vadd.f32 %v793, %v856
    %v865 = vadd.f32 %v794, %v856
    %v866 = vadd.f32 %v795, %v856
    %v867 = vadd.f32 %v796, %v856
    %v868 = vadd.f32 %v797, %v856
    %v869 = vadd.f32 %v798, %v856
    %v870 = vadd.f32 %v799, %v856
    %v871 = vadd.f32 %v800, %v856
    %v872 = vadd.f32 %v801, %v856
    %v873 = vadd.f32 %v802, %v856
    %v874 = vadd.f32 %v803, %v856
    %v875 = vadd.f32 %v804, %v856
    %v876 = vadd.f32 %v805, %v856
    %v877 = vadd.f32 %v806, %v856
    %v878 = vadd.f32 %v807, %v856
    %v879 = vadd.f32 %v808, %v856
    %v880 = vadd.f32 %v809, %v856
    %v881 = vadd.f32 %v810, %v856
    %v882 = vadd.f32 %v811, %v856
    %v883 = vadd.f32 %v812, %v856
    %v884 = vadd.f32 %v813, %v856
    %v885 = vadd.f32 %v814, %v856
    %v886 = vadd.f32 %v815, %v856
    %v887 = vadd.f32 %v816, %v856
    %v888 = vadd.f32 %v817, %v856
    %v889 = vadd.f32 %v818, %v856
    %v890 = vadd.f32 %v819, %v856
    %v891 = vadd.f32 %v820, %v856
    %v892 = vadd.f32 %v821, %v856
    %v893 = vadd.f32 %v822, %v856
    %v894 = vadd.f32 %v823, %v856
    %v895 = vadd.f32 %v824, %v856
    %v896 = vadd.f32 %v825, %v856
    %v897 = vadd.f32 %v826, %v856
    %v898 = vadd.f32 %v827, %v856
    %v899 = vadd.f32 %v828, %v856
    %v900 = vadd.f32 %v829, %v856
    %v901 = vadd.f32 %v830, %v856
    %v902 = vadd.f32 %v831, %v856
    %v903 = vadd.f32 %v832, %v856
    %v904 = vadd.f32 %v833, %v856
    %v905 = vadd.f32 %v834, %v856
    %v906 = vadd.f32 %v835, %v856
    %v907 = vadd.f32 %v836, %v856
    %v908 = vadd.f32 %v837, %v856
    %v909 = vadd.f32 %v838, %v856
    %v910 = vadd.f32 %v839, %v856
    %v911 = vadd.f32 %v840, %v856
    %v912 = vadd.f32 %v841, %v856
    %v913 = vadd.f32 %v842, %v856
    %v914 = vadd.f32 %v843, %v856
    %v915 = vadd.f32 %v844, %v856
    %v916 = vadd.f32 %v845, %v856
    %v917 = vadd.f32 %v846, %v856
    %v918 = vadd.f32 %v847, %v856
    %v919 = vadd.f32 %v848, %v856
    %v920 = vadd.f32 %v849, %v856
    %v921 = vadd.f32 %v850, %v856
    %v922 = vrot.slane %v858, 2
    %v923 = vrot.slane %v859, 2
    %v924 = vrot.slane %v860, 2
    %v925 = vrot.slane %v861, 2
    %v926 = vrot.slane %v862, 2
    %v927 = vrot.slane %v863, 2
    %v928 = vrot.slane %v864, 2
    %v929 = vrot.slane %v865, 2
    %v930 = vrot.slane %v866, 2
    %v931 = vrot.slane %v867, 2
    %v932 = vrot.slane %v868, 2
    %v933 = vrot.slane %v869, 2
    %v934 = vrot.slane %v870, 2
    %v935 = vrot.slane %v871, 2
    %v936 = vrot.slane %v872, 2
    %v937 = vrot.slane %v873, 2
    %v938 = vrot.slane %v874, 2
    %v939 = vrot.slane %v875, 2
    %v940 = vrot.slane %v876, 2
    %v941 = vrot.slane %v877, 2
    %v942 = vrot.slane %v878, 2
    %v943 = vrot.slane %v879, 2
    %v944 = vrot.slane %v880, 2
    %v945 = vrot.slane %v881, 2
    %v946 = vrot.slane %v882, 2
    %v947 = vrot.slane %v883, 2
    %v948 = vrot.slane %v884, 2
    %v949 = vrot.slane %v885, 2
    %v950 = vrot.slane %v886, 2
    %v951 = vrot.slane %v887, 2
    %v952 = vrot.slane %v888, 2
    %v953 = vrot.slane %v889, 2
    %v954 = vrot.slane %v890, 2
    %v955 = vrot.slane %v891, 2
    %v956 = vrot.slane %v892, 2
    %v957 = vrot.slane %v893, 2
    %v958 = vrot.slane %v894, 2
    %v959 = vrot.slane %v895, 2
    %v960 = vrot.slane %v896, 2
    %v961 = vrot.slane %v897, 2
    %v962 = vrot.slane %v898, 2
    %v963 = vrot.slane %v899, 2
    %v964 = vrot.slane %v900, 2
    %v965 = vrot.slane %v901, 2
    %v966 = vrot.slane %v902, 2
    %v967 = vrot.slane %v903, 2
    %v968 = vrot.slane %v904, 2
    %v969 = vrot.slane %v905, 2
    %v970 = vrot.slane %v906, 2
    %v971 = vrot.slane %v907, 2
    %v972 = vrot.slane %v908, 2
    %v973 = vrot.slane %v909, 2
    %v974 = vrot.slane %v910, 2
    %v975 = vrot.slane %v911, 2
    %v976 = vrot.slane %v912, 2
    %v977 = vrot.slane %v913, 2
    %v978 = vrot.slane %v914, 2
    %v979 = vrot.slane %v915, 2
    %v980 = vrot.slane %v916, 2
    %v981 = vrot.slane %v917, 2
    %v982 = vrot.slane %v918, 2
    %v983 = vrot.slane %v919, 2
    %v984 = vrot.slane %v920, 2
    %v985 = vrot.slane %v921, 2
    %v986 = vlaneseq
    %v987 = vshrl.u32 %v986, 7
    %vm988 = vcmp.lt.s32.totalorder %v987, 6
    %v989 = vsel %vm988, %v984, %v985
    %v990 = vsel %vm988, %v983, %v984
    %v991 = vsel %vm988, %v982, %v983
    %v992 = vsel %vm988, %v981, %v982
    %v993 = vsel %vm988, %v980, %v981
    %v994 = vsel %vm988, %v979, %v980
    %v995 = vsel %vm988, %v978, %v979
    %v996 = vsel %vm988, %v977, %v978
    %v997 = vsel %vm988, %v976, %v977
    %v998 = vsel %vm988, %v975, %v976
    %v999 = vsel %vm988, %v974, %v975
    %v1000 = vsel %vm988, %v973, %v974
    %v1001 = vsel %vm988, %v972, %v973
    %v1002 = vsel %vm988, %v971, %v972
    %v1003 = vsel %vm988, %v970, %v971
    %v1004 = vsel %vm988, %v969, %v970
    %v1005 = vsel %vm988, %v968, %v969
    %v1006 = vsel %vm988, %v967, %v968
    %v1007 = vsel %vm988, %v966, %v967
    %v1008 = vsel %vm988, %v965, %v966
    %v1009 = vsel %vm988, %v964, %v965
    %v1010 = vsel %vm988, %v963, %v964
    %v1011 = vsel %vm988, %v962, %v963
    %v1012 = vsel %vm988, %v961, %v962
    %v1013 = vsel %vm988, %v960, %v961
    %v1014 = vsel %vm988, %v959, %v960
    %v1015 = vsel %vm988, %v958, %v959
    %v1016 = vsel %vm988, %v957, %v958
    %v1017 = vsel %vm988, %v956, %v957
    %v1018 = vsel %vm988, %v955, %v956
    %v1019 = vsel %vm988, %v954, %v955
    %v1020 = vsel %vm988, %v953, %v954
    %v1021 = vsel %vm988, %v952, %v953
    %v1022 = vsel %vm988, %v951, %v952
    %v1023 = vsel %vm988, %v950, %v951
    %v1024 = vsel %vm988, %v949, %v950
    %v1025 = vsel %vm988, %v948, %v949
    %v1026 = vsel %vm988, %v947, %v948
    %v1027 = vsel %vm988, %v946, %v947
    %v1028 = vsel %vm988, %v945, %v946
    %v1029 = vsel %vm988, %v944, %v945
    %v1030 = vsel %vm988, %v943, %v944
    %v1031 = vsel %vm988, %v942, %v943
    %v1032 = vsel %vm988, %v941, %v942
    %v1033 = vsel %vm988, %v940, %v941
    %v1034 = vsel %vm988, %v939, %v940
    %v1035 = vsel %vm988, %v938, %v939
    %v1036 = vsel %vm988, %v937, %v938
    %v1037 = vsel %vm988, %v936, %v937
    %v1038 = vsel %vm988, %v935, %v936
    %v1039 = vsel %vm988, %v934, %v935
    %v1040 = vsel %vm988, %v933, %v934
    %v1041 = vsel %vm988, %v932, %v933
    %v1042 = vsel %vm988, %v931, %v932
    %v1043 = vsel %vm988, %v930, %v931
    %v1044 = vsel %vm988, %v929, %v930
    %v1045 = vsel %vm988, %v928, %v929
    %v1046 = vsel %vm988, %v927, %v928
    %v1047 = vsel %vm988, %v926, %v927
    %v1048 = vsel %vm988, %v925, %v926
    %v1049 = vsel %vm988, %v924, %v925
    %v1050 = vsel %vm988, %v923, %v924
    %v1051 = vsel %vm988, %v922, %v923
    %v1052 = vsel %vm988, %v985, %v922
    %v1053 = vmax.f32 %v858, %v1051
    %v1054 = vmax.f32 %v859, %v1050
    %v1055 = vmax.f32 %v860, %v1049
    %v1056 = vmax.f32 %v861, %v1048
    %v1057 = vmax.f32 %v862, %v1047
    %v1058 = vmax.f32 %v863, %v1046
    %v1059 = vmax.f32 %v864, %v1045
    %v1060 = vmax.f32 %v865, %v1044
    %v1061 = vmax.f32 %v866, %v1043
    %v1062 = vmax.f32 %v867, %v1042
    %v1063 = vmax.f32 %v868, %v1041
    %v1064 = vmax.f32 %v869, %v1040
    %v1065 = vmax.f32 %v870, %v1039
    %v1066 = vmax.f32 %v871, %v1038
    %v1067 = vmax.f32 %v872, %v1037
    %v1068 = vmax.f32 %v873, %v1036
    %v1069 = vmax.f32 %v874, %v1035
    %v1070 = vmax.f32 %v875, %v1034
    %v1071 = vmax.f32 %v876, %v1033
    %v1072 = vmax.f32 %v877, %v1032
    %v1073 = vmax.f32 %v878, %v1031
    %v1074 = vmax.f32 %v879, %v1030
    %v1075 = vmax.f32 %v880, %v1029
    %v1076 = vmax.f32 %v881, %v1028
    %v1077 = vmax.f32 %v882, %v1027
    %v1078 = vmax.f32 %v883, %v1026
    %v1079 = vmax.f32 %v884, %v1025
    %v1080 = vmax.f32 %v885, %v1024
    %v1081 = vmax.f32 %v886, %v1023
    %v1082 = vmax.f32 %v887, %v1022
    %v1083 = vmax.f32 %v888, %v1021
    %v1084 = vmax.f32 %v889, %v1020
    %v1085 = vmax.f32 %v890, %v1019
    %v1086 = vmax.f32 %v891, %v1018
    %v1087 = vmax.f32 %v892, %v1017
    %v1088 = vmax.f32 %v893, %v1016
    %v1089 = vmax.f32 %v894, %v1015
    %v1090 = vmax.f32 %v895, %v1014
    %v1091 = vmax.f32 %v896, %v1013
    %v1092 = vmax.f32 %v897, %v1012
    %v1093 = vmax.f32 %v898, %v1011
    %v1094 = vmax.f32 %v899, %v1010
    %v1095 = vmax.f32 %v900, %v1009
    %v1096 = vmax.f32 %v901, %v1008
    %v1097 = vmax.f32 %v902, %v1007
    %v1098 = vmax.f32 %v903, %v1006
    %v1099 = vmax.f32 %v904, %v1005
    %v1100 = vmax.f32 %v905, %v1004
    %v1101 = vmax.f32 %v906, %v1003
    %v1102 = vmax.f32 %v907, %v1002
    %v1103 = vmax.f32 %v908, %v1001
    %v1104 = vmax.f32 %v909, %v1000
    %v1105 = vmax.f32 %v910, %v999
    %v1106 = vmax.f32 %v911, %v998
    %v1107 = vmax.f32 %v912, %v997
    %v1108 = vmax.f32 %v913, %v996
    %v1109 = vmax.f32 %v914, %v995
    %v1110 = vmax.f32 %v915, %v994
    %v1111 = vmax.f32 %v916, %v993
    %v1112 = vmax.f32 %v917, %v992
    %v1113 = vmax.f32 %v918, %v991
    %v1114 = vmax.f32 %v919, %v990
    %v1115 = vmax.f32 %v920, %v989
    %v1116 = vmax.f32 %v921, %v1052
    %v1117 = vadd.s32 %v987, 8
    %v1118 = vadd.s32 %v987, 16
    %v1119 = vadd.s32 %v987, 24
    %v1120 = vadd.s32 %v987, 32
    %v1121 = vadd.s32 %v987, 40
    %v1122 = vadd.s32 %v987, 48
    %v1123 = vadd.s32 %v987, 56
    %v1124 = vadd.s32 %v987, 64
    %v1125 = vadd.s32 %v987, 72
    %v1126 = vadd.s32 %v987, 80
    %v1127 = vadd.s32 %v987, 88
    %v1128 = vadd.s32 %v987, 96
    %v1129 = vadd.s32 %v987, 104
    %v1130 = vadd.s32 %v987, 112
    %v1131 = vadd.s32 %v987, 120
    %v1132 = vadd.s32 %v987, 128
    %v1133 = vadd.s32 %v987, 136
    %v1134 = vadd.s32 %v987, 144
    %v1135 = vadd.s32 %v987, 152
    %v1136 = vadd.s32 %v987, 160
    %v1137 = vadd.s32 %v987, 168
    %v1138 = vadd.s32 %v987, 176
    %v1139 = vadd.s32 %v987, 184
    %v1140 = vadd.s32 %v987, 192
    %v1141 = vadd.s32 %v987, 200
    %v1142 = vadd.s32 %v987, 208
    %v1143 = vadd.s32 %v987, 216
    %v1144 = vadd.s32 %v987, 224
    %v1145 = vadd.s32 %v987, 232
    %v1146 = vadd.s32 %v987, 240
    %v1147 = vadd.s32 %v987, 248
    %v1148 = vadd.s32 %v987, 256
    %v1149 = vadd.s32 %v987, 264
    %v1150 = vadd.s32 %v987, 272
    %v1151 = vadd.s32 %v987, 280
    %v1152 = vadd.s32 %v987, 288
    %v1153 = vadd.s32 %v987, 296
    %v1154 = vadd.s32 %v987, 304
    %v1155 = vadd.s32 %v987, 312
    %v1156 = vadd.s32 %v987, 320
    %v1157 = vadd.s32 %v987, 328
    %v1158 = vadd.s32 %v987, 336
    %v1159 = vadd.s32 %v987, 344
    %v1160 = vadd.s32 %v987, 352
    %v1161 = vadd.s32 %v987, 360
    %v1162 = vadd.s32 %v987, 368
    %v1163 = vadd.s32 %v987, 376
    %v1164 = vadd.s32 %v987, 384
    %v1165 = vadd.s32 %v987, 392
    %v1166 = vadd.s32 %v987, 400
    %v1167 = vadd.s32 %v987, 408
    %v1168 = vadd.s32 %v987, 416
    %v1169 = vadd.s32 %v987, 424
    %v1170 = vadd.s32 %v987, 432
    %v1171 = vadd.s32 %v987, 440
    %v1172 = vadd.s32 %v987, 448
    %v1173 = vadd.s32 %v987, 456
    %v1174 = vadd.s32 %v987, 464
    %v1175 = vadd.s32 %v987, 472
    %v1176 = vadd.s32 %v987, 480
    %v1177 = vadd.s32 %v987, 488
    %v1178 = vadd.s32 %v987, 496
    %v1179 = vadd.s32 %v987, 504
    %vm1180 = vcmp.lt.s32.totalorder %v987, 4
    %vm1181 = vcmp.lt.s32.totalorder %v1117, 4
    %vm1182 = vcmp.lt.s32.totalorder %v1118, 4
    %vm1183 = vcmp.lt.s32.totalorder %v1119, 4
    %vm1184 = vcmp.lt.s32.totalorder %v1120, 4
    %vm1185 = vcmp.lt.s32.totalorder %v1121, 4
    %vm1186 = vcmp.lt.s32.totalorder %v1122, 4
    %vm1187 = vcmp.lt.s32.totalorder %v1123, 4
    %vm1188 = vcmp.lt.s32.totalorder %v1124, 4
    %vm1189 = vcmp.lt.s32.totalorder %v1125, 4
    %vm1190 = vcmp.lt.s32.totalorder %v1126, 4
    %vm1191 = vcmp.lt.s32.totalorder %v1127, 4
    %vm1192 = vcmp.lt.s32.totalorder %v1128, 4
    %vm1193 = vcmp.lt.s32.totalorder %v1129, 4
    %vm1194 = vcmp.lt.s32.totalorder %v1130, 4
    %vm1195 = vcmp.lt.s32.totalorder %v1131, 4
    %vm1196 = vcmp.lt.s32.totalorder %v1132, 4
    %vm1197 = vcmp.lt.s32.totalorder %v1133, 4
    %vm1198 = vcmp.lt.s32.totalorder %v1134, 4
    %vm1199 = vcmp.lt.s32.totalorder %v1135, 4
    %vm1200 = vcmp.lt.s32.totalorder %v1136, 4
    %vm1201 = vcmp.lt.s32.totalorder %v1137, 4
    %vm1202 = vcmp.lt.s32.totalorder %v1138, 4
    %vm1203 = vcmp.lt.s32.totalorder %v1139, 4
    %vm1204 = vcmp.lt.s32.totalorder %v1140, 4
    %vm1205 = vcmp.lt.s32.totalorder %v1141, 4
    %vm1206 = vcmp.lt.s32.totalorder %v1142, 4
    %vm1207 = vcmp.lt.s32.totalorder %v1143, 4
    %vm1208 = vcmp.lt.s32.totalorder %v1144, 4
    %vm1209 = vcmp.lt.s32.totalorder %v1145, 4
    %vm1210 = vcmp.lt.s32.totalorder %v1146, 4
    %vm1211 = vcmp.lt.s32.totalorder %v1147, 4
    %vm1212 = vcmp.lt.s32.totalorder %v1148, 4
    %vm1213 = vcmp.lt.s32.totalorder %v1149, 4
    %vm1214 = vcmp.lt.s32.totalorder %v1150, 4
    %vm1215 = vcmp.lt.s32.totalorder %v1151, 4
    %vm1216 = vcmp.lt.s32.totalorder %v1152, 4
    %vm1217 = vcmp.lt.s32.totalorder %v1153, 4
    %vm1218 = vcmp.lt.s32.totalorder %v1154, 4
    %vm1219 = vcmp.lt.s32.totalorder %v1155, 4
    %vm1220 = vcmp.lt.s32.totalorder %v1156, 4
    %vm1221 = vcmp.lt.s32.totalorder %v1157, 4
    %vm1222 = vcmp.lt.s32.totalorder %v1158, 4
    %vm1223 = vcmp.lt.s32.totalorder %v1159, 4
    %vm1224 = vcmp.lt.s32.totalorder %v1160, 4
    %vm1225 = vcmp.lt.s32.totalorder %v1161, 4
    %vm1226 = vcmp.lt.s32.totalorder %v1162, 4
    %vm1227 = vcmp.lt.s32.totalorder %v1163, 4
    %vm1228 = vcmp.lt.s32.totalorder %v1164, 4
    %vm1229 = vcmp.lt.s32.totalorder %v1165, 4
    %vm1230 = vcmp.lt.s32.totalorder %v1166, 4
    %vm1231 = vcmp.lt.s32.totalorder %v1167, 4
    %vm1232 = vcmp.lt.s32.totalorder %v1168, 4
    %vm1233 = vcmp.lt.s32.totalorder %v1169, 4
    %vm1234 = vcmp.lt.s32.totalorder %v1170, 4
    %vm1235 = vcmp.lt.s32.totalorder %v1171, 4
    %vm1236 = vcmp.lt.s32.totalorder %v1172, 4
    %vm1237 = vcmp.lt.s32.totalorder %v1173, 4
    %vm1238 = vcmp.lt.s32.totalorder %v1174, 4
    %vm1239 = vcmp.lt.s32.totalorder %v1175, 4
    %vm1240 = vcmp.lt.s32.totalorder %v1176, 4
    %vm1241 = vcmp.lt.s32.totalorder %v1177, 4
    %vm1242 = vcmp.lt.s32.totalorder %v1178, 4
    %vm1243 = vcmp.lt.s32.totalorder %v1179, 4
    %v1244 = vrot.slane %v1053, 4
    %v1245 = vrot.slane %v1054, 4
    %v1246 = vrot.slane %v1055, 4
    %v1247 = vrot.slane %v1056, 4
    %v1248 = vrot.slane %v1057, 4
    %v1249 = vrot.slane %v1058, 4
    %v1250 = vrot.slane %v1059, 4
    %v1251 = vrot.slane %v1060, 4
    %v1252 = vrot.slane %v1061, 4
    %v1253 = vrot.slane %v1062, 4
    %v1254 = vrot.slane %v1063, 4
    %v1255 = vrot.slane %v1064, 4
    %v1256 = vrot.slane %v1065, 4
    %v1257 = vrot.slane %v1066, 4
    %v1258 = vrot.slane %v1067, 4
    %v1259 = vrot.slane %v1068, 4
    %v1260 = vrot.slane %v1069, 4
    %v1261 = vrot.slane %v1070, 4
    %v1262 = vrot.slane %v1071, 4
    %v1263 = vrot.slane %v1072, 4
    %v1264 = vrot.slane %v1073, 4
    %v1265 = vrot.slane %v1074, 4
    %v1266 = vrot.slane %v1075, 4
    %v1267 = vrot.slane %v1076, 4
    %v1268 = vrot.slane %v1077, 4
    %v1269 = vrot.slane %v1078, 4
    %v1270 = vrot.slane %v1079, 4
    %v1271 = vrot.slane %v1080, 4
    %v1272 = vrot.slane %v1081, 4
    %v1273 = vrot.slane %v1082, 4
    %v1274 = vrot.slane %v1083, 4
    %v1275 = vrot.slane %v1084, 4
    %v1276 = vrot.slane %v1085, 4
    %v1277 = vrot.slane %v1086, 4
    %v1278 = vrot.slane %v1087, 4
    %v1279 = vrot.slane %v1088, 4
    %v1280 = vrot.slane %v1089, 4
    %v1281 = vrot.slane %v1090, 4
    %v1282 = vrot.slane %v1091, 4
    %v1283 = vrot.slane %v1092, 4
    %v1284 = vrot.slane %v1093, 4
    %v1285 = vrot.slane %v1094, 4
    %v1286 = vrot.slane %v1095, 4
    %v1287 = vrot.slane %v1096, 4
    %v1288 = vrot.slane %v1097, 4
    %v1289 = vrot.slane %v1098, 4
    %v1290 = vrot.slane %v1099, 4
    %v1291 = vrot.slane %v1100, 4
    %v1292 = vrot.slane %v1101, 4
    %v1293 = vrot.slane %v1102, 4
    %v1294 = vrot.slane %v1103, 4
    %v1295 = vrot.slane %v1104, 4
    %v1296 = vrot.slane %v1105, 4
    %v1297 = vrot.slane %v1106, 4
    %v1298 = vrot.slane %v1107, 4
    %v1299 = vrot.slane %v1108, 4
    %v1300 = vrot.slane %v1109, 4
    %v1301 = vrot.slane %v1110, 4
    %v1302 = vrot.slane %v1111, 4
    %v1303 = vrot.slane %v1112, 4
    %v1304 = vrot.slane %v1113, 4
    %v1305 = vrot.slane %v1114, 4
    %v1306 = vrot.slane %v1115, 4
    %v1307 = vrot.slane %v1116, 4
    %v1308 = vsel %vm1180, %v1306, %v1307
    %v1309 = vsel %vm1180, %v1305, %v1306
    %v1310 = vsel %vm1180, %v1304, %v1305
    %v1311 = vsel %vm1180, %v1303, %v1304
    %v1312 = vsel %vm1180, %v1302, %v1303
    %v1313 = vsel %vm1180, %v1301, %v1302
    %v1314 = vsel %vm1180, %v1300, %v1301
    %v1315 = vsel %vm1180, %v1299, %v1300
    %v1316 = vsel %vm1180, %v1298, %v1299
    %v1317 = vsel %vm1180, %v1297, %v1298
    %v1318 = vsel %vm1180, %v1296, %v1297
    %v1319 = vsel %vm1180, %v1295, %v1296
    %v1320 = vsel %vm1180, %v1294, %v1295
    %v1321 = vsel %vm1180, %v1293, %v1294
    %v1322 = vsel %vm1180, %v1292, %v1293
    %v1323 = vsel %vm1180, %v1291, %v1292
    %v1324 = vsel %vm1180, %v1290, %v1291
    %v1325 = vsel %vm1180, %v1289, %v1290
    %v1326 = vsel %vm1180, %v1288, %v1289
    %v1327 = vsel %vm1180, %v1287, %v1288
    %v1328 = vsel %vm1180, %v1286, %v1287
    %v1329 = vsel %vm1180, %v1285, %v1286
    %v1330 = vsel %vm1180, %v1284, %v1285
    %v1331 = vsel %vm1180, %v1283, %v1284
    %v1332 = vsel %vm1180, %v1282, %v1283
    %v1333 = vsel %vm1180, %v1281, %v1282
    %v1334 = vsel %vm1180, %v1280, %v1281
    %v1335 = vsel %vm1180, %v1279, %v1280
    %v1336 = vsel %vm1180, %v1278, %v1279
    %v1337 = vsel %vm1180, %v1277, %v1278
    %v1338 = vsel %vm1180, %v1276, %v1277
    %v1339 = vsel %vm1180, %v1275, %v1276
    %v1340 = vsel %vm1180, %v1274, %v1275
    %v1341 = vsel %vm1180, %v1273, %v1274
    %v1342 = vsel %vm1180, %v1272, %v1273
    %v1343 = vsel %vm1180, %v1271, %v1272
    %v1344 = vsel %vm1180, %v1270, %v1271
    %v1345 = vsel %vm1180, %v1269, %v1270
    %v1346 = vsel %vm1180, %v1268, %v1269
    %v1347 = vsel %vm1180, %v1267, %v1268
    %v1348 = vsel %vm1180, %v1266, %v1267
    %v1349 = vsel %vm1180, %v1265, %v1266
    %v1350 = vsel %vm1180, %v1264, %v1265
    %v1351 = vsel %vm1180, %v1263, %v1264
    %v1352 = vsel %vm1180, %v1262, %v1263
    %v1353 = vsel %vm1180, %v1261, %v1262
    %v1354 = vsel %vm1180, %v1260, %v1261
    %v1355 = vsel %vm1180, %v1259, %v1260
    %v1356 = vsel %vm1180, %v1258, %v1259
    %v1357 = vsel %vm1180, %v1257, %v1258
    %v1358 = vsel %vm1180, %v1256, %v1257
    %v1359 = vsel %vm1180, %v1255, %v1256
    %v1360 = vsel %vm1180, %v1254, %v1255
    %v1361 = vsel %vm1180, %v1253, %v1254
    %v1362 = vsel %vm1180, %v1252, %v1253
    %v1363 = vsel %vm1180, %v1251, %v1252
    %v1364 = vsel %vm1180, %v1250, %v1251
    %v1365 = vsel %vm1180, %v1249, %v1250
    %v1366 = vsel %vm1180, %v1248, %v1249
    %v1367 = vsel %vm1180, %v1247, %v1248
    %v1368 = vsel %vm1180, %v1246, %v1247
    %v1369 = vsel %vm1180, %v1245, %v1246
    %v1370 = vsel %vm1180, %v1244, %v1245
    %v1371 = vsel %vm1180, %v1307, %v1244
    %v1372 = vsel %vm1180, 0.0, %v1371
    %v1373 = vsel %vm1181, 0.0, %v1370
    %v1374 = vsel %vm1182, 0.0, %v1369
    %v1375 = vsel %vm1183, 0.0, %v1368
    %v1376 = vsel %vm1184, 0.0, %v1367
    %v1377 = vsel %vm1185, 0.0, %v1366
    %v1378 = vsel %vm1186, 0.0, %v1365
    %v1379 = vsel %vm1187, 0.0, %v1364
    %v1380 = vsel %vm1188, 0.0, %v1363
    %v1381 = vsel %vm1189, 0.0, %v1362
    %v1382 = vsel %vm1190, 0.0, %v1361
    %v1383 = vsel %vm1191, 0.0, %v1360
    %v1384 = vsel %vm1192, 0.0, %v1359
    %v1385 = vsel %vm1193, 0.0, %v1358
    %v1386 = vsel %vm1194, 0.0, %v1357
    %v1387 = vsel %vm1195, 0.0, %v1356
    %v1388 = vsel %vm1196, 0.0, %v1355
    %v1389 = vsel %vm1197, 0.0, %v1354
    %v1390 = vsel %vm1198, 0.0, %v1353
    %v1391 = vsel %vm1199, 0.0, %v1352
    %v1392 = vsel %vm1200, 0.0, %v1351
    %v1393 = vsel %vm1201, 0.0, %v1350
    %v1394 = vsel %vm1202, 0.0, %v1349
    %v1395 = vsel %vm1203, 0.0, %v1348
    %v1396 = vsel %vm1204, 0.0, %v1347
    %v1397 = vsel %vm1205, 0.0, %v1346
    %v1398 = vsel %vm1206, 0.0, %v1345
    %v1399 = vsel %vm1207, 0.0, %v1344
    %v1400 = vsel %vm1208, 0.0, %v1343
    %v1401 = vsel %vm1209, 0.0, %v1342
    %v1402 = vsel %vm1210, 0.0, %v1341
    %v1403 = vsel %vm1211, 0.0, %v1340
    %v1404 = vsel %vm1212, 0.0, %v1339
    %v1405 = vsel %vm1213, 0.0, %v1338
    %v1406 = vsel %vm1214, 0.0, %v1337
    %v1407 = vsel %vm1215, 0.0, %v1336
    %v1408 = vsel %vm1216, 0.0, %v1335
    %v1409 = vsel %vm1217, 0.0, %v1334
    %v1410 = vsel %vm1218, 0.0, %v1333
    %v1411 = vsel %vm1219, 0.0, %v1332
    %v1412 = vsel %vm1220, 0.0, %v1331
    %v1413 = vsel %vm1221, 0.0, %v1330
    %v1414 = vsel %vm1222, 0.0, %v1329
    %v1415 = vsel %vm1223, 0.0, %v1328
    %v1416 = vsel %vm1224, 0.0, %v1327
    %v1417 = vsel %vm1225, 0.0, %v1326
    %v1418 = vsel %vm1226, 0.0, %v1325
    %v1419 = vsel %vm1227, 0.0, %v1324
    %v1420 = vsel %vm1228, 0.0, %v1323
    %v1421 = vsel %vm1229, 0.0, %v1322
    %v1422 = vsel %vm1230, 0.0, %v1321
    %v1423 = vsel %vm1231, 0.0, %v1320
    %v1424 = vsel %vm1232, 0.0, %v1319
    %v1425 = vsel %vm1233, 0.0, %v1318
    %v1426 = vsel %vm1234, 0.0, %v1317
    %v1427 = vsel %vm1235, 0.0, %v1316
    %v1428 = vsel %vm1236, 0.0, %v1315
    %v1429 = vsel %vm1237, 0.0, %v1314
    %v1430 = vsel %vm1238, 0.0, %v1313
    %v1431 = vsel %vm1239, 0.0, %v1312
    %v1432 = vsel %vm1240, 0.0, %v1311
    %v1433 = vsel %vm1241, 0.0, %v1310
    %v1434 = vsel %vm1242, 0.0, %v1309
    %v1435 = vsel %vm1243, 0.0, %v1308
    %vm1436 = vcmp.ge.s32.totalorder %v987, 508
    %vm1437 = vcmp.ge.s32.totalorder %v1117, 508
    %vm1438 = vcmp.ge.s32.totalorder %v1118, 508
    %vm1439 = vcmp.ge.s32.totalorder %v1119, 508
    %vm1440 = vcmp.ge.s32.totalorder %v1120, 508
    %vm1441 = vcmp.ge.s32.totalorder %v1121, 508
    %vm1442 = vcmp.ge.s32.totalorder %v1122, 508
    %vm1443 = vcmp.ge.s32.totalorder %v1123, 508
    %vm1444 = vcmp.ge.s32.totalorder %v1124, 508
    %vm1445 = vcmp.ge.s32.totalorder %v1125, 508
    %vm1446 = vcmp.ge.s32.totalorder %v1126, 508
    %vm1447 = vcmp.ge.s32.totalorder %v1127, 508
    %vm1448 = vcmp.ge.s32.totalorder %v1128, 508
    %vm1449 = vcmp.ge.s32.totalorder %v1129, 508
    %vm1450 = vcmp.ge.s32.totalorder %v1130, 508
    %vm1451 = vcmp.ge.s32.totalorder %v1131, 508
    %vm1452 = vcmp.ge.s32.totalorder %v1132, 508
    %vm1453 = vcmp.ge.s32.totalorder %v1133, 508
    %vm1454 = vcmp.ge.s32.totalorder %v1134, 508
    %vm1455 = vcmp.ge.s32.totalorder %v1135, 508
    %vm1456 = vcmp.ge.s32.totalorder %v1136, 508
    %vm1457 = vcmp.ge.s32.totalorder %v1137, 508
    %vm1458 = vcmp.ge.s32.totalorder %v1138, 508
    %vm1459 = vcmp.ge.s32.totalorder %v1139, 508
    %vm1460 = vcmp.ge.s32.totalorder %v1140, 508
    %vm1461 = vcmp.ge.s32.totalorder %v1141, 508
    %vm1462 = vcmp.ge.s32.totalorder %v1142, 508
    %vm1463 = vcmp.ge.s32.totalorder %v1143, 508
    %vm1464 = vcmp.ge.s32.totalorder %v1144, 508
    %vm1465 = vcmp.ge.s32.totalorder %v1145, 508
    %vm1466 = vcmp.ge.s32.totalorder %v1146, 508
    %vm1467 = vcmp.ge.s32.totalorder %v1147, 508
    %vm1468 = vcmp.ge.s32.totalorder %v1148, 508
    %vm1469 = vcmp.ge.s32.totalorder %v1149, 508
    %vm1470 = vcmp.ge.s32.totalorder %v1150, 508
    %vm1471 = vcmp.ge.s32.totalorder %v1151, 508
    %vm1472 = vcmp.ge.s32.totalorder %v1152, 508
    %vm1473 = vcmp.ge.s32.totalorder %v1153, 508
    %vm1474 = vcmp.ge.s32.totalorder %v1154, 508
    %vm1475 = vcmp.ge.s32.totalorder %v1155, 508
    %vm1476 = vcmp.ge.s32.totalorder %v1156, 508
    %vm1477 = vcmp.ge.s32.totalorder %v1157, 508
    %vm1478 = vcmp.ge.s32.totalorder %v1158, 508
    %vm1479 = vcmp.ge.s32.totalorder %v1159, 508
    %vm1480 = vcmp.ge.s32.totalorder %v1160, 508
    %vm1481 = vcmp.ge.s32.totalorder %v1161, 508
    %vm1482 = vcmp.ge.s32.totalorder %v1162, 508
    %vm1483 = vcmp.ge.s32.totalorder %v1163, 508
    %vm1484 = vcmp.ge.s32.totalorder %v1164, 508
    %vm1485 = vcmp.ge.s32.totalorder %v1165, 508
    %vm1486 = vcmp.ge.s32.totalorder %v1166, 508
    %vm1487 = vcmp.ge.s32.totalorder %v1167, 508
    %vm1488 = vcmp.ge.s32.totalorder %v1168, 508
    %vm1489 = vcmp.ge.s32.totalorder %v1169, 508
    %vm1490 = vcmp.ge.s32.totalorder %v1170, 508
    %vm1491 = vcmp.ge.s32.totalorder %v1171, 508
    %vm1492 = vcmp.ge.s32.totalorder %v1172, 508
    %vm1493 = vcmp.ge.s32.totalorder %v1173, 508
    %vm1494 = vcmp.ge.s32.totalorder %v1174, 508
    %vm1495 = vcmp.ge.s32.totalorder %v1175, 508
    %vm1496 = vcmp.ge.s32.totalorder %v1176, 508
    %vm1497 = vcmp.ge.s32.totalorder %v1177, 508
    %vm1498 = vcmp.ge.s32.totalorder %v1178, 508
    %vm1499 = vcmp.ge.s32.totalorder %v1179, 508
    %v1500 = vsel %vm1436, 0.0, %v1370
    %v1501 = vsel %vm1437, 0.0, %v1369
    %v1502 = vsel %vm1438, 0.0, %v1368
    %v1503 = vsel %vm1439, 0.0, %v1367
    %v1504 = vsel %vm1440, 0.0, %v1366
    %v1505 = vsel %vm1441, 0.0, %v1365
    %v1506 = vsel %vm1442, 0.0, %v1364
    %v1507 = vsel %vm1443, 0.0, %v1363
    %v1508 = vsel %vm1444, 0.0, %v1362
    %v1509 = vsel %vm1445, 0.0, %v1361
    %v1510 = vsel %vm1446, 0.0, %v1360
    %v1511 = vsel %vm1447, 0.0, %v1359
    %v1512 = vsel %vm1448, 0.0, %v1358
    %v1513 = vsel %vm1449, 0.0, %v1357
    %v1514 = vsel %vm1450, 0.0, %v1356
    %v1515 = vsel %vm1451, 0.0, %v1355
    %v1516 = vsel %vm1452, 0.0, %v1354
    %v1517 = vsel %vm1453, 0.0, %v1353
    %v1518 = vsel %vm1454, 0.0, %v1352
    %v1519 = vsel %vm1455, 0.0, %v1351
    %v1520 = vsel %vm1456, 0.0, %v1350
    %v1521 = vsel %vm1457, 0.0, %v1349
    %v1522 = vsel %vm1458, 0.0, %v1348
    %v1523 = vsel %vm1459, 0.0, %v1347
    %v1524 = vsel %vm1460, 0.0, %v1346
    %v1525 = vsel %vm1461, 0.0, %v1345
    %v1526 = vsel %vm1462, 0.0, %v1344
    %v1527 = vsel %vm1463, 0.0, %v1343
    %v1528 = vsel %vm1464, 0.0, %v1342
    %v1529 = vsel %vm1465, 0.0, %v1341
    %v1530 = vsel %vm1466, 0.0, %v1340
    %v1531 = vsel %vm1467, 0.0, %v1339
    %v1532 = vsel %vm1468, 0.0, %v1338
    %v1533 = vsel %vm1469, 0.0, %v1337
    %v1534 = vsel %vm1470, 0.0, %v1336
    %v1535 = vsel %vm1471, 0.0, %v1335
    %v1536 = vsel %vm1472, 0.0, %v1334
    %v1537 = vsel %vm1473, 0.0, %v1333
    %v1538 = vsel %vm1474, 0.0, %v1332
    %v1539 = vsel %vm1475, 0.0, %v1331
    %v1540 = vsel %vm1476, 0.0, %v1330
    %v1541 = vsel %vm1477, 0.0, %v1329
    %v1542 = vsel %vm1478, 0.0, %v1328
    %v1543 = vsel %vm1479, 0.0, %v1327
    %v1544 = vsel %vm1480, 0.0, %v1326
    %v1545 = vsel %vm1481, 0.0, %v1325
    %v1546 = vsel %vm1482, 0.0, %v1324
    %v1547 = vsel %vm1483, 0.0, %v1323
    %v1548 = vsel %vm1484, 0.0, %v1322
    %v1549 = vsel %vm1485, 0.0, %v1321
    %v1550 = vsel %vm1486, 0.0, %v1320
    %v1551 = vsel %vm1487, 0.0, %v1319
    %v1552 = vsel %vm1488, 0.0, %v1318
    %v1553 = vsel %vm1489, 0.0, %v1317
    %v1554 = vsel %vm1490, 0.0, %v1316
    %v1555 = vsel %vm1491, 0.0, %v1315
    %v1556 = vsel %vm1492, 0.0, %v1314
    %v1557 = vsel %vm1493, 0.0, %v1313
    %v1558 = vsel %vm1494, 0.0, %v1312
    %v1559 = vsel %vm1495, 0.0, %v1311
    %v1560 = vsel %vm1496, 0.0, %v1310
    %v1561 = vsel %vm1497, 0.0, %v1309
    %v1562 = vsel %vm1498, 0.0, %v1308
    %v1563 = vsel %vm1499, 0.0, %v1371
    %1628 = vrot.lane.b32.xlu0 %v1053, 64
    %v1629 = vpop.permute.xlu0 %1628
    %1630 = vrot.lane.b32.xlu0 %v1054, 64
    %v1631 = vpop.permute.xlu0 %1630
    %1632 = vrot.lane.b32.xlu0 %v1055, 64
    %v1633 = vpop.permute.xlu0 %1632
    %1634 = vrot.lane.b32.xlu0 %v1056, 64
    %v1635 = vpop.permute.xlu0 %1634
    %1636 = vrot.lane.b32.xlu0 %v1057, 64
    %v1637 = vpop.permute.xlu0 %1636
    %1638 = vrot.lane.b32.xlu0 %v1058, 64
    %v1639 = vpop.permute.xlu0 %1638
    %1640 = vrot.lane.b32.xlu0 %v1059, 64
    %v1641 = vpop.permute.xlu0 %1640
    %1642 = vrot.lane.b32.xlu0 %v1060, 64
    %v1643 = vpop.permute.xlu0 %1642
    %1644 = vrot.lane.b32.xlu0 %v1061, 64
    %v1645 = vpop.permute.xlu0 %1644
    %1646 = vrot.lane.b32.xlu0 %v1062, 64
    %v1647 = vpop.permute.xlu0 %1646
    %1648 = vrot.lane.b32.xlu0 %v1063, 64
    %v1649 = vpop.permute.xlu0 %1648
    %1650 = vrot.lane.b32.xlu0 %v1064, 64
    %v1651 = vpop.permute.xlu0 %1650
    %1652 = vrot.lane.b32.xlu0 %v1065, 64
    %v1653 = vpop.permute.xlu0 %1652
    %1654 = vrot.lane.b32.xlu0 %v1066, 64
    %v1655 = vpop.permute.xlu0 %1654
    %1656 = vrot.lane.b32.xlu0 %v1067, 64
    %v1657 = vpop.permute.xlu0 %1656
    %1658 = vrot.lane.b32.xlu0 %v1068, 64
    %v1659 = vpop.permute.xlu0 %1658
    %1660 = vrot.lane.b32.xlu0 %v1069, 64
    %v1661 = vpop.permute.xlu0 %1660
    %1662 = vrot.lane.b32.xlu0 %v1070, 64
    %v1663 = vpop.permute.xlu0 %1662
    %1664 = vrot.lane.b32.xlu0 %v1071, 64
    %v1665 = vpop.permute.xlu0 %1664
    %1666 = vrot.lane.b32.xlu0 %v1072, 64
    %v1667 = vpop.permute.xlu0 %1666
    %1668 = vrot.lane.b32.xlu0 %v1073, 64
    %v1669 = vpop.permute.xlu0 %1668
    %1670 = vrot.lane.b32.xlu0 %v1074, 64
    %v1671 = vpop.permute.xlu0 %1670
    %1672 = vrot.lane.b32.xlu0 %v1075, 64
    %v1673 = vpop.permute.xlu0 %1672
    %1674 = vrot.lane.b32.xlu0 %v1076, 64
    %v1675 = vpop.permute.xlu0 %1674
    %1676 = vrot.lane.b32.xlu0 %v1077, 64
    %v1677 = vpop.permute.xlu0 %1676
    %1678 = vrot.lane.b32.xlu0 %v1078, 64
    %v1679 = vpop.permute.xlu0 %1678
    %1680 = vrot.lane.b32.xlu0 %v1079, 64
    %v1681 = vpop.permute.xlu0 %1680
    %1682 = vrot.lane.b32.xlu0 %v1080, 64
    %v1683 = vpop.permute.xlu0 %1682
    %1684 = vrot.lane.b32.xlu0 %v1081, 64
    %v1685 = vpop.permute.xlu0 %1684
    %1686 = vrot.lane.b32.xlu0 %v1082, 64
    %v1687 = vpop.permute.xlu0 %1686
    %1688 = vrot.lane.b32.xlu0 %v1083, 64
    %v1689 = vpop.permute.xlu0 %1688
    %1690 = vrot.lane.b32.xlu0 %v1084, 64
    %v1691 = vpop.permute.xlu0 %1690
    %1692 = vrot.lane.b32.xlu0 %v1085, 64
    %v1693 = vpop.permute.xlu0 %1692
    %1694 = vrot.lane.b32.xlu0 %v1086, 64
    %v1695 = vpop.permute.xlu0 %1694
    %1696 = vrot.lane.b32.xlu0 %v1087, 64
    %v1697 = vpop.permute.xlu0 %1696
    %1698 = vrot.lane.b32.xlu0 %v1088, 64
    %v1699 = vpop.permute.xlu0 %1698
    %1700 = vrot.lane.b32.xlu0 %v1089, 64
    %v1701 = vpop.permute.xlu0 %1700
    %1702 = vrot.lane.b32.xlu0 %v1090, 64
    %v1703 = vpop.permute.xlu0 %1702
    %1704 = vrot.lane.b32.xlu0 %v1091, 64
    %v1705 = vpop.permute.xlu0 %1704
    %1706 = vrot.lane.b32.xlu0 %v1092, 64
    %v1707 = vpop.permute.xlu0 %1706
    %1708 = vrot.lane.b32.xlu0 %v1093, 64
    %v1709 = vpop.permute.xlu0 %1708
    %1710 = vrot.lane.b32.xlu0 %v1094, 64
    %v1711 = vpop.permute.xlu0 %1710
    %1712 = vrot.lane.b32.xlu0 %v1095, 64
    %v1713 = vpop.permute.xlu0 %1712
    %1714 = vrot.lane.b32.xlu0 %v1096, 64
    %v1715 = vpop.permute.xlu0 %1714
    %1716 = vrot.lane.b32.xlu0 %v1097, 64
    %v1717 = vpop.permute.xlu0 %1716
    %1718 = vrot.lane.b32.xlu0 %v1098, 64
    %v1719 = vpop.permute.xlu0 %1718
    %1720 = vrot.lane.b32.xlu0 %v1099, 64
    %v1721 = vpop.permute.xlu0 %1720
    %1722 = vrot.lane.b32.xlu0 %v1100, 64
    %v1723 = vpop.permute.xlu0 %1722
    %1724 = vrot.lane.b32.xlu0 %v1101, 64
    %v1725 = vpop.permute.xlu0 %1724
    %1726 = vrot.lane.b32.xlu0 %v1102, 64
    %v1727 = vpop.permute.xlu0 %1726
    %1728 = vrot.lane.b32.xlu0 %v1103, 64
    %v1729 = vpop.permute.xlu0 %1728
    %1730 = vrot.lane.b32.xlu0 %v1104, 64
    %v1731 = vpop.permute.xlu0 %1730
    %1732 = vrot.lane.b32.xlu0 %v1105, 64
    %v1733 = vpop.permute.xlu0 %1732
    %1734 = vrot.lane.b32.xlu0 %v1106, 64
    %v1735 = vpop.permute.xlu0 %1734
    %1736 = vrot.lane.b32.xlu0 %v1107, 64
    %v1737 = vpop.permute.xlu0 %1736
    %1738 = vrot.lane.b32.xlu0 %v1108, 64
    %v1739 = vpop.permute.xlu0 %1738
    %1740 = vrot.lane.b32.xlu0 %v1109, 64
    %v1741 = vpop.permute.xlu0 %1740
    %1742 = vrot.lane.b32.xlu0 %v1110, 64
    %v1743 = vpop.permute.xlu0 %1742
    %1744 = vrot.lane.b32.xlu0 %v1111, 64
    %v1745 = vpop.permute.xlu0 %1744
    %1746 = vrot.lane.b32.xlu0 %v1112, 64
    %v1747 = vpop.permute.xlu0 %1746
    %1748 = vrot.lane.b32.xlu0 %v1113, 64
    %v1749 = vpop.permute.xlu0 %1748
    %1750 = vrot.lane.b32.xlu0 %v1114, 64
    %v1751 = vpop.permute.xlu0 %1750
    %1752 = vrot.lane.b32.xlu0 %v1115, 64
    %v1753 = vpop.permute.xlu0 %1752
    %1754 = vrot.lane.b32.xlu0 %v1116, 64
    %v1755 = vpop.permute.xlu0 %1754
    %vm1820 = vcmask 523264
    %v1821 = vsel %vm1820, %v1372, %v1629
    %v1822 = vsel %vm1820, %v1373, %v1631
    %v1823 = vsel %vm1820, %v1374, %v1633
    %v1824 = vsel %vm1820, %v1375, %v1635
    %v1825 = vsel %vm1820, %v1376, %v1637
    %v1826 = vsel %vm1820, %v1377, %v1639
    %v1827 = vsel %vm1820, %v1378, %v1641
    %v1828 = vsel %vm1820, %v1379, %v1643
    %v1829 = vsel %vm1820, %v1380, %v1645
    %v1830 = vsel %vm1820, %v1381, %v1647
    %v1831 = vsel %vm1820, %v1382, %v1649
    %v1832 = vsel %vm1820, %v1383, %v1651
    %v1833 = vsel %vm1820, %v1384, %v1653
    %v1834 = vsel %vm1820, %v1385, %v1655
    %v1835 = vsel %vm1820, %v1386, %v1657
    %v1836 = vsel %vm1820, %v1387, %v1659
    %v1837 = vsel %vm1820, %v1388, %v1661
    %v1838 = vsel %vm1820, %v1389, %v1663
    %v1839 = vsel %vm1820, %v1390, %v1665
    %v1840 = vsel %vm1820, %v1391, %v1667
    %v1841 = vsel %vm1820, %v1392, %v1669
    %v1842 = vsel %vm1820, %v1393, %v1671
    %v1843 = vsel %vm1820, %v1394, %v1673
    %v1844 = vsel %vm1820, %v1395, %v1675
    %v1845 = vsel %vm1820, %v1396, %v1677
    %v1846 = vsel %vm1820, %v1397, %v1679
    %v1847 = vsel %vm1820, %v1398, %v1681
    %v1848 = vsel %vm1820, %v1399, %v1683
    %v1849 = vsel %vm1820, %v1400, %v1685
    %v1850 = vsel %vm1820, %v1401, %v1687
    %v1851 = vsel %vm1820, %v1402, %v1689
    %v1852 = vsel %vm1820, %v1403, %v1691
    %v1853 = vsel %vm1820, %v1404, %v1693
    %v1854 = vsel %vm1820, %v1405, %v1695
    %v1855 = vsel %vm1820, %v1406, %v1697
    %v1856 = vsel %vm1820, %v1407, %v1699
    %v1857 = vsel %vm1820, %v1408, %v1701
    %v1858 = vsel %vm1820, %v1409, %v1703
    %v1859 = vsel %vm1820, %v1410, %v1705
    %v1860 = vsel %vm1820, %v1411, %v1707
    %v1861 = vsel %vm1820, %v1412, %v1709
    %v1862 = vsel %vm1820, %v1413, %v1711
    %v1863 = vsel %vm1820, %v1414, %v1713
    %v1864 = vsel %vm1820, %v1415, %v1715
    %v1865 = vsel %vm1820, %v1416, %v1717
    %v1866 = vsel %vm1820, %v1417, %v1719
    %v1867 = vsel %vm1820, %v1418, %v1721
    %v1868 = vsel %vm1820, %v1419, %v1723
    %v1869 = vsel %vm1820, %v1420, %v1725
    %v1870 = vsel %vm1820, %v1421, %v1727
    %v1871 = vsel %vm1820, %v1422, %v1729
    %v1872 = vsel %vm1820, %v1423, %v1731
    %v1873 = vsel %vm1820, %v1424, %v1733
    %v1874 = vsel %vm1820, %v1425, %v1735
    %v1875 = vsel %vm1820, %v1426, %v1737
    %v1876 = vsel %vm1820, %v1427, %v1739
    %v1877 = vsel %vm1820, %v1428, %v1741
    %v1878 = vsel %vm1820, %v1429, %v1743
    %v1879 = vsel %vm1820, %v1430, %v1745
    %v1880 = vsel %vm1820, %v1431, %v1747
    %v1881 = vsel %vm1820, %v1432, %v1749
    %v1882 = vsel %vm1820, %v1433, %v1751
    %v1883 = vsel %vm1820, %v1434, %v1753
    %v1884 = vsel %vm1820, %v1435, %v1755
    %v1885 = vld [vmem:[%s5] sm:$0xff]
    %v1886 = vld [vmem:[%s5 + $0x8] sm:$0xff]
    %v1887 = vld [vmem:[%s5 + $0x10] sm:$0xff]
    %v1888 = vld [vmem:[%s5 + $0x18] sm:$0xff]
    %v1889 = vld [vmem:[%s5 + $0x20] sm:$0xff]
    %v1890 = vld [vmem:[%s5 + $0x28] sm:$0xff]
    %v1891 = vld [vmem:[%s5 + $0x30] sm:$0xff]
    %v1892 = vld [vmem:[%s5 + $0x38] sm:$0xff]
    %v1893 = vld [vmem:[%s5 + $0x40] sm:$0xff]
    %v1894 = vld [vmem:[%s5 + $0x48] sm:$0xff]
    %v1895 = vld [vmem:[%s5 + $0x50] sm:$0xff]
    %v1896 = vld [vmem:[%s5 + $0x58] sm:$0xff]
    %v1897 = vld [vmem:[%s5 + $0x60] sm:$0xff]
    %v1898 = vld [vmem:[%s5 + $0x68] sm:$0xff]
    %v1899 = vld [vmem:[%s5 + $0x70] sm:$0xff]
    %v1900 = vld [vmem:[%s5 + $0x78] sm:$0xff]
    %v1901 = vld [vmem:[%s5 + $0x80] sm:$0xff]
    %v1902 = vld [vmem:[%s5 + $0x88] sm:$0xff]
    %v1903 = vld [vmem:[%s5 + $0x90] sm:$0xff]
    %v1904 = vld [vmem:[%s5 + $0x98] sm:$0xff]
    %v1905 = vld [vmem:[%s5 + $0xa0] sm:$0xff]
    %v1906 = vld [vmem:[%s5 + $0xa8] sm:$0xff]
    %v1907 = vld [vmem:[%s5 + $0xb0] sm:$0xff]
    %v1908 = vld [vmem:[%s5 + $0xb8] sm:$0xff]
    %v1909 = vld [vmem:[%s6] sm:$0x1]
    %v1911 = vlaneseq
    %v1912 = vshrl.u32 %v1911, 7
    %v1913 = vsub.s32 0, %v1912
    %v1914 = vrot.slane %v1909, %v1913
    %v1917 = vsel %vm1820, %v1500, 0
    %v1920 = vsel %vm1820, %v1501, 0
    %v1923 = vsel %vm1820, %v1502, 0
    %v1926 = vsel %vm1820, %v1503, 0
    %v1929 = vsel %vm1820, %v1504, 0
    %v1932 = vsel %vm1820, %v1505, 0
    %v1935 = vsel %vm1820, %v1506, 0
    %v1938 = vsel %vm1820, %v1507, 0
    %v1941 = vsel %vm1820, %v1508, 0
    %v1944 = vsel %vm1820, %v1509, 0
    %v1947 = vsel %vm1820, %v1510, 0
    %v1950 = vsel %vm1820, %v1511, 0
    %v1953 = vsel %vm1820, %v1512, 0
    %v1956 = vsel %vm1820, %v1513, 0
    %v1959 = vsel %vm1820, %v1514, 0
    %v1962 = vsel %vm1820, %v1515, 0
    %v1965 = vsel %vm1820, %v1516, 0
    %v1968 = vsel %vm1820, %v1517, 0
    %v1971 = vsel %vm1820, %v1518, 0
    %v1974 = vsel %vm1820, %v1519, 0
    %v1977 = vsel %vm1820, %v1520, 0
    %v1980 = vsel %vm1820, %v1521, 0
    %v1983 = vsel %vm1820, %v1522, 0
    %v1986 = vsel %vm1820, %v1523, 0
    %v1989 = vsel %vm1820, %v1524, 0
    %v1992 = vsel %vm1820, %v1525, 0
    %v1995 = vsel %vm1820, %v1526, 0
    %v1998 = vsel %vm1820, %v1527, 0
    %v2001 = vsel %vm1820, %v1528, 0
    %v2004 = vsel %vm1820, %v1529, 0
    %v2007 = vsel %vm1820, %v1530, 0
    %v2010 = vsel %vm1820, %v1531, 0
    %v2013 = vsel %vm1820, %v1532, 0
    %v2016 = vsel %vm1820, %v1533, 0
    %v2019 = vsel %vm1820, %v1534, 0
    %v2022 = vsel %vm1820, %v1535, 0
    %v2025 = vsel %vm1820, %v1536, 0
    %v2028 = vsel %vm1820, %v1537, 0
    %v2031 = vsel %vm1820, %v1538, 0
    %v2034 = vsel %vm1820, %v1539, 0
    %v2037 = vsel %vm1820, %v1540, 0
    %v2040 = vsel %vm1820, %v1541, 0
    %v2043 = vsel %vm1820, %v1542, 0
    %v2046 = vsel %vm1820, %v1543, 0
    %v2049 = vsel %vm1820, %v1544, 0
    %v2052 = vsel %vm1820, %v1545, 0
    %v2055 = vsel %vm1820, %v1546, 0
    %v2058 = vsel %vm1820, %v1547, 0
    %v2061 = vsel %vm1820, %v1548, 0
    %v2064 = vsel %vm1820, %v1549, 0
    %v2067 = vsel %vm1820, %v1550, 0
    %v2070 = vsel %vm1820, %v1551, 0
    %v2073 = vsel %vm1820, %v1552, 0
    %v2076 = vsel %vm1820, %v1553, 0
    %v2079 = vsel %vm1820, %v1554, 0
    %v2082 = vsel %vm1820, %v1555, 0
    %v2085 = vsel %vm1820, %v1556, 0
    %v2088 = vsel %vm1820, %v1557, 0
    %v2091 = vsel %vm1820, %v1558, 0
    %v2094 = vsel %vm1820, %v1559, 0
    %v2097 = vsel %vm1820, %v1560, 0
    %v2100 = vsel %vm1820, %v1561, 0
    %v2103 = vsel %vm1820, %v1562, 0
    %v2106 = vsel %vm1820, %v1563, 0
    %2108 = vmatprep.subr.mxu0 0.0
    %2109 = vmatpush1.msra.mxu0 %v1885
    %2110 = vmatprep.subr.mxu0 0.0
    %2111 = vmatpush1.msra.mxu0 %v1886
    %2112 = vmatprep.subr.mxu0 0.0
    %2113 = vmatpush1.msra.mxu0 %v1887
    %2114 = vmatprep.subr.mxu0 0.0
    %2115 = vmatpush1.msra.mxu0 %v1888
    %2116 = vmatprep.subr.mxu0 0.0
    %2117 = vmatpush1.msra.mxu0 %v1889
    %2118 = vmatprep.subr.mxu0 0.0
    %2119 = vmatpush1.msra.mxu0 %v1890
    %2120 = vmatprep.subr.mxu0 0.0
    %2121 = vmatpush1.msra.mxu0 %v1891
    %2122 = vmatprep.subr.mxu0 0.0
    %2123 = vmatpush1.msra.mxu0 %v1892
    %2124 = vmatprep.subr.mxu0 0.0
    %2125 = vmatpush1.msra.mxu0 %v1893
    %2126 = vmatprep.subr.mxu0 0.0
    %2127 = vmatpush1.msra.mxu0 %v1894
    %2128 = vmatprep.subr.mxu0 0.0
    %2129 = vmatpush1.msra.mxu0 %v1895
    %2130 = vmatprep.subr.mxu0 0.0
    %2131 = vmatpush1.msra.mxu0 %v1896
    %2132 = vmatprep.subr.mxu0 0.0
    %2133 = vmatpush1.msra.mxu0 %v1897
    %2134 = vmatprep.subr.mxu0 0.0
    %2135 = vmatpush1.msra.mxu0 %v1898
    %2136 = vmatprep.subr.mxu0 0.0
    %2137 = vmatpush1.msra.mxu0 %v1899
    %2138 = vmatprep.subr.mxu0 0.0
    %2139 = vmatpush1.msra.mxu0 %v1900
    %2140 = vmatprep.subr.mxu0 0.0
    %2141 = vmatpush1.msra.mxu0 %v1901
    %2142 = vmatprep.subr.mxu0 0.0
    %2143 = vmatpush1.msra.mxu0 %v1902
    %2144 = vmatprep.subr.mxu0 0.0
    %2145 = vmatpush1.msra.mxu0 %v1903
    %2146 = vmatprep.subr.mxu0 0.0
    %2147 = vmatpush1.msra.mxu0 %v1904
    %2148 = vmatprep.subr.mxu0 0.0
    %2149 = vmatpush1.msra.mxu0 %v1905
    %2150 = vmatprep.subr.mxu0 0.0
    %2151 = vmatpush1.msra.mxu0 %v1906
    %2152 = vmatprep.subr.mxu0 0.0
    %2153 = vmatpush1.msra.mxu0 %v1907
    %2154 = vmatprep.subr.mxu0 0.0
    %2155 = vmatpush1.msra.mxu0 %v1908
    %2156 = vmatprep.subr.mxu0 0.0
    %2157 = vmatpush1.msra.mxu0 0.0
    %2158 = vmatprep.subr.mxu0 0.0
    %2159 = vmatpush1.msra.mxu0 0.0
    %2160 = vmatprep.subr.mxu0 0.0
    %2161 = vmatpush1.msra.mxu0 0.0
    %2162 = vmatprep.subr.mxu0 0.0
    %2163 = vmatpush1.msra.mxu0 0.0
    %2164 = vmatprep.subr.mxu0 0.0
    %2165 = vmatpush1.msra.mxu0 0.0
    %2166 = vmatprep.subr.mxu0 0.0
    %2167 = vmatpush1.msra.mxu0 0.0
    %2168 = vmatprep.subr.mxu0 0.0
    %2169 = vmatpush1.msra.mxu0 0.0
    %2170 = vmatprep.subr.mxu0 0.0
    %2171 = vmatpush1.msra.mxu0 0.0
    %2172 = vmatprep.mubr.f32.mxu0 %v1917
    %2173 = vmatmul.mubr.f32.gmra.mrb[0].mxu0 %v1821
    %v2174 = vpop.f32.mrb[0].mxu0
    %v2175 = vadd.f32 %v1914, %v2174
    %v2176 = vpop.f32.mrb[0].mxu0
    %2177 = vmatprep.mubr.f32.mxu0 %v1920
    %2178 = vmatmul.mubr.f32.gmra.mrb[0].mxu0 %v1822
    %v2179 = vpop.f32.mrb[0].mxu0
    %v2180 = vadd.f32 %v1914, %v2179
    %v2181 = vpop.f32.mrb[0].mxu0
    %2182 = vmatprep.mubr.f32.mxu0 %v1923
    %2183 = vmatmul.mubr.f32.gmra.mrb[0].mxu0 %v1823
    %v2184 = vpop.f32.mrb[0].mxu0
    %v2185 = vadd.f32 %v1914, %v2184
    %v2186 = vpop.f32.mrb[0].mxu0
    %2187 = vmatprep.mubr.f32.mxu0 %v1926
    %2188 = vmatmul.mubr.f32.gmra.mrb[0].mxu0 %v1824
    %v2189 = vpop.f32.mrb[0].mxu0
    %v2190 = vadd.f32 %v1914, %v2189
    %v2191 = vpop.f32.mrb[0].mxu0
    %2192 = vmatprep.mubr.f32.mxu0 %v1929
    %2193 = vmatmul.mubr.f32.gmra.mrb[0].mxu0 %v1825
    %v2194 = vpop.f32.mrb[0].mxu0
    %v2195 = vadd.f32 %v1914, %v2194
    %v2196 = vpop.f32.mrb[0].mxu0
    %2197 = vmatprep.mubr.f32.mxu0 %v1932
    %2198 = vmatmul.mubr.f32.gmra.mrb[0].mxu0 %v1826
    %v2199 = vpop.f32.mrb[0].mxu0
    %v2200 = vadd.f32 %v1914, %v2199
    %v2201 = vpop.f32.mrb[0].mxu0
    %2202 = vmatprep.mubr.f32.mxu0 %v1935
    %2203 = vmatmul.mubr.f32.gmra.mrb[0].mxu0 %v1827
    %v2204 = vpop.f32.mrb[0].mxu0
    %v2205 = vadd.f32 %v1914, %v2204
    %v2206 = vpop.f32.mrb[0].mxu0
    %2207 = vmatprep.mubr.f32.mxu0 %v1938
    %2208 = vmatmul.mubr.f32.gmra.mrb[0].mxu0 %v1828
    %v2209 = vpop.f32.mrb[0].mxu0
    %v2210 = vadd.f32 %v1914, %v2209
    %v2211 = vpop.f32.mrb[0].mxu0
    %2212 = vmatprep.mubr.f32.mxu0 %v1941
    %2213 = vmatmul.mubr.f32.gmra.mrb[0].mxu0 %v1829
    %v2214 = vpop.f32.mrb[0].mxu0
    %v2215 = vadd.f32 %v1914, %v2214
    %v2216 = vpop.f32.mrb[0].mxu0
    %2217 = vmatprep.mubr.f32.mxu0 %v1944
    %2218 = vmatmul.mubr.f32.gmra.mrb[0].mxu0 %v1830
    %v2219 = vpop.f32.mrb[0].mxu0
    %v2220 = vadd.f32 %v1914, %v2219
    %v2221 = vpop.f32.mrb[0].mxu0
    %2222 = vmatprep.mubr.f32.mxu0 %v1947
    %2223 = vmatmul.mubr.f32.gmra.mrb[0].mxu0 %v1831
    %v2224 = vpop.f32.mrb[0].mxu0
    %v2225 = vadd.f32 %v1914, %v2224
    %v2226 = vpop.f32.mrb[0].mxu0
    %2227 = vmatprep.mubr.f32.mxu0 %v1950
    %2228 = vmatmul.mubr.f32.gmra.mrb[0].mxu0 %v1832
    %v2229 = vpop.f32.mrb[0].mxu0
    %v2230 = vadd.f32 %v1914, %v2229
    %v2231 = vpop.f32.mrb[0].mxu0
    %2232 = vmatprep.mubr.f32.mxu0 %v1953
    %2233 = vmatmul.mubr.f32.gmra.mrb[0].mxu0 %v1833
    %v2234 = vpop.f32.mrb[0].mxu0
    %v2235 = vadd.f32 %v1914, %v2234
    %v2236 = vpop.f32.mrb[0].mxu0
    %2237 = vmatprep.mubr.f32.mxu0 %v1956
    %2238 = vmatmul.mubr.f32.gmra.mrb[0].mxu0 %v1834
    %v2239 = vpop.f32.mrb[0].mxu0
    %v2240 = vadd.f32 %v1914, %v2239
    %v2241 = vpop.f32.mrb[0].mxu0
    %2242 = vmatprep.mubr.f32.mxu0 %v1959
    %2243 = vmatmul.mubr.f32.gmra.mrb[0].mxu0 %v1835
    %v2244 = vpop.f32.mrb[0].mxu0
    %v2245 = vadd.f32 %v1914, %v2244
    %v2246 = vpop.f32.mrb[0].mxu0
    %2247 = vmatprep.mubr.f32.mxu0 %v1962
    %2248 = vmatmul.mubr.f32.gmra.mrb[0].mxu0 %v1836
    %v2249 = vpop.f32.mrb[0].mxu0
    %v2250 = vadd.f32 %v1914, %v2249
    %v2251 = vpop.f32.mrb[0].mxu0
    %2252 = vmatprep.mubr.f32.mxu0 %v1965
    %2253 = vmatmul.mubr.f32.gmra.mrb[0].mxu0 %v1837
    %v2254 = vpop.f32.mrb[0].mxu0
    %v2255 = vadd.f32 %v1914, %v2254
    %v2256 = vpop.f32.mrb[0].mxu0
    %2257 = vmatprep.mubr.f32.mxu0 %v1968
    %2258 = vmatmul.mubr.f32.gmra.mrb[0].mxu0 %v1838
    %v2259 = vpop.f32.mrb[0].mxu0
    %v2260 = vadd.f32 %v1914, %v2259
    %v2261 = vpop.f32.mrb[0].mxu0
    %2262 = vmatprep.mubr.f32.mxu0 %v1971
    %2263 = vmatmul.mubr.f32.gmra.mrb[0].mxu0 %v1839
    %v2264 = vpop.f32.mrb[0].mxu0
    %v2265 = vadd.f32 %v1914, %v2264
    %v2266 = vpop.f32.mrb[0].mxu0
    %2267 = vmatprep.mubr.f32.mxu0 %v1974
    %2268 = vmatmul.mubr.f32.gmra.mrb[0].mxu0 %v1840
    %v2269 = vpop.f32.mrb[0].mxu0
    %v2270 = vadd.f32 %v1914, %v2269
    %v2271 = vpop.f32.mrb[0].mxu0
    %2272 = vmatprep.mubr.f32.mxu0 %v1977
    %2273 = vmatmul.mubr.f32.gmra.mrb[0].mxu0 %v1841
    %v2274 = vpop.f32.mrb[0].mxu0
    %v2275 = vadd.f32 %v1914, %v2274
    %v2276 = vpop.f32.mrb[0].mxu0
    %2277 = vmatprep.mubr.f32.mxu0 %v1980
    %2278 = vmatmul.mubr.f32.gmra.mrb[0].mxu0 %v1842
    %v2279 = vpop.f32.mrb[0].mxu0
    %v2280 = vadd.f32 %v1914, %v2279
    %v2281 = vpop.f32.mrb[0].mxu0
    %2282 = vmatprep.mubr.f32.mxu0 %v1983
    %2283 = vmatmul.mubr.f32.gmra.mrb[0].mxu0 %v1843
    %v2284 = vpop.f32.mrb[0].mxu0
    %v2285 = vadd.f32 %v1914, %v2284
    %v2286 = vpop.f32.mrb[0].mxu0
    %2287 = vmatprep.mubr.f32.mxu0 %v1986
    %2288 = vmatmul.mubr.f32.gmra.mrb[0].mxu0 %v1844
    %v2289 = vpop.f32.mrb[0].mxu0
    %v2290 = vadd.f32 %v1914, %v2289
    %v2291 = vpop.f32.mrb[0].mxu0
    %2292 = vmatprep.mubr.f32.mxu0 %v1989
    %2293 = vmatmul.mubr.f32.gmra.mrb[0].mxu0 %v1845
    %v2294 = vpop.f32.mrb[0].mxu0
    %v2295 = vadd.f32 %v1914, %v2294
    %v2296 = vpop.f32.mrb[0].mxu0
    %2297 = vmatprep.mubr.f32.mxu0 %v1992
    %2298 = vmatmul.mubr.f32.gmra.mrb[0].mxu0 %v1846
    %v2299 = vpop.f32.mrb[0].mxu0
    %v2300 = vadd.f32 %v1914, %v2299
    %v2301 = vpop.f32.mrb[0].mxu0
    %2302 = vmatprep.mubr.f32.mxu0 %v1995
    %2303 = vmatmul.mubr.f32.gmra.mrb[0].mxu0 %v1847
    %v2304 = vpop.f32.mrb[0].mxu0
    %v2305 = vadd.f32 %v1914, %v2304
    %v2306 = vpop.f32.mrb[0].mxu0
    %2307 = vmatprep.mubr.f32.mxu0 %v1998
    %2308 = vmatmul.mubr.f32.gmra.mrb[0].mxu0 %v1848
    %v2309 = vpop.f32.mrb[0].mxu0
    %v2310 = vadd.f32 %v1914, %v2309
    %v2311 = vpop.f32.mrb[0].mxu0
    %2312 = vmatprep.mubr.f32.mxu0 %v2001
    %2313 = vmatmul.mubr.f32.gmra.mrb[0].mxu0 %v1849
    %v2314 = vpop.f32.mrb[0].mxu0
    %v2315 = vadd.f32 %v1914, %v2314
    %v2316 = vpop.f32.mrb[0].mxu0
    %2317 = vmatprep.mubr.f32.mxu0 %v2004
    %2318 = vmatmul.mubr.f32.gmra.mrb[0].mxu0 %v1850
    %v2319 = vpop.f32.mrb[0].mxu0
    %v2320 = vadd.f32 %v1914, %v2319
    %v2321 = vpop.f32.mrb[0].mxu0
    %2322 = vmatprep.mubr.f32.mxu0 %v2007
    %2323 = vmatmul.mubr.f32.gmra.mrb[0].mxu0 %v1851
    %v2324 = vpop.f32.mrb[0].mxu0
    %v2325 = vadd.f32 %v1914, %v2324
    %v2326 = vpop.f32.mrb[0].mxu0
    %2327 = vmatprep.mubr.f32.mxu0 %v2010
    %2328 = vmatmul.mubr.f32.gmra.mrb[0].mxu0 %v1852
    %v2329 = vpop.f32.mrb[0].mxu0
    %v2330 = vadd.f32 %v1914, %v2329
    %v2331 = vpop.f32.mrb[0].mxu0
    %2332 = vmatprep.mubr.f32.mxu0 %v2013
    %2333 = vmatmul.mubr.f32.gmra.mrb[0].mxu0 %v1853
    %v2334 = vpop.f32.mrb[0].mxu0
    %v2335 = vadd.f32 %v1914, %v2334
    %v2336 = vpop.f32.mrb[0].mxu0
    %2337 = vmatprep.mubr.f32.mxu0 %v2016
    %2338 = vmatmul.mubr.f32.gmra.mrb[0].mxu0 %v1854
    %v2339 = vpop.f32.mrb[0].mxu0
    %v2340 = vadd.f32 %v1914, %v2339
    %v2341 = vpop.f32.mrb[0].mxu0
    %2342 = vmatprep.mubr.f32.mxu0 %v2019
    %2343 = vmatmul.mubr.f32.gmra.mrb[0].mxu0 %v1855
    %v2344 = vpop.f32.mrb[0].mxu0
    %v2345 = vadd.f32 %v1914, %v2344
    %v2346 = vpop.f32.mrb[0].mxu0
    %2347 = vmatprep.mubr.f32.mxu0 %v2022
    %2348 = vmatmul.mubr.f32.gmra.mrb[0].mxu0 %v1856
    %v2349 = vpop.f32.mrb[0].mxu0
    %v2350 = vadd.f32 %v1914, %v2349
    %v2351 = vpop.f32.mrb[0].mxu0
    %2352 = vmatprep.mubr.f32.mxu0 %v2025
    %2353 = vmatmul.mubr.f32.gmra.mrb[0].mxu0 %v1857
    %v2354 = vpop.f32.mrb[0].mxu0
    %v2355 = vadd.f32 %v1914, %v2354
    %v2356 = vpop.f32.mrb[0].mxu0
    %2357 = vmatprep.mubr.f32.mxu0 %v2028
    %2358 = vmatmul.mubr.f32.gmra.mrb[0].mxu0 %v1858
    %v2359 = vpop.f32.mrb[0].mxu0
    %v2360 = vadd.f32 %v1914, %v2359
    %v2361 = vpop.f32.mrb[0].mxu0
    %2362 = vmatprep.mubr.f32.mxu0 %v2031
    %2363 = vmatmul.mubr.f32.gmra.mrb[0].mxu0 %v1859
    %v2364 = vpop.f32.mrb[0].mxu0
    %v2365 = vadd.f32 %v1914, %v2364
    %v2366 = vpop.f32.mrb[0].mxu0
    %2367 = vmatprep.mubr.f32.mxu0 %v2034
    %2368 = vmatmul.mubr.f32.gmra.mrb[0].mxu0 %v1860
    %v2369 = vpop.f32.mrb[0].mxu0
    %v2370 = vadd.f32 %v1914, %v2369
    %v2371 = vpop.f32.mrb[0].mxu0
    %2372 = vmatprep.mubr.f32.mxu0 %v2037
    %2373 = vmatmul.mubr.f32.gmra.mrb[0].mxu0 %v1861
    %v2374 = vpop.f32.mrb[0].mxu0
    %v2375 = vadd.f32 %v1914, %v2374
    %v2376 = vpop.f32.mrb[0].mxu0
    %2377 = vmatprep.mubr.f32.mxu0 %v2040
    %2378 = vmatmul.mubr.f32.gmra.mrb[0].mxu0 %v1862
    %v2379 = vpop.f32.mrb[0].mxu0
    %v2380 = vadd.f32 %v1914, %v2379
    %v2381 = vpop.f32.mrb[0].mxu0
    %2382 = vmatprep.mubr.f32.mxu0 %v2043
    %2383 = vmatmul.mubr.f32.gmra.mrb[0].mxu0 %v1863
    %v2384 = vpop.f32.mrb[0].mxu0
    %v2385 = vadd.f32 %v1914, %v2384
    %v2386 = vpop.f32.mrb[0].mxu0
    %2387 = vmatprep.mubr.f32.mxu0 %v2046
    %2388 = vmatmul.mubr.f32.gmra.mrb[0].mxu0 %v1864
    %v2389 = vpop.f32.mrb[0].mxu0
    %v2390 = vadd.f32 %v1914, %v2389
    %v2391 = vpop.f32.mrb[0].mxu0
    %2392 = vmatprep.mubr.f32.mxu0 %v2049
    %2393 = vmatmul.mubr.f32.gmra.mrb[0].mxu0 %v1865
    %v2394 = vpop.f32.mrb[0].mxu0
    %v2395 = vadd.f32 %v1914, %v2394
    %v2396 = vpop.f32.mrb[0].mxu0
    %2397 = vmatprep.mubr.f32.mxu0 %v2052
    %2398 = vmatmul.mubr.f32.gmra.mrb[0].mxu0 %v1866
    %v2399 = vpop.f32.mrb[0].mxu0
    %v2400 = vadd.f32 %v1914, %v2399
    %v2401 = vpop.f32.mrb[0].mxu0
    %2402 = vmatprep.mubr.f32.mxu0 %v2055
    %2403 = vmatmul.mubr.f32.gmra.mrb[0].mxu0 %v1867
    %v2404 = vpop.f32.mrb[0].mxu0
    %v2405 = vadd.f32 %v1914, %v2404
    %v2406 = vpop.f32.mrb[0].mxu0
    %2407 = vmatprep.mubr.f32.mxu0 %v2058
    %2408 = vmatmul.mubr.f32.gmra.mrb[0].mxu0 %v1868
    %v2409 = vpop.f32.mrb[0].mxu0
    %v2410 = vadd.f32 %v1914, %v2409
    %v2411 = vpop.f32.mrb[0].mxu0
    %2412 = vmatprep.mubr.f32.mxu0 %v2061
    %2413 = vmatmul.mubr.f32.gmra.mrb[0].mxu0 %v1869
    %v2414 = vpop.f32.mrb[0].mxu0
    %v2415 = vadd.f32 %v1914, %v2414
    %v2416 = vpop.f32.mrb[0].mxu0
    %2417 = vmatprep.mubr.f32.mxu0 %v2064
    %2418 = vmatmul.mubr.f32.gmra.mrb[0].mxu0 %v1870
    %v2419 = vpop.f32.mrb[0].mxu0
    %v2420 = vadd.f32 %v1914, %v2419
    %v2421 = vpop.f32.mrb[0].mxu0
    %2422 = vmatprep.mubr.f32.mxu0 %v2067
    %2423 = vmatmul.mubr.f32.gmra.mrb[0].mxu0 %v1871
    %v2424 = vpop.f32.mrb[0].mxu0
    %v2425 = vadd.f32 %v1914, %v2424
    %v2426 = vpop.f32.mrb[0].mxu0
    %2427 = vmatprep.mubr.f32.mxu0 %v2070
    %2428 = vmatmul.mubr.f32.gmra.mrb[0].mxu0 %v1872
    %v2429 = vpop.f32.mrb[0].mxu0
    %v2430 = vadd.f32 %v1914, %v2429
    %v2431 = vpop.f32.mrb[0].mxu0
    %2432 = vmatprep.mubr.f32.mxu0 %v2073
    %2433 = vmatmul.mubr.f32.gmra.mrb[0].mxu0 %v1873
    %v2434 = vpop.f32.mrb[0].mxu0
    %v2435 = vadd.f32 %v1914, %v2434
    %v2436 = vpop.f32.mrb[0].mxu0
    %2437 = vmatprep.mubr.f32.mxu0 %v2076
    %2438 = vmatmul.mubr.f32.gmra.mrb[0].mxu0 %v1874
    %v2439 = vpop.f32.mrb[0].mxu0
    %v2440 = vadd.f32 %v1914, %v2439
    %v2441 = vpop.f32.mrb[0].mxu0
    %2442 = vmatprep.mubr.f32.mxu0 %v2079
    %2443 = vmatmul.mubr.f32.gmra.mrb[0].mxu0 %v1875
    %v2444 = vpop.f32.mrb[0].mxu0
    %v2445 = vadd.f32 %v1914, %v2444
    %v2446 = vpop.f32.mrb[0].mxu0
    %2447 = vmatprep.mubr.f32.mxu0 %v2082
    %2448 = vmatmul.mubr.f32.gmra.mrb[0].mxu0 %v1876
    %v2449 = vpop.f32.mrb[0].mxu0
    %v2450 = vadd.f32 %v1914, %v2449
    %v2451 = vpop.f32.mrb[0].mxu0
    %2452 = vmatprep.mubr.f32.mxu0 %v2085
    %2453 = vmatmul.mubr.f32.gmra.mrb[0].mxu0 %v1877
    %v2454 = vpop.f32.mrb[0].mxu0
    %v2455 = vadd.f32 %v1914, %v2454
    %v2456 = vpop.f32.mrb[0].mxu0
    %2457 = vmatprep.mubr.f32.mxu0 %v2088
    %2458 = vmatmul.mubr.f32.gmra.mrb[0].mxu0 %v1878
    %v2459 = vpop.f32.mrb[0].mxu0
    %v2460 = vadd.f32 %v1914, %v2459
    %v2461 = vpop.f32.mrb[0].mxu0
    %2462 = vmatprep.mubr.f32.mxu0 %v2091
    %2463 = vmatmul.mubr.f32.gmra.mrb[0].mxu0 %v1879
    %v2464 = vpop.f32.mrb[0].mxu0
    %v2465 = vadd.f32 %v1914, %v2464
    %v2466 = vpop.f32.mrb[0].mxu0
    %2467 = vmatprep.mubr.f32.mxu0 %v2094
    %2468 = vmatmul.mubr.f32.gmra.mrb[0].mxu0 %v1880
    %v2469 = vpop.f32.mrb[0].mxu0
    %v2470 = vadd.f32 %v1914, %v2469
    %v2471 = vpop.f32.mrb[0].mxu0
    %2472 = vmatprep.mubr.f32.mxu0 %v2097
    %2473 = vmatmul.mubr.f32.gmra.mrb[0].mxu0 %v1881
    %v2474 = vpop.f32.mrb[0].mxu0
    %v2475 = vadd.f32 %v1914, %v2474
    %v2476 = vpop.f32.mrb[0].mxu0
    %2477 = vmatprep.mubr.f32.mxu0 %v2100
    %2478 = vmatmul.mubr.f32.gmra.mrb[0].mxu0 %v1882
    %v2479 = vpop.f32.mrb[0].mxu0
    %v2480 = vadd.f32 %v1914, %v2479
    %v2481 = vpop.f32.mrb[0].mxu0
    %2482 = vmatprep.mubr.f32.mxu0 %v2103
    %2483 = vmatmul.mubr.f32.gmra.mrb[0].mxu0 %v1883
    %v2484 = vpop.f32.mrb[0].mxu0
    %v2485 = vadd.f32 %v1914, %v2484
    %v2486 = vpop.f32.mrb[0].mxu0
    %2487 = vmatprep.mubr.f32.mxu0 %v2106
    %2488 = vmatmul.mubr.f32.gmra.mrb[0].mxu0 %v1884
    %v2489 = vpop.f32.mrb[0].mxu0
    %v2490 = vadd.f32 %v1914, %v2489
    %v2491 = vpop.f32.mrb[0].mxu0
    %2492 = vdwg.mxu0
    %v2493 = vld [vmem:[%s7] sm:$0x1]
    %v2495 = vlaneseq
    %v2496 = vshrl.u32 %v2495, 7
    %v2497 = vsub.s32 0, %v2496
    %v2498 = vrot.slane %v2493, %v2497
    %v2500 = vmul.f32 %v2175, %v2498
    %v2501 = vmul.f32 %v2180, %v2498
    %v2502 = vmul.f32 %v2185, %v2498
    %v2503 = vmul.f32 %v2190, %v2498
    %v2504 = vmul.f32 %v2195, %v2498
    %v2505 = vmul.f32 %v2200, %v2498
    %v2506 = vmul.f32 %v2205, %v2498
    %v2507 = vmul.f32 %v2210, %v2498
    %v2508 = vmul.f32 %v2215, %v2498
    %v2509 = vmul.f32 %v2220, %v2498
    %v2510 = vmul.f32 %v2225, %v2498
    %v2511 = vmul.f32 %v2230, %v2498
    %v2512 = vmul.f32 %v2235, %v2498
    %v2513 = vmul.f32 %v2240, %v2498
    %v2514 = vmul.f32 %v2245, %v2498
    %v2515 = vmul.f32 %v2250, %v2498
    %v2516 = vmul.f32 %v2255, %v2498
    %v2517 = vmul.f32 %v2260, %v2498
    %v2518 = vmul.f32 %v2265, %v2498
    %v2519 = vmul.f32 %v2270, %v2498
    %v2520 = vmul.f32 %v2275, %v2498
    %v2521 = vmul.f32 %v2280, %v2498
    %v2522 = vmul.f32 %v2285, %v2498
    %v2523 = vmul.f32 %v2290, %v2498
    %v2524 = vmul.f32 %v2295, %v2498
    %v2525 = vmul.f32 %v2300, %v2498
    %v2526 = vmul.f32 %v2305, %v2498
    %v2527 = vmul.f32 %v2310, %v2498
    %v2528 = vmul.f32 %v2315, %v2498
    %v2529 = vmul.f32 %v2320, %v2498
    %v2530 = vmul.f32 %v2325, %v2498
    %v2531 = vmul.f32 %v2330, %v2498
    %v2532 = vmul.f32 %v2335, %v2498
    %v2533 = vmul.f32 %v2340, %v2498
    %v2534 = vmul.f32 %v2345, %v2498
    %v2535 = vmul.f32 %v2350, %v2498
    %v2536 = vmul.f32 %v2355, %v2498
    %v2537 = vmul.f32 %v2360, %v2498
    %v2538 = vmul.f32 %v2365, %v2498
    %v2539 = vmul.f32 %v2370, %v2498
    %v2540 = vmul.f32 %v2375, %v2498
    %v2541 = vmul.f32 %v2380, %v2498
    %v2542 = vmul.f32 %v2385, %v2498
    %v2543 = vmul.f32 %v2390, %v2498
    %v2544 = vmul.f32 %v2395, %v2498
    %v2545 = vmul.f32 %v2400, %v2498
    %v2546 = vmul.f32 %v2405, %v2498
    %v2547 = vmul.f32 %v2410, %v2498
    %v2548 = vmul.f32 %v2415, %v2498
    %v2549 = vmul.f32 %v2420, %v2498
    %v2550 = vmul.f32 %v2425, %v2498
    %v2551 = vmul.f32 %v2430, %v2498
    %v2552 = vmul.f32 %v2435, %v2498
    %v2553 = vmul.f32 %v2440, %v2498
    %v2554 = vmul.f32 %v2445, %v2498
    %v2555 = vmul.f32 %v2450, %v2498
    %v2556 = vmul.f32 %v2455, %v2498
    %v2557 = vmul.f32 %v2460, %v2498
    %v2558 = vmul.f32 %v2465, %v2498
    %v2559 = vmul.f32 %v2470, %v2498
    %v2560 = vmul.f32 %v2475, %v2498
    %v2561 = vmul.f32 %v2480, %v2498
    %v2562 = vmul.f32 %v2485, %v2498
    %v2563 = vmul.f32 %v2490, %v2498
    %v2564 = vld [vmem:[%s8] sm:$0x1]
    %v2566 = vlaneseq
    %v2567 = vshrl.u32 %v2566, 7
    %v2568 = vsub.s32 0, %v2567
    %v2569 = vrot.slane %v2564, %v2568
    %v2571 = vadd.f32 %v2500, %v2569
    %v2572 = vadd.f32 %v2501, %v2569
    %v2573 = vadd.f32 %v2502, %v2569
    %v2574 = vadd.f32 %v2503, %v2569
    %v2575 = vadd.f32 %v2504, %v2569
    %v2576 = vadd.f32 %v2505, %v2569
    %v2577 = vadd.f32 %v2506, %v2569
    %v2578 = vadd.f32 %v2507, %v2569
    %v2579 = vadd.f32 %v2508, %v2569
    %v2580 = vadd.f32 %v2509, %v2569
    %v2581 = vadd.f32 %v2510, %v2569
    %v2582 = vadd.f32 %v2511, %v2569
    %v2583 = vadd.f32 %v2512, %v2569
    %v2584 = vadd.f32 %v2513, %v2569
    %v2585 = vadd.f32 %v2514, %v2569
    %v2586 = vadd.f32 %v2515, %v2569
    %v2587 = vadd.f32 %v2516, %v2569
    %v2588 = vadd.f32 %v2517, %v2569
    %v2589 = vadd.f32 %v2518, %v2569
    %v2590 = vadd.f32 %v2519, %v2569
    %v2591 = vadd.f32 %v2520, %v2569
    %v2592 = vadd.f32 %v2521, %v2569
    %v2593 = vadd.f32 %v2522, %v2569
    %v2594 = vadd.f32 %v2523, %v2569
    %v2595 = vadd.f32 %v2524, %v2569
    %v2596 = vadd.f32 %v2525, %v2569
    %v2597 = vadd.f32 %v2526, %v2569
    %v2598 = vadd.f32 %v2527, %v2569
    %v2599 = vadd.f32 %v2528, %v2569
    %v2600 = vadd.f32 %v2529, %v2569
    %v2601 = vadd.f32 %v2530, %v2569
    %v2602 = vadd.f32 %v2531, %v2569
    %v2603 = vadd.f32 %v2532, %v2569
    %v2604 = vadd.f32 %v2533, %v2569
    %v2605 = vadd.f32 %v2534, %v2569
    %v2606 = vadd.f32 %v2535, %v2569
    %v2607 = vadd.f32 %v2536, %v2569
    %v2608 = vadd.f32 %v2537, %v2569
    %v2609 = vadd.f32 %v2538, %v2569
    %v2610 = vadd.f32 %v2539, %v2569
    %v2611 = vadd.f32 %v2540, %v2569
    %v2612 = vadd.f32 %v2541, %v2569
    %v2613 = vadd.f32 %v2542, %v2569
    %v2614 = vadd.f32 %v2543, %v2569
    %v2615 = vadd.f32 %v2544, %v2569
    %v2616 = vadd.f32 %v2545, %v2569
    %v2617 = vadd.f32 %v2546, %v2569
    %v2618 = vadd.f32 %v2547, %v2569
    %v2619 = vadd.f32 %v2548, %v2569
    %v2620 = vadd.f32 %v2549, %v2569
    %v2621 = vadd.f32 %v2550, %v2569
    %v2622 = vadd.f32 %v2551, %v2569
    %v2623 = vadd.f32 %v2552, %v2569
    %v2624 = vadd.f32 %v2553, %v2569
    %v2625 = vadd.f32 %v2554, %v2569
    %v2626 = vadd.f32 %v2555, %v2569
    %v2627 = vadd.f32 %v2556, %v2569
    %v2628 = vadd.f32 %v2557, %v2569
    %v2629 = vadd.f32 %v2558, %v2569
    %v2630 = vadd.f32 %v2559, %v2569
    %v2631 = vadd.f32 %v2560, %v2569
    %v2632 = vadd.f32 %v2561, %v2569
    %v2633 = vadd.f32 %v2562, %v2569
    %v2634 = vadd.f32 %v2563, %v2569
    %v2635 = vmax.f32 %v2571, 0.0
    %v2636 = vmax.f32 %v2572, 0.0
    %v2637 = vmax.f32 %v2573, 0.0
    %v2638 = vmax.f32 %v2574, 0.0
    %v2639 = vmax.f32 %v2575, 0.0
    %v2640 = vmax.f32 %v2576, 0.0
    %v2641 = vmax.f32 %v2577, 0.0
    %v2642 = vmax.f32 %v2578, 0.0
    %v2643 = vmax.f32 %v2579, 0.0
    %v2644 = vmax.f32 %v2580, 0.0
    %v2645 = vmax.f32 %v2581, 0.0
    %v2646 = vmax.f32 %v2582, 0.0
    %v2647 = vmax.f32 %v2583, 0.0
    %v2648 = vmax.f32 %v2584, 0.0
    %v2649 = vmax.f32 %v2585, 0.0
    %v2650 = vmax.f32 %v2586, 0.0
    %v2651 = vmax.f32 %v2587, 0.0
    %v2652 = vmax.f32 %v2588, 0.0
    %v2653 = vmax.f32 %v2589, 0.0
    %v2654 = vmax.f32 %v2590, 0.0
    %v2655 = vmax.f32 %v2591, 0.0
    %v2656 = vmax.f32 %v2592, 0.0
    %v2657 = vmax.f32 %v2593, 0.0
    %v2658 = vmax.f32 %v2594, 0.0
    %v2659 = vmax.f32 %v2595, 0.0
    %v2660 = vmax.f32 %v2596, 0.0
    %v2661 = vmax.f32 %v2597, 0.0
    %v2662 = vmax.f32 %v2598, 0.0
    %v2663 = vmax.f32 %v2599, 0.0
    %v2664 = vmax.f32 %v2600, 0.0
    %v2665 = vmax.f32 %v2601, 0.0
    %v2666 = vmax.f32 %v2602, 0.0
    %v2667 = vmax.f32 %v2603, 0.0
    %v2668 = vmax.f32 %v2604, 0.0
    %v2669 = vmax.f32 %v2605, 0.0
    %v2670 = vmax.f32 %v2606, 0.0
    %v2671 = vmax.f32 %v2607, 0.0
    %v2672 = vmax.f32 %v2608, 0.0
    %v2673 = vmax.f32 %v2609, 0.0
    %v2674 = vmax.f32 %v2610, 0.0
    %v2675 = vmax.f32 %v2611, 0.0
    %v2676 = vmax.f32 %v2612, 0.0
    %v2677 = vmax.f32 %v2613, 0.0
    %v2678 = vmax.f32 %v2614, 0.0
    %v2679 = vmax.f32 %v2615, 0.0
    %v2680 = vmax.f32 %v2616, 0.0
    %v2681 = vmax.f32 %v2617, 0.0
    %v2682 = vmax.f32 %v2618, 0.0
    %v2683 = vmax.f32 %v2619, 0.0
    %v2684 = vmax.f32 %v2620, 0.0
    %v2685 = vmax.f32 %v2621, 0.0
    %v2686 = vmax.f32 %v2622, 0.0
    %v2687 = vmax.f32 %v2623, 0.0
    %v2688 = vmax.f32 %v2624, 0.0
    %v2689 = vmax.f32 %v2625, 0.0
    %v2690 = vmax.f32 %v2626, 0.0
    %v2691 = vmax.f32 %v2627, 0.0
    %v2692 = vmax.f32 %v2628, 0.0
    %v2693 = vmax.f32 %v2629, 0.0
    %v2694 = vmax.f32 %v2630, 0.0
    %v2695 = vmax.f32 %v2631, 0.0
    %v2696 = vmax.f32 %v2632, 0.0
    %v2697 = vmax.f32 %v2633, 0.0
    %v2698 = vmax.f32 %v2634, 0.0
    %v2699 = vrot.slane %v2635, 4
    %v2700 = vrot.slane %v2636, 4
    %v2701 = vrot.slane %v2637, 4
    %v2702 = vrot.slane %v2638, 4
    %v2703 = vrot.slane %v2639, 4
    %v2704 = vrot.slane %v2640, 4
    %v2705 = vrot.slane %v2641, 4
    %v2706 = vrot.slane %v2642, 4
    %v2707 = vrot.slane %v2643, 4
    %v2708 = vrot.slane %v2644, 4
    %v2709 = vrot.slane %v2645, 4
    %v2710 = vrot.slane %v2646, 4
    %v2711 = vrot.slane %v2647, 4
    %v2712 = vrot.slane %v2648, 4
    %v2713 = vrot.slane %v2649, 4
    %v2714 = vrot.slane %v2650, 4
    %v2715 = vrot.slane %v2651, 4
    %v2716 = vrot.slane %v2652, 4
    %v2717 = vrot.slane %v2653, 4
    %v2718 = vrot.slane %v2654, 4
    %v2719 = vrot.slane %v2655, 4
    %v2720 = vrot.slane %v2656, 4
    %v2721 = vrot.slane %v2657, 4
    %v2722 = vrot.slane %v2658, 4
    %v2723 = vrot.slane %v2659, 4
    %v2724 = vrot.slane %v2660, 4
    %v2725 = vrot.slane %v2661, 4
    %v2726 = vrot.slane %v2662, 4
    %v2727 = vrot.slane %v2663, 4
    %v2728 = vrot.slane %v2664, 4
    %v2729 = vrot.slane %v2665, 4
    %v2730 = vrot.slane %v2666, 4
    %v2731 = vrot.slane %v2667, 4
    %v2732 = vrot.slane %v2668, 4
    %v2733 = vrot.slane %v2669, 4
    %v2734 = vrot.slane %v2670, 4
    %v2735 = vrot.slane %v2671, 4
    %v2736 = vrot.slane %v2672, 4
    %v2737 = vrot.slane %v2673, 4
    %v2738 = vrot.slane %v2674, 4
    %v2739 = vrot.slane %v2675, 4
    %v2740 = vrot.slane %v2676, 4
    %v2741 = vrot.slane %v2677, 4
    %v2742 = vrot.slane %v2678, 4
    %v2743 = vrot.slane %v2679, 4
    %v2744 = vrot.slane %v2680, 4
    %v2745 = vrot.slane %v2681, 4
    %v2746 = vrot.slane %v2682, 4
    %v2747 = vrot.slane %v2683, 4
    %v2748 = vrot.slane %v2684, 4
    %v2749 = vrot.slane %v2685, 4
    %v2750 = vrot.slane %v2686, 4
    %v2751 = vrot.slane %v2687, 4
    %v2752 = vrot.slane %v2688, 4
    %v2753 = vrot.slane %v2689, 4
    %v2754 = vrot.slane %v2690, 4
    %v2755 = vrot.slane %v2691, 4
    %v2756 = vrot.slane %v2692, 4
    %v2757 = vrot.slane %v2693, 4
    %v2758 = vrot.slane %v2694, 4
    %v2759 = vrot.slane %v2695, 4
    %v2760 = vrot.slane %v2696, 4
    %v2761 = vrot.slane %v2697, 4
    %v2762 = vrot.slane %v2698, 4
    %v2763 = vsel %vm1180, %v2761, %v2762
    %v2764 = vsel %vm1180, %v2760, %v2761
    %v2765 = vsel %vm1180, %v2759, %v2760
    %v2766 = vsel %vm1180, %v2758, %v2759
    %v2767 = vsel %vm1180, %v2757, %v2758
    %v2768 = vsel %vm1180, %v2756, %v2757
    %v2769 = vsel %vm1180, %v2755, %v2756
    %v2770 = vsel %vm1180, %v2754, %v2755
    %v2771 = vsel %vm1180, %v2753, %v2754
    %v2772 = vsel %vm1180, %v2752, %v2753
    %v2773 = vsel %vm1180, %v2751, %v2752
    %v2774 = vsel %vm1180, %v2750, %v2751
    %v2775 = vsel %vm1180, %v2749, %v2750
    %v2776 = vsel %vm1180, %v2748, %v2749
    %v2777 = vsel %vm1180, %v2747, %v2748
    %v2778 = vsel %vm1180, %v2746, %v2747
    %v2779 = vsel %vm1180, %v2745, %v2746
    %v2780 = vsel %vm1180, %v2744, %v2745
    %v2781 = vsel %vm1180, %v2743, %v2744
    %v2782 = vsel %vm1180, %v2742, %v2743
    %v2783 = vsel %vm1180, %v2741, %v2742
    %v2784 = vsel %vm1180, %v2740, %v2741
    %v2785 = vsel %vm1180, %v2739, %v2740
    %v2786 = vsel %vm1180, %v2738, %v2739
    %v2787 = vsel %vm1180, %v2737, %v2738
    %v2788 = vsel %vm1180, %v2736, %v2737
    %v2789 = vsel %vm1180, %v2735, %v2736
    %v2790 = vsel %vm1180, %v2734, %v2735
    %v2791 = vsel %vm1180, %v2733, %v2734
    %v2792 = vsel %vm1180, %v2732, %v2733
    %v2793 = vsel %vm1180, %v2731, %v2732
    %v2794 = vsel %vm1180, %v2730, %v2731
    %v2795 = vsel %vm1180, %v2729, %v2730
    %v2796 = vsel %vm1180, %v2728, %v2729
    %v2797 = vsel %vm1180, %v2727, %v2728
    %v2798 = vsel %vm1180, %v2726, %v2727
    %v2799 = vsel %vm1180, %v2725, %v2726
    %v2800 = vsel %vm1180, %v2724, %v2725
    %v2801 = vsel %vm1180, %v2723, %v2724
    %v2802 = vsel %vm1180, %v2722, %v2723
    %v2803 = vsel %vm1180, %v2721, %v2722
    %v2804 = vsel %vm1180, %v2720, %v2721
    %v2805 = vsel %vm1180, %v2719, %v2720
    %v2806 = vsel %vm1180, %v2718, %v2719
    %v2807 = vsel %vm1180, %v2717, %v2718
    %v2808 = vsel %vm1180, %v2716, %v2717
    %v2809 = vsel %vm1180, %v2715, %v2716
    %v2810 = vsel %vm1180, %v2714, %v2715
    %v2811 = vsel %vm1180, %v2713, %v2714
    %v2812 = vsel %vm1180, %v2712, %v2713
    %v2813 = vsel %vm1180, %v2711, %v2712
    %v2814 = vsel %vm1180, %v2710, %v2711
    %v2815 = vsel %vm1180, %v2709, %v2710
    %v2816 = vsel %vm1180, %v2708, %v2709
    %v2817 = vsel %vm1180, %v2707, %v2708
    %v2818 = vsel %vm1180, %v2706, %v2707
    %v2819 = vsel %vm1180, %v2705, %v2706
    %v2820 = vsel %vm1180, %v2704, %v2705
    %v2821 = vsel %vm1180, %v2703, %v2704
    %v2822 = vsel %vm1180, %v2702, %v2703
    %v2823 = vsel %vm1180, %v2701, %v2702
    %v2824 = vsel %vm1180, %v2700, %v2701
    %v2825 = vsel %vm1180, %v2699, %v2700
    %v2826 = vsel %vm1180, %v2762, %v2699
    %v2827 = vmax.f32 %v2635, %v2825
    %v2828 = vmax.f32 %v2636, %v2824
    %v2829 = vmax.f32 %v2637, %v2823
    %v2830 = vmax.f32 %v2638, %v2822
    %v2831 = vmax.f32 %v2639, %v2821
    %v2832 = vmax.f32 %v2640, %v2820
    %v2833 = vmax.f32 %v2641, %v2819
    %v2834 = vmax.f32 %v2642, %v2818
    %v2835 = vmax.f32 %v2643, %v2817
    %v2836 = vmax.f32 %v2644, %v2816
    %v2837 = vmax.f32 %v2645, %v2815
    %v2838 = vmax.f32 %v2646, %v2814
    %v2839 = vmax.f32 %v2647, %v2813
    %v2840 = vmax.f32 %v2648, %v2812
    %v2841 = vmax.f32 %v2649, %v2811
    %v2842 = vmax.f32 %v2650, %v2810
    %v2843 = vmax.f32 %v2651, %v2809
    %v2844 = vmax.f32 %v2652, %v2808
    %v2845 = vmax.f32 %v2653, %v2807
    %v2846 = vmax.f32 %v2654, %v2806
    %v2847 = vmax.f32 %v2655, %v2805
    %v2848 = vmax.f32 %v2656, %v2804
    %v2849 = vmax.f32 %v2657, %v2803
    %v2850 = vmax.f32 %v2658, %v2802
    %v2851 = vmax.f32 %v2659, %v2801
    %v2852 = vmax.f32 %v2660, %v2800
    %v2853 = vmax.f32 %v2661, %v2799
    %v2854 = vmax.f32 %v2662, %v2798
    %v2855 = vmax.f32 %v2663, %v2797
    %v2856 = vmax.f32 %v2664, %v2796
    %v2857 = vmax.f32 %v2665, %v2795
    %v2858 = vmax.f32 %v2666, %v2794
    %v2859 = vmax.f32 %v2667, %v2793
    %v2860 = vmax.f32 %v2668, %v2792
    %v2861 = vmax.f32 %v2669, %v2791
    %v2862 = vmax.f32 %v2670, %v2790
    %v2863 = vmax.f32 %v2671, %v2789
    %v2864 = vmax.f32 %v2672, %v2788
    %v2865 = vmax.f32 %v2673, %v2787
    %v2866 = vmax.f32 %v2674, %v2786
    %v2867 = vmax.f32 %v2675, %v2785
    %v2868 = vmax.f32 %v2676, %v2784
    %v2869 = vmax.f32 %v2677, %v2783
    %v2870 = vmax.f32 %v2678, %v2782
    %v2871 = vmax.f32 %v2679, %v2781
    %v2872 = vmax.f32 %v2680, %v2780
    %v2873 = vmax.f32 %v2681, %v2779
    %v2874 = vmax.f32 %v2682, %v2778
    %v2875 = vmax.f32 %v2683, %v2777
    %v2876 = vmax.f32 %v2684, %v2776
    %v2877 = vmax.f32 %v2685, %v2775
    %v2878 = vmax.f32 %v2686, %v2774
    %v2879 = vmax.f32 %v2687, %v2773
    %v2880 = vmax.f32 %v2688, %v2772
    %v2881 = vmax.f32 %v2689, %v2771
    %v2882 = vmax.f32 %v2690, %v2770
    %v2883 = vmax.f32 %v2691, %v2769
    %v2884 = vmax.f32 %v2692, %v2768
    %v2885 = vmax.f32 %v2693, %v2767
    %v2886 = vmax.f32 %v2694, %v2766
    %v2887 = vmax.f32 %v2695, %v2765
    %v2888 = vmax.f32 %v2696, %v2764
    %v2889 = vmax.f32 %v2697, %v2763
    %v2890 = vmax.f32 %v2698, %v2826
    %v2891 = vpack.c.bf16 %v2827, %v2827
    %v2892 = vpack.c.bf16 %v2828, %v2828
    %v2893 = vpack.c.bf16 %v2829, %v2829
    %v2894 = vpack.c.bf16 %v2830, %v2830
    %v2895 = vpack.c.bf16 %v2831, %v2831
    %v2896 = vpack.c.bf16 %v2832, %v2832
    %v2897 = vpack.c.bf16 %v2833, %v2833
    %v2898 = vpack.c.bf16 %v2834, %v2834
    %v2899 = vpack.c.bf16 %v2835, %v2835
    %v2900 = vpack.c.bf16 %v2836, %v2836
    %v2901 = vpack.c.bf16 %v2837, %v2837
    %v2902 = vpack.c.bf16 %v2838, %v2838
    %v2903 = vpack.c.bf16 %v2839, %v2839
    %v2904 = vpack.c.bf16 %v2840, %v2840
    %v2905 = vpack.c.bf16 %v2841, %v2841
    %v2906 = vpack.c.bf16 %v2842, %v2842
    %v2907 = vpack.c.bf16 %v2843, %v2843
    %v2908 = vpack.c.bf16 %v2844, %v2844
    %v2909 = vpack.c.bf16 %v2845, %v2845
    %v2910 = vpack.c.bf16 %v2846, %v2846
    %v2911 = vpack.c.bf16 %v2847, %v2847
    %v2912 = vpack.c.bf16 %v2848, %v2848
    %v2913 = vpack.c.bf16 %v2849, %v2849
    %v2914 = vpack.c.bf16 %v2850, %v2850
    %v2915 = vpack.c.bf16 %v2851, %v2851
    %v2916 = vpack.c.bf16 %v2852, %v2852
    %v2917 = vpack.c.bf16 %v2853, %v2853
    %v2918 = vpack.c.bf16 %v2854, %v2854
    %v2919 = vpack.c.bf16 %v2855, %v2855
    %v2920 = vpack.c.bf16 %v2856, %v2856
    %v2921 = vpack.c.bf16 %v2857, %v2857
    %v2922 = vpack.c.bf16 %v2858, %v2858
    %v2923 = vpack.c.bf16 %v2859, %v2859
    %v2924 = vpack.c.bf16 %v2860, %v2860
    %v2925 = vpack.c.bf16 %v2861, %v2861
    %v2926 = vpack.c.bf16 %v2862, %v2862
    %v2927 = vpack.c.bf16 %v2863, %v2863
    %v2928 = vpack.c.bf16 %v2864, %v2864
    %v2929 = vpack.c.bf16 %v2865, %v2865
    %v2930 = vpack.c.bf16 %v2866, %v2866
    %v2931 = vpack.c.bf16 %v2867, %v2867
    %v2932 = vpack.c.bf16 %v2868, %v2868
    %v2933 = vpack.c.bf16 %v2869, %v2869
    %v2934 = vpack.c.bf16 %v2870, %v2870
    %v2935 = vpack.c.bf16 %v2871, %v2871
    %v2936 = vpack.c.bf16 %v2872, %v2872
    %v2937 = vpack.c.bf16 %v2873, %v2873
    %v2938 = vpack.c.bf16 %v2874, %v2874
    %v2939 = vpack.c.bf16 %v2875, %v2875
    %v2940 = vpack.c.bf16 %v2876, %v2876
    %v2941 = vpack.c.bf16 %v2877, %v2877
    %v2942 = vpack.c.bf16 %v2878, %v2878
    %v2943 = vpack.c.bf16 %v2879, %v2879
    %v2944 = vpack.c.bf16 %v2880, %v2880
    %v2945 = vpack.c.bf16 %v2881, %v2881
    %v2946 = vpack.c.bf16 %v2882, %v2882
    %v2947 = vpack.c.bf16 %v2883, %v2883
    %v2948 = vpack.c.bf16 %v2884, %v2884
    %v2949 = vpack.c.bf16 %v2885, %v2885
    %v2950 = vpack.c.bf16 %v2886, %v2886
    %v2951 = vpack.c.bf16 %v2887, %v2887
    %v2952 = vpack.c.bf16 %v2888, %v2888
    %v2953 = vpack.c.bf16 %v2889, %v2889
    %v2954 = vpack.c.bf16 %v2890, %v2890
    %s2955 = smul.u32 4, 64
    %s2956 = smul.u32 %s2955, 4
    %s2957 = smul.u32 %s2956, 1
    %s2958 = sshll.u32 %s2957, 4
    %2959 = dma.done [#allocation3], %s2958
    %v2960 = vld [vmem:[#allocation2] sm:$0xff]
    %v2961 = vld [vmem:[#allocation2 + $0x8] sm:$0xff]
    %v2962 = vld [vmem:[#allocation2 + $0x10] sm:$0xff]
    %v2963 = vld [vmem:[#allocation2 + $0x18] sm:$0xff]
    %v2964 = vld [vmem:[#allocation2 + $0x20] sm:$0xff]
    %v2965 = vld [vmem:[#allocation2 + $0x28] sm:$0xff]
    %v2966 = vld [vmem:[#allocation2 + $0x30] sm:$0xff]
    %v2967 = vld [vmem:[#allocation2 + $0x38] sm:$0xff]
    %v2968 = vld [vmem:[#allocation2 + $0x40] sm:$0xff]
    %v2969 = vld [vmem:[#allocation2 + $0x48] sm:$0xff]
    %v2970 = vld [vmem:[#allocation2 + $0x50] sm:$0xff]
    %v2971 = vld [vmem:[#allocation2 + $0x58] sm:$0xff]
    %v2972 = vld [vmem:[#allocation2 + $0x60] sm:$0xff]
    %v2973 = vld [vmem:[#allocation2 + $0x68] sm:$0xff]
    %v2974 = vld [vmem:[#allocation2 + $0x70] sm:$0xff]
    %v2975 = vld [vmem:[#allocation2 + $0x78] sm:$0xff]
    %v2976 = vld [vmem:[#allocation2 + $0x80] sm:$0xff]
    %v2977 = vld [vmem:[#allocation2 + $0x88] sm:$0xff]
    %v2978 = vld [vmem:[#allocation2 + $0x90] sm:$0xff]
    %v2979 = vld [vmem:[#allocation2 + $0x98] sm:$0xff]
    %v2980 = vld [vmem:[#allocation2 + $0xa0] sm:$0xff]
    %v2981 = vld [vmem:[#allocation2 + $0xa8] sm:$0xff]
    %v2982 = vld [vmem:[#allocation2 + $0xb0] sm:$0xff]
    %v2983 = vld [vmem:[#allocation2 + $0xb8] sm:$0xff]
    %v2984 = vld [vmem:[#allocation2 + $0xc0] sm:$0xff]
    %v2985 = vld [vmem:[#allocation2 + $0xc8] sm:$0xff]
    %v2986 = vld [vmem:[#allocation2 + $0xd0] sm:$0xff]
    %v2987 = vld [vmem:[#allocation2 + $0xd8] sm:$0xff]
    %v2988 = vld [vmem:[#allocation2 + $0xe0] sm:$0xff]
    %v2989 = vld [vmem:[#allocation2 + $0xe8] sm:$0xff]
    %v2990 = vld [vmem:[#allocation2 + $0xf0] sm:$0xff]
    %v2991 = vld [vmem:[#allocation2 + $0xf8] sm:$0xff]
    %v2992 = vld [vmem:[#allocation2 + $0x100] sm:$0xff]
    %v2993 = vld [vmem:[#allocation2 + $0x108] sm:$0xff]
    %v2994 = vld [vmem:[#allocation2 + $0x110] sm:$0xff]
    %v2995 = vld [vmem:[#allocation2 + $0x118] sm:$0xff]
    %v2996 = vld [vmem:[#allocation2 + $0x120] sm:$0xff]
    %v2997 = vld [vmem:[#allocation2 + $0x128] sm:$0xff]
    %v2998 = vld [vmem:[#allocation2 + $0x130] sm:$0xff]
    %v2999 = vld [vmem:[#allocation2 + $0x138] sm:$0xff]
    %v3000 = vld [vmem:[#allocation2 + $0x140] sm:$0xff]
    %v3001 = vld [vmem:[#allocation2 + $0x148] sm:$0xff]
    %v3002 = vld [vmem:[#allocation2 + $0x150] sm:$0xff]
    %v3003 = vld [vmem:[#allocation2 + $0x158] sm:$0xff]
    %v3004 = vld [vmem:[#allocation2 + $0x160] sm:$0xff]
    %v3005 = vld [vmem:[#allocation2 + $0x168] sm:$0xff]
    %v3006 = vld [vmem:[#allocation2 + $0x170] sm:$0xff]
    %v3007 = vld [vmem:[#allocation2 + $0x178] sm:$0xff]
    %v3008 = vld [vmem:[#allocation2 + $0x180] sm:$0xff]
    %v3009 = vld [vmem:[#allocation2 + $0x188] sm:$0xff]
    %v3010 = vld [vmem:[#allocation2 + $0x190] sm:$0xff]
    %v3011 = vld [vmem:[#allocation2 + $0x198] sm:$0xff]
    %v3012 = vld [vmem:[#allocation2 + $0x1a0] sm:$0xff]
    %v3013 = vld [vmem:[#allocation2 + $0x1a8] sm:$0xff]
    %v3014 = vld [vmem:[#allocation2 + $0x1b0] sm:$0xff]
    %v3015 = vld [vmem:[#allocation2 + $0x1b8] sm:$0xff]
    %v3016 = vld [vmem:[#allocation2 + $0x1c0] sm:$0xff]
    %v3017 = vld [vmem:[#allocation2 + $0x1c8] sm:$0xff]
    %v3018 = vld [vmem:[#allocation2 + $0x1d0] sm:$0xff]
    %v3019 = vld [vmem:[#allocation2 + $0x1d8] sm:$0xff]
    %v3020 = vld [vmem:[#allocation2 + $0x1e0] sm:$0xff]
    %v3021 = vld [vmem:[#allocation2 + $0x1e8] sm:$0xff]
    %v3022 = vld [vmem:[#allocation2 + $0x1f0] sm:$0xff]
    %v3023 = vld [vmem:[#allocation2 + $0x1f8] sm:$0xff]
    %v3024 = vld [vmem:[#allocation2 + $0x200] sm:$0xff]
    %v3025 = vld [vmem:[#allocation2 + $0x208] sm:$0xff]
    %v3026 = vld [vmem:[#allocation2 + $0x210] sm:$0xff]
    %v3027 = vld [vmem:[#allocation2 + $0x218] sm:$0xff]
    %v3028 = vld [vmem:[#allocation2 + $0x220] sm:$0xff]
    %v3029 = vld [vmem:[#allocation2 + $0x228] sm:$0xff]
    %v3030 = vld [vmem:[#allocation2 + $0x230] sm:$0xff]
    %v3031 = vld [vmem:[#allocation2 + $0x238] sm:$0xff]
    %v3032 = vld [vmem:[#allocation2 + $0x240] sm:$0xff]
    %v3033 = vld [vmem:[#allocation2 + $0x248] sm:$0xff]
    %v3034 = vld [vmem:[#allocation2 + $0x250] sm:$0xff]
    %v3035 = vld [vmem:[#allocation2 + $0x258] sm:$0xff]
    %v3036 = vld [vmem:[#allocation2 + $0x260] sm:$0xff]
    %v3037 = vld [vmem:[#allocation2 + $0x268] sm:$0xff]
    %v3038 = vld [vmem:[#allocation2 + $0x270] sm:$0xff]
    %v3039 = vld [vmem:[#allocation2 + $0x278] sm:$0xff]
    %v3040 = vld [vmem:[#allocation2 + $0x280] sm:$0xff]
    %v3041 = vld [vmem:[#allocation2 + $0x288] sm:$0xff]
    %v3042 = vld [vmem:[#allocation2 + $0x290] sm:$0xff]
    %v3043 = vld [vmem:[#allocation2 + $0x298] sm:$0xff]
    %v3044 = vld [vmem:[#allocation2 + $0x2a0] sm:$0xff]
    %v3045 = vld [vmem:[#allocation2 + $0x2a8] sm:$0xff]
    %v3046 = vld [vmem:[#allocation2 + $0x2b0] sm:$0xff]
    %v3047 = vld [vmem:[#allocation2 + $0x2b8] sm:$0xff]
    %v3048 = vld [vmem:[#allocation2 + $0x2c0] sm:$0xff]
    %v3049 = vld [vmem:[#allocation2 + $0x2c8] sm:$0xff]
    %v3050 = vld [vmem:[#allocation2 + $0x2d0] sm:$0xff]
    %v3051 = vld [vmem:[#allocation2 + $0x2d8] sm:$0xff]
    %v3052 = vld [vmem:[#allocation2 + $0x2e0] sm:$0xff]
    %v3053 = vld [vmem:[#allocation2 + $0x2e8] sm:$0xff]
    %v3054 = vld [vmem:[#allocation2 + $0x2f0] sm:$0xff]
    %v3055 = vld [vmem:[#allocation2 + $0x2f8] sm:$0xff]
    %v3056 = vld [vmem:[#allocation2 + $0x300] sm:$0xff]
    %v3057 = vld [vmem:[#allocation2 + $0x308] sm:$0xff]
    %v3058 = vld [vmem:[#allocation2 + $0x310] sm:$0xff]
    %v3059 = vld [vmem:[#allocation2 + $0x318] sm:$0xff]
    %v3060 = vld [vmem:[#allocation2 + $0x320] sm:$0xff]
    %v3061 = vld [vmem:[#allocation2 + $0x328] sm:$0xff]
    %v3062 = vld [vmem:[#allocation2 + $0x330] sm:$0xff]
    %v3063 = vld [vmem:[#allocation2 + $0x338] sm:$0xff]
    %v3064 = vld [vmem:[#allocation2 + $0x340] sm:$0xff]
    %v3065 = vld [vmem:[#allocation2 + $0x348] sm:$0xff]
    %v3066 = vld [vmem:[#allocation2 + $0x350] sm:$0xff]
    %v3067 = vld [vmem:[#allocation2 + $0x358] sm:$0xff]
    %v3068 = vld [vmem:[#allocation2 + $0x360] sm:$0xff]
    %v3069 = vld [vmem:[#allocation2 + $0x368] sm:$0xff]
    %v3070 = vld [vmem:[#allocation2 + $0x370] sm:$0xff]
    %v3071 = vld [vmem:[#allocation2 + $0x378] sm:$0xff]
    %v3072 = vld [vmem:[#allocation2 + $0x380] sm:$0xff]
    %v3073 = vld [vmem:[#allocation2 + $0x388] sm:$0xff]
    %v3074 = vld [vmem:[#allocation2 + $0x390] sm:$0xff]
    %v3075 = vld [vmem:[#allocation2 + $0x398] sm:$0xff]
    %v3076 = vld [vmem:[#allocation2 + $0x3a0] sm:$0xff]
    %v3077 = vld [vmem:[#allocation2 + $0x3a8] sm:$0xff]
    %v3078 = vld [vmem:[#allocation2 + $0x3b0] sm:$0xff]
    %v3079 = vld [vmem:[#allocation2 + $0x3b8] sm:$0xff]
    %v3080 = vld [vmem:[#allocation2 + $0x3c0] sm:$0xff]
    %v3081 = vld [vmem:[#allocation2 + $0x3c8] sm:$0xff]
    %v3082 = vld [vmem:[#allocation2 + $0x3d0] sm:$0xff]
    %v3083 = vld [vmem:[#allocation2 + $0x3d8] sm:$0xff]
    %v3084 = vld [vmem:[#allocation2 + $0x3e0] sm:$0xff]
    %v3085 = vld [vmem:[#allocation2 + $0x3e8] sm:$0xff]
    %v3086 = vld [vmem:[#allocation2 + $0x3f0] sm:$0xff]
    %v3087 = vld [vmem:[#allocation2 + $0x3f8] sm:$0xff]
    %3088 = vmatprep.subr.bf16.mxu0 0
    %3089 = vmatpush1.bf16.xpose.msra.mxu0 %v2960
    %3090 = vmatprep.subr.bf16.mxu0 0
    %3091 = vmatpush1.bf16.xpose.msra.mxu0 %v2961
    %3092 = vmatprep.subr.bf16.mxu0 0
    %3093 = vmatpush1.bf16.xpose.msra.mxu0 0
    %3094 = vmatprep.subr.bf16.mxu0 0
    %3095 = vmatpush1.bf16.xpose.msra.mxu0 0
    %3096 = vmatprep.subr.bf16.mxu0 0
    %3097 = vmatpush1.bf16.xpose.msra.mxu0 0
    %3098 = vmatprep.subr.bf16.mxu0 0
    %3099 = vmatpush1.bf16.xpose.msra.mxu0 0
    %3100 = vmatprep.subr.bf16.mxu0 0
    %3101 = vmatpush1.bf16.xpose.msra.mxu0 0
    %3102 = vmatprep.subr.bf16.mxu0 0
    %3103 = vmatpush1.bf16.xpose.msra.mxu0 0
    %3104 = vmatprep.subr.bf16.mxu0 0
    %3105 = vmatpush1.bf16.xpose.msra.mxu0 0
    %3106 = vmatprep.subr.bf16.mxu0 0
    %3107 = vmatpush1.bf16.xpose.msra.mxu0 0
    %3108 = vmatprep.subr.bf16.mxu0 0
    %3109 = vmatpush1.bf16.xpose.msra.mxu0 0
    %3110 = vmatprep.subr.bf16.mxu0 0
    %3111 = vmatpush1.bf16.xpose.msra.mxu0 0
    %3112 = vmatprep.subr.bf16.mxu0 0
    %3113 = vmatpush1.bf16.xpose.msra.mxu0 0
    %3114 = vmatprep.subr.bf16.mxu0 0
    %3115 = vmatpush1.bf16.xpose.msra.mxu0 0
    %3116 = vmatprep.subr.bf16.mxu0 0
    %3117 = vmatpush1.bf16.xpose.msra.mxu0 0
    %3118 = vmatprep.subr.bf16.mxu0 0
    %3119 = vmatpush1.bf16.xpose.msra.mxu0 0
    %3120 = vmatprep.mubr.bf16.mxu0 0
    %3121 = vmatmul.mubr.bf16.gmra.mrb[0].mxu0 %v2891
    %v3122 = vpop.f32.mrb[0].mxu0
    %v3123 = vadd.f32 0.0, %v3122
    %v3124 = vpop.f32.mrb[0].mxu0
    %v3125 = vpop.f32.mrb[0].mxu0
    %v3126 = vpop.f32.mrb[0].mxu0
    %3127 = vdwg.mxu0
    %3128 = vmatprep.subr.bf16.mxu0 0
    %3129 = vmatpush1.bf16.xpose.msra.mxu0 %v2962
    %3130 = vmatprep.subr.bf16.mxu0 0
    %3131 = vmatpush1.bf16.xpose.msra.mxu0 %v2963
    %3132 = vmatprep.subr.bf16.mxu0 0
    %3133 = vmatpush1.bf16.xpose.msra.mxu0 0
    %3134 = vmatprep.subr.bf16.mxu0 0
    %3135 = vmatpush1.bf16.xpose.msra.mxu0 0
    %3136 = vmatprep.subr.bf16.mxu0 0
    %3137 = vmatpush1.bf16.xpose.msra.mxu0 0
    %3138 = vmatprep.subr.bf16.mxu0 0
    %3139 = vmatpush1.bf16.xpose.msra.mxu0 0
    %3140 = vmatprep.subr.bf16.mxu0 0
    %3141 = vmatpush1.bf16.xpose.msra.mxu0 0
    %3142 = vmatprep.subr.bf16.mxu0 0
    %3143 = vmatpush1.bf16.xpose.msra.mxu0 0
    %3144 = vmatprep.subr.bf16.mxu0 0
    %3145 = vmatpush1.bf16.xpose.msra.mxu0 0
    %3146 = vmatprep.subr.bf16.mxu0 0
    %3147 = vmatpush1.bf16.xpose.msra.mxu0 0
    %3148 = vmatprep.subr.bf16.mxu0 0
    %3149 = vmatpush1.bf16.xpose.msra.mxu0 0
    %3150 = vmatprep.subr.bf16.mxu0 0
    %3151 = vmatpush1.bf16.xpose.msra.mxu0 0
    %3152 = vmatprep.subr.bf16.mxu0 0
    %3153 = vmatpush1.bf16.xpose.msra.mxu0 0
    %3154 = vmatprep.subr.bf16.mxu0 0
    %3155 = vmatpush1.bf16.xpose.msra.mxu0 0
    %3156 = vmatprep.subr.bf16.mxu0 0
    %3157 = vmatpush1.bf16.xpose.msra.mxu0 0
    %3158 = vmatprep.subr.bf16.mxu0 0
    %3159 = vmatpush1.bf16.xpose.msra.mxu0 0
    %3160 = vmatprep.mubr.bf16.mxu0 0
    %3161 = vmatmul.mubr.bf16.gmra.mrb[0].mxu0 %v2892
    %v3162 = vpop.f32.mrb[0].mxu0
    %v3163 = vadd.f32 0.0, %v3162
    %v3164 = vpop.f32.mrb[0].mxu0
    %v3165 = vpop.f32.mrb[0].mxu0
    %v3166 = vpop.f32.mrb[0].mxu0
    %3167 = vdwg.mxu0
    %3168 = vmatprep.subr.bf16.mxu0 0
    %3169 = vmatpush1.bf16.xpose.msra.mxu0 %v2964
    %3170 = vmatprep.subr.bf16.mxu0 0
    %3171 = vmatpush1.bf16.xpose.msra.mxu0 %v2965
    %3172 = vmatprep.subr.bf16.mxu0 0
    %3173 = vmatpush1.bf16.xpose.msra.mxu0 0
    %3174 = vmatprep.subr.bf16.mxu0 0
    %3175 = vmatpush1.bf16.xpose.msra.mxu0 0
    %3176 = vmatprep.subr.bf16.mxu0 0
    %3177 = vmatpush1.bf16.xpose.msra.mxu0 0
    %3178 = vmatprep.subr.bf16.mxu0 0
    %3179 = vmatpush1.bf16.xpose.msra.mxu0 0
    %3180 = vmatprep.subr.bf16.mxu0 0
    %3181 = vmatpush1.bf16.xpose.msra.mxu0 0
    %3182 = vmatprep.subr.bf16.mxu0 0
    %3183 = vmatpush1.bf16.xpose.msra.mxu0 0
    %3184 = vmatprep.subr.bf16.mxu0 0
    %3185 = vmatpush1.bf16.xpose.msra.mxu0 0
    %3186 = vmatprep.subr.bf16.mxu0 0
    %3187 = vmatpush1.bf16.xpose.msra.mxu0 0
    %3188 = vmatprep.subr.bf16.mxu0 0
    %3189 = vmatpush1.bf16.xpose.msra.mxu0 0
    %3190 = vmatprep.subr.bf16.mxu0 0
    %3191 = vmatpush1.bf16.xpose.msra.mxu0 0
    %3192 = vmatprep.subr.bf16.mxu0 0
    %3193 = vmatpush1.bf16.xpose.msra.mxu0 0
    %3194 = vmatprep.subr.bf16.mxu0 0
    %3195 = vmatpush1.bf16.xpose.msra.mxu0 0
    %3196 = vmatprep.subr.bf16.mxu0 0
    %3197 = vmatpush1.bf16.xpose.msra.mxu0 0
    %3198 = vmatprep.subr.bf16.mxu0 0
    %3199 = vmatpush1.bf16.xpose.msra.mxu0 0
    %3200 = vmatprep.mubr.bf16.mxu0 0
    %3201 = vmatmul.mubr.bf16.gmra.mrb[0].mxu0 %v2893
    %v3202 = vpop.f32.mrb[0].mxu0
    %v3203 = vadd.f32 0.0, %v3202
    %v3204 = vpop.f32.mrb[0].mxu0
    %v3205 = vpop.f32.mrb[0].mxu0
    %v3206 = vpop.f32.mrb[0].mxu0
    %3207 = vdwg.mxu0
    %3208 = vmatprep.subr.bf16.mxu0 0
    %3209 = vmatpush1.bf16.xpose.msra.mxu0 %v2966
    %3210 = vmatprep.subr.bf16.mxu0 0
    %3211 = vmatpush1.bf16.xpose.msra.mxu0 %v2967
    %3212 = vmatprep.subr.bf16.mxu0 0
    %3213 = vmatpush1.bf16.xpose.msra.mxu0 0
    %3214 = vmatprep.subr.bf16.mxu0 0
    %3215 = vmatpush1.bf16.xpose.msra.mxu0 0
    %3216 = vmatprep.subr.bf16.mxu0 0
    %3217 = vmatpush1.bf16.xpose.msra.mxu0 0
    %3218 = vmatprep.subr.bf16.mxu0 0
    %3219 = vmatpush1.bf16.xpose.msra.mxu0 0
    %3220 = vmatprep.subr.bf16.mxu0 0
    %3221 = vmatpush1.bf16.xpose.msra.mxu0 0
    %3222 = vmatprep.subr.bf16.mxu0 0
    %3223 = vmatpush1.bf16.xpose.msra.mxu0 0
    %3224 = vmatprep.subr.bf16.mxu0 0
    %3225 = vmatpush1.bf16.xpose.msra.mxu0 0
    %3226 = vmatprep.subr.bf16.mxu0 0
    %3227 = vmatpush1.bf16.xpose.msra.mxu0 0
    %3228 = vmatprep.subr.bf16.mxu0 0
    %3229 = vmatpush1.bf16.xpose.msra.mxu0 0
    %3230 = vmatprep.subr.bf16.mxu0 0
    %3231 = vmatpush1.bf16.xpose.msra.mxu0 0
    %3232 = vmatprep.subr.bf16.mxu0 0
    %3233 = vmatpush1.bf16.xpose.msra.mxu0 0
    %3234 = vmatprep.subr.bf16.mxu0 0
    %3235 = vmatpush1.bf16.xpose.msra.mxu0 0
    %3236 = vmatprep.subr.bf16.mxu0 0
    %3237 = vmatpush1.bf16.xpose.msra.mxu0 0
    %3238 = vmatprep.subr.bf16.mxu0 0
    %3239 = vmatpush1.bf16.xpose.msra.mxu0 0
    %3240 = vmatprep.mubr.bf16.mxu0 0
    %3241 = vmatmul.mubr.bf16.gmra.mrb[0].mxu0 %v2894
    %v3242 = vpop.f32.mrb[0].mxu0
    %v3243 = vadd.f32 0.0, %v3242
    %v3244 = vpop.f32.mrb[0].mxu0
    %v3245 = vpop.f32.mrb[0].mxu0
    %v3246 = vpop.f32.mrb[0].mxu0
    %3247 = vdwg.mxu0
    %3248 = vmatprep.subr.bf16.mxu0 0
    %3249 = vmatpush1.bf16.xpose.msra.mxu0 %v2968
    %3250 = vmatprep.subr.bf16.mxu0 0
    %3251 = vmatpush1.bf16.xpose.msra.mxu0 %v2969
    %3252 = vmatprep.subr.bf16.mxu0 0
    %3253 = vmatpush1.bf16.xpose.msra.mxu0 0
    %3254 = vmatprep.subr.bf16.mxu0 0
    %3255 = vmatpush1.bf16.xpose.msra.mxu0 0
    %3256 = vmatprep.subr.bf16.mxu0 0
    %3257 = vmatpush1.bf16.xpose.msra.mxu0 0
    %3258 = vmatprep.subr.bf16.mxu0 0
    %3259 = vmatpush1.bf16.xpose.msra.mxu0 0
    %3260 = vmatprep.subr.bf16.mxu0 0
    %3261 = vmatpush1.bf16.xpose.msra.mxu0 0
    %3262 = vmatprep.subr.bf16.mxu0 0
    %3263 = vmatpush1.bf16.xpose.msra.mxu0 0
    %3264 = vmatprep.subr.bf16.mxu0 0
    %3265 = vmatpush1.bf16.xpose.msra.mxu0 0
    %3266 = vmatprep.subr.bf16.mxu0 0
    %3267 = vmatpush1.bf16.xpose.msra.mxu0 0
    %3268 = vmatprep.subr.bf16.mxu0 0
    %3269 = vmatpush1.bf16.xpose.msra.mxu0 0
    %3270 = vmatprep.subr.bf16.mxu0 0
    %3271 = vmatpush1.bf16.xpose.msra.mxu0 0
    %3272 = vmatprep.subr.bf16.mxu0 0
    %3273 = vmatpush1.bf16.xpose.msra.mxu0 0
    %3274 = vmatprep.subr.bf16.mxu0 0
    %3275 = vmatpush1.bf16.xpose.msra.mxu0 0
    %3276 = vmatprep.subr.bf16.mxu0 0
    %3277 = vmatpush1.bf16.xpose.msra.mxu0 0
    %3278 = vmatprep.subr.bf16.mxu0 0
    %3279 = vmatpush1.bf16.xpose.msra.mxu0 0
    %3280 = vmatprep.mubr.bf16.mxu0 0
    %3281 = vmatmul.mubr.bf16.gmra.mrb[0].mxu0 %v2895
    %v3282 = vpop.f32.mrb[0].mxu0
    %v3283 = vadd.f32 0.0, %v3282
    %v3284 = vpop.f32.mrb[0].mxu0
    %v3285 = vpop.f32.mrb[0].mxu0
    %v3286 = vpop.f32.mrb[0].mxu0
    %3287 = vdwg.mxu0
    %3288 = vmatprep.subr.bf16.mxu0 0
    %3289 = vmatpush1.bf16.xpose.msra.mxu0 %v2970
    %3290 = vmatprep.subr.bf16.mxu0 0
    %3291 = vmatpush1.bf16.xpose.msra.mxu0 %v2971
    %3292 = vmatprep.subr.bf16.mxu0 0
    %3293 = vmatpush1.bf16.xpose.msra.mxu0 0
    %3294 = vmatprep.subr.bf16.mxu0 0
    %3295 = vmatpush1.bf16.xpose.msra.mxu0 0
    %3296 = vmatprep.subr.bf16.mxu0 0
    %3297 = vmatpush1.bf16.xpose.msra.mxu0 0
    %3298 = vmatprep.subr.bf16.mxu0 0
    %3299 = vmatpush1.bf16.xpose.msra.mxu0 0
    %3300 = vmatprep.subr.bf16.mxu0 0
    %3301 = vmatpush1.bf16.xpose.msra.mxu0 0
    %3302 = vmatprep.subr.bf16.mxu0 0
    %3303 = vmatpush1.bf16.xpose.msra.mxu0 0
    %3304 = vmatprep.subr.bf16.mxu0 0
    %3305 = vmatpush1.bf16.xpose.msra.mxu0 0
    %3306 = vmatprep.subr.bf16.mxu0 0
    %3307 = vmatpush1.bf16.xpose.msra.mxu0 0
    %3308 = vmatprep.subr.bf16.mxu0 0
    %3309 = vmatpush1.bf16.xpose.msra.mxu0 0
    %3310 = vmatprep.subr.bf16.mxu0 0
    %3311 = vmatpush1.bf16.xpose.msra.mxu0 0
    %3312 = vmatprep.subr.bf16.mxu0 0
    %3313 = vmatpush1.bf16.xpose.msra.mxu0 0
    %3314 = vmatprep.subr.bf16.mxu0 0
    %3315 = vmatpush1.bf16.xpose.msra.mxu0 0
    %3316 = vmatprep.subr.bf16.mxu0 0
    %3317 = vmatpush1.bf16.xpose.msra.mxu0 0
    %3318 = vmatprep.subr.bf16.mxu0 0
    %3319 = vmatpush1.bf16.xpose.msra.mxu0 0
    %3320 = vmatprep.mubr.bf16.mxu0 0
    %3321 = vmatmul.mubr.bf16.gmra.mrb[0].mxu0 %v2896
    %v3322 = vpop.f32.mrb[0].mxu0
    %v3323 = vadd.f32 0.0, %v3322
    %v3324 = vpop.f32.mrb[0].mxu0
    %v3325 = vpop.f32.mrb[0].mxu0
    %v3326 = vpop.f32.mrb[0].mxu0
    %3327 = vdwg.mxu0
    %3328 = vmatprep.subr.bf16.mxu0 0
    %3329 = vmatpush1.bf16.xpose.msra.mxu0 %v2972
    %3330 = vmatprep.subr.bf16.mxu0 0
    %3331 = vmatpush1.bf16.xpose.msra.mxu0 %v2973
    %3332 = vmatprep.subr.bf16.mxu0 0
    %3333 = vmatpush1.bf16.xpose.msra.mxu0 0
    %3334 = vmatprep.subr.bf16.mxu0 0
    %3335 = vmatpush1.bf16.xpose.msra.mxu0 0
    %3336 = vmatprep.subr.bf16.mxu0 0
    %3337 = vmatpush1.bf16.xpose.msra.mxu0 0
    %3338 = vmatprep.subr.bf16.mxu0 0
    %3339 = vmatpush1.bf16.xpose.msra.mxu0 0
    %3340 = vmatprep.subr.bf16.mxu0 0
    %3341 = vmatpush1.bf16.xpose.msra.mxu0 0
    %3342 = vmatprep.subr.bf16.mxu0 0
    %3343 = vmatpush1.bf16.xpose.msra.mxu0 0
    %3344 = vmatprep.subr.bf16.mxu0 0
    %3345 = vmatpush1.bf16.xpose.msra.mxu0 0
    %3346 = vmatprep.subr.bf16.mxu0 0
    %3347 = vmatpush1.bf16.xpose.msra.mxu0 0
    %3348 = vmatprep.subr.bf16.mxu0 0
    %3349 = vmatpush1.bf16.xpose.msra.mxu0 0
    %3350 = vmatprep.subr.bf16.mxu0 0
    %3351 = vmatpush1.bf16.xpose.msra.mxu0 0
    %3352 = vmatprep.subr.bf16.mxu0 0
    %3353 = vmatpush1.bf16.xpose.msra.mxu0 0
    %3354 = vmatprep.subr.bf16.mxu0 0
    %3355 = vmatpush1.bf16.xpose.msra.mxu0 0
    %3356 = vmatprep.subr.bf16.mxu0 0
    %3357 = vmatpush1.bf16.xpose.msra.mxu0 0
    %3358 = vmatprep.subr.bf16.mxu0 0
    %3359 = vmatpush1.bf16.xpose.msra.mxu0 0
    %3360 = vmatprep.mubr.bf16.mxu0 0
    %3361 = vmatmul.mubr.bf16.gmra.mrb[0].mxu0 %v2897
    %v3362 = vpop.f32.mrb[0].mxu0
    %v3363 = vadd.f32 0.0, %v3362
    %v3364 = vpop.f32.mrb[0].mxu0
    %v3365 = vpop.f32.mrb[0].mxu0
    %v3366 = vpop.f32.mrb[0].mxu0
    %3367 = vdwg.mxu0
    %3368 = vmatprep.subr.bf16.mxu0 0
    %3369 = vmatpush1.bf16.xpose.msra.mxu0 %v2974
    %3370 = vmatprep.subr.bf16.mxu0 0
    %3371 = vmatpush1.bf16.xpose.msra.mxu0 %v2975
    %3372 = vmatprep.subr.bf16.mxu0 0
    %3373 = vmatpush1.bf16.xpose.msra.mxu0 0
    %3374 = vmatprep.subr.bf16.mxu0 0
    %3375 = vmatpush1.bf16.xpose.msra.mxu0 0
    %3376 = vmatprep.subr.bf16.mxu0 0
    %3377 = vmatpush1.bf16.xpose.msra.mxu0 0
    %3378 = vmatprep.subr.bf16.mxu0 0
    %3379 = vmatpush1.bf16.xpose.msra.mxu0 0
    %3380 = vmatprep.subr.bf16.mxu0 0
    %3381 = vmatpush1.bf16.xpose.msra.mxu0 0
    %3382 = vmatprep.subr.bf16.mxu0 0
    %3383 = vmatpush1.bf16.xpose.msra.mxu0 0
    %3384 = vmatprep.subr.bf16.mxu0 0
    %3385 = vmatpush1.bf16.xpose.msra.mxu0 0
    %3386 = vmatprep.subr.bf16.mxu0 0
    %3387 = vmatpush1.bf16.xpose.msra.mxu0 0
    %3388 = vmatprep.subr.bf16.mxu0 0
    %3389 = vmatpush1.bf16.xpose.msra.mxu0 0
    %3390 = vmatprep.subr.bf16.mxu0 0
    %3391 = vmatpush1.bf16.xpose.msra.mxu0 0
    %3392 = vmatprep.subr.bf16.mxu0 0
    %3393 = vmatpush1.bf16.xpose.msra.mxu0 0
    %3394 = vmatprep.subr.bf16.mxu0 0
    %3395 = vmatpush1.bf16.xpose.msra.mxu0 0
    %3396 = vmatprep.subr.bf16.mxu0 0
    %3397 = vmatpush1.bf16.xpose.msra.mxu0 0
    %3398 = vmatprep.subr.bf16.mxu0 0
    %3399 = vmatpush1.bf16.xpose.msra.mxu0 0
    %3400 = vmatprep.mubr.bf16.mxu0 0
    %3401 = vmatmul.mubr.bf16.gmra.mrb[0].mxu0 %v2898
    %v3402 = vpop.f32.mrb[0].mxu0
    %v3403 = vadd.f32 0.0, %v3402
    %v3404 = vpop.f32.mrb[0].mxu0
    %v3405 = vpop.f32.mrb[0].mxu0
    %v3406 = vpop.f32.mrb[0].mxu0
    %3407 = vdwg.mxu0
    %3408 = vmatprep.subr.bf16.mxu0 0
    %3409 = vmatpush1.bf16.xpose.msra.mxu0 %v2976
    %3410 = vmatprep.subr.bf16.mxu0 0
    %3411 = vmatpush1.bf16.xpose.msra.mxu0 %v2977
    %3412 = vmatprep.subr.bf16.mxu0 0
    %3413 = vmatpush1.bf16.xpose.msra.mxu0 0
    %3414 = vmatprep.subr.bf16.mxu0 0
    %3415 = vmatpush1.bf16.xpose.msra.mxu0 0
    %3416 = vmatprep.subr.bf16.mxu0 0
    %3417 = vmatpush1.bf16.xpose.msra.mxu0 0
    %3418 = vmatprep.subr.bf16.mxu0 0
    %3419 = vmatpush1.bf16.xpose.msra.mxu0 0
    %3420 = vmatprep.subr.bf16.mxu0 0
    %3421 = vmatpush1.bf16.xpose.msra.mxu0 0
    %3422 = vmatprep.subr.bf16.mxu0 0
    %3423 = vmatpush1.bf16.xpose.msra.mxu0 0
    %3424 = vmatprep.subr.bf16.mxu0 0
    %3425 = vmatpush1.bf16.xpose.msra.mxu0 0
    %3426 = vmatprep.subr.bf16.mxu0 0
    %3427 = vmatpush1.bf16.xpose.msra.mxu0 0
    %3428 = vmatprep.subr.bf16.mxu0 0
    %3429 = vmatpush1.bf16.xpose.msra.mxu0 0
    %3430 = vmatprep.subr.bf16.mxu0 0
    %3431 = vmatpush1.bf16.xpose.msra.mxu0 0
    %3432 = vmatprep.subr.bf16.mxu0 0
    %3433 = vmatpush1.bf16.xpose.msra.mxu0 0
    %3434 = vmatprep.subr.bf16.mxu0 0
    %3435 = vmatpush1.bf16.xpose.msra.mxu0 0
    %3436 = vmatprep.subr.bf16.mxu0 0
    %3437 = vmatpush1.bf16.xpose.msra.mxu0 0
    %3438 = vmatprep.subr.bf16.mxu0 0
    %3439 = vmatpush1.bf16.xpose.msra.mxu0 0
    %3440 = vmatprep.mubr.bf16.mxu0 0
    %3441 = vmatmul.mubr.bf16.gmra.mrb[0].mxu0 %v2899
    %v3442 = vpop.f32.mrb[0].mxu0
    %v3443 = vadd.f32 0.0, %v3442
    %v3444 = vpop.f32.mrb[0].mxu0
    %v3445 = vpop.f32.mrb[0].mxu0
    %v3446 = vpop.f32.mrb[0].mxu0
    %3447 = vdwg.mxu0
    %3448 = vmatprep.subr.bf16.mxu0 0
    %3449 = vmatpush1.bf16.xpose.msra.mxu0 %v2978
    %3450 = vmatprep.subr.bf16.mxu0 0
    %3451 = vmatpush1.bf16.xpose.msra.mxu0 %v2979
    %3452 = vmatprep.subr.bf16.mxu0 0
    %3453 = vmatpush1.bf16.xpose.msra.mxu0 0
    %3454 = vmatprep.subr.bf16.mxu0 0
    %3455 = vmatpush1.bf16.xpose.msra.mxu0 0
    %3456 = vmatprep.subr.bf16.mxu0 0
    %3457 = vmatpush1.bf16.xpose.msra.mxu0 0
    %3458 = vmatprep.subr.bf16.mxu0 0
    %3459 = vmatpush1.bf16.xpose.msra.mxu0 0
    %3460 = vmatprep.subr.bf16.mxu0 0
    %3461 = vmatpush1.bf16.xpose.msra.mxu0 0
    %3462 = vmatprep.subr.bf16.mxu0 0
    %3463 = vmatpush1.bf16.xpose.msra.mxu0 0
    %3464 = vmatprep.subr.bf16.mxu0 0
    %3465 = vmatpush1.bf16.xpose.msra.mxu0 0
    %3466 = vmatprep.subr.bf16.mxu0 0
    %3467 = vmatpush1.bf16.xpose.msra.mxu0 0
    %3468 = vmatprep.subr.bf16.mxu0 0
    %3469 = vmatpush1.bf16.xpose.msra.mxu0 0
    %3470 = vmatprep.subr.bf16.mxu0 0
    %3471 = vmatpush1.bf16.xpose.msra.mxu0 0
    %3472 = vmatprep.subr.bf16.mxu0 0
    %3473 = vmatpush1.bf16.xpose.msra.mxu0 0
    %3474 = vmatprep.subr.bf16.mxu0 0
    %3475 = vmatpush1.bf16.xpose.msra.mxu0 0
    %3476 = vmatprep.subr.bf16.mxu0 0
    %3477 = vmatpush1.bf16.xpose.msra.mxu0 0
    %3478 = vmatprep.subr.bf16.mxu0 0
    %3479 = vmatpush1.bf16.xpose.msra.mxu0 0
    %3480 = vmatprep.mubr.bf16.mxu0 0
    %3481 = vmatmul.mubr.bf16.gmra.mrb[0].mxu0 %v2900
    %v3482 = vpop.f32.mrb[0].mxu0
    %v3483 = vadd.f32 0.0, %v3482
    %v3484 = vpop.f32.mrb[0].mxu0
    %v3485 = vpop.f32.mrb[0].mxu0
    %v3486 = vpop.f32.mrb[0].mxu0
    %3487 = vdwg.mxu0
    %3488 = vmatprep.subr.bf16.mxu0 0
    %3489 = vmatpush1.bf16.xpose.msra.mxu0 %v2980
    %3490 = vmatprep.subr.bf16.mxu0 0
    %3491 = vmatpush1.bf16.xpose.msra.mxu0 %v2981
    %3492 = vmatprep.subr.bf16.mxu0 0
    %3493 = vmatpush1.bf16.xpose.msra.mxu0 0
    %3494 = vmatprep.subr.bf16.mxu0 0
    %3495 = vmatpush1.bf16.xpose.msra.mxu0 0
    %3496 = vmatprep.subr.bf16.mxu0 0
    %3497 = vmatpush1.bf16.xpose.msra.mxu0 0
    %3498 = vmatprep.subr.bf16.mxu0 0
    %3499 = vmatpush1.bf16.xpose.msra.mxu0 0
    %3500 = vmatprep.subr.bf16.mxu0 0
    %3501 = vmatpush1.bf16.xpose.msra.mxu0 0
    %3502 = vmatprep.subr.bf16.mxu0 0
    %3503 = vmatpush1.bf16.xpose.msra.mxu0 0
    %3504 = vmatprep.subr.bf16.mxu0 0
    %3505 = vmatpush1.bf16.xpose.msra.mxu0 0
    %3506 = vmatprep.subr.bf16.mxu0 0
    %3507 = vmatpush1.bf16.xpose.msra.mxu0 0
    %3508 = vmatprep.subr.bf16.mxu0 0
    %3509 = vmatpush1.bf16.xpose.msra.mxu0 0
    %3510 = vmatprep.subr.bf16.mxu0 0
    %3511 = vmatpush1.bf16.xpose.msra.mxu0 0
    %3512 = vmatprep.subr.bf16.mxu0 0
    %3513 = vmatpush1.bf16.xpose.msra.mxu0 0
    %3514 = vmatprep.subr.bf16.mxu0 0
    %3515 = vmatpush1.bf16.xpose.msra.mxu0 0
    %3516 = vmatprep.subr.bf16.mxu0 0
    %3517 = vmatpush1.bf16.xpose.msra.mxu0 0
    %3518 = vmatprep.subr.bf16.mxu0 0
    %3519 = vmatpush1.bf16.xpose.msra.mxu0 0
    %3520 = vmatprep.mubr.bf16.mxu0 0
    %3521 = vmatmul.mubr.bf16.gmra.mrb[0].mxu0 %v2901
    %v3522 = vpop.f32.mrb[0].mxu0
    %v3523 = vadd.f32 0.0, %v3522
    %v3524 = vpop.f32.mrb[0].mxu0
    %v3525 = vpop.f32.mrb[0].mxu0
    %v3526 = vpop.f32.mrb[0].mxu0
    %3527 = vdwg.mxu0
    %3528 = vmatprep.subr.bf16.mxu0 0
    %3529 = vmatpush1.bf16.xpose.msra.mxu0 %v2982
    %3530 = vmatprep.subr.bf16.mxu0 0
    %3531 = vmatpush1.bf16.xpose.msra.mxu0 %v2983
    %3532 = vmatprep.subr.bf16.mxu0 0
    %3533 = vmatpush1.bf16.xpose.msra.mxu0 0
    %3534 = vmatprep.subr.bf16.mxu0 0
    %3535 = vmatpush1.bf16.xpose.msra.mxu0 0
    %3536 = vmatprep.subr.bf16.mxu0 0
    %3537 = vmatpush1.bf16.xpose.msra.mxu0 0
    %3538 = vmatprep.subr.bf16.mxu0 0
    %3539 = vmatpush1.bf16.xpose.msra.mxu0 0
    %3540 = vmatprep.subr.bf16.mxu0 0
    %3541 = vmatpush1.bf16.xpose.msra.mxu0 0
    %3542 = vmatprep.subr.bf16.mxu0 0
    %3543 = vmatpush1.bf16.xpose.msra.mxu0 0
    %3544 = vmatprep.subr.bf16.mxu0 0
    %3545 = vmatpush1.bf16.xpose.msra.mxu0 0
    %3546 = vmatprep.subr.bf16.mxu0 0
    %3547 = vmatpush1.bf16.xpose.msra.mxu0 0
    %3548 = vmatprep.subr.bf16.mxu0 0
    %3549 = vmatpush1.bf16.xpose.msra.mxu0 0
    %3550 = vmatprep.subr.bf16.mxu0 0
    %3551 = vmatpush1.bf16.xpose.msra.mxu0 0
    %3552 = vmatprep.subr.bf16.mxu0 0
    %3553 = vmatpush1.bf16.xpose.msra.mxu0 0
    %3554 = vmatprep.subr.bf16.mxu0 0
    %3555 = vmatpush1.bf16.xpose.msra.mxu0 0
    %3556 = vmatprep.subr.bf16.mxu0 0
    %3557 = vmatpush1.bf16.xpose.msra.mxu0 0
    %3558 = vmatprep.subr.bf16.mxu0 0
    %3559 = vmatpush1.bf16.xpose.msra.mxu0 0
    %3560 = vmatprep.mubr.bf16.mxu0 0
    %3561 = vmatmul.mubr.bf16.gmra.mrb[0].mxu0 %v2902
    %v3562 = vpop.f32.mrb[0].mxu0
    %v3563 = vadd.f32 0.0, %v3562
    %v3564 = vpop.f32.mrb[0].mxu0
    %v3565 = vpop.f32.mrb[0].mxu0
    %v3566 = vpop.f32.mrb[0].mxu0
    %3567 = vdwg.mxu0
    %3568 = vmatprep.subr.bf16.mxu0 0
    %3569 = vmatpush1.bf16.xpose.msra.mxu0 %v2984
    %3570 = vmatprep.subr.bf16.mxu0 0
    %3571 = vmatpush1.bf16.xpose.msra.mxu0 %v2985
    %3572 = vmatprep.subr.bf16.mxu0 0
    %3573 = vmatpush1.bf16.xpose.msra.mxu0 0
    %3574 = vmatprep.subr.bf16.mxu0 0
    %3575 = vmatpush1.bf16.xpose.msra.mxu0 0
    %3576 = vmatprep.subr.bf16.mxu0 0
    %3577 = vmatpush1.bf16.xpose.msra.mxu0 0
    %3578 = vmatprep.subr.bf16.mxu0 0
    %3579 = vmatpush1.bf16.xpose.msra.mxu0 0
    %3580 = vmatprep.subr.bf16.mxu0 0
    %3581 = vmatpush1.bf16.xpose.msra.mxu0 0
    %3582 = vmatprep.subr.bf16.mxu0 0
    %3583 = vmatpush1.bf16.xpose.msra.mxu0 0
    %3584 = vmatprep.subr.bf16.mxu0 0
    %3585 = vmatpush1.bf16.xpose.msra.mxu0 0
    %3586 = vmatprep.subr.bf16.mxu0 0
    %3587 = vmatpush1.bf16.xpose.msra.mxu0 0
    %3588 = vmatprep.subr.bf16.mxu0 0
    %3589 = vmatpush1.bf16.xpose.msra.mxu0 0
    %3590 = vmatprep.subr.bf16.mxu0 0
    %3591 = vmatpush1.bf16.xpose.msra.mxu0 0
    %3592 = vmatprep.subr.bf16.mxu0 0
    %3593 = vmatpush1.bf16.xpose.msra.mxu0 0
    %3594 = vmatprep.subr.bf16.mxu0 0
    %3595 = vmatpush1.bf16.xpose.msra.mxu0 0
    %3596 = vmatprep.subr.bf16.mxu0 0
    %3597 = vmatpush1.bf16.xpose.msra.mxu0 0
    %3598 = vmatprep.subr.bf16.mxu0 0
    %3599 = vmatpush1.bf16.xpose.msra.mxu0 0
    %3600 = vmatprep.mubr.bf16.mxu0 0
    %3601 = vmatmul.mubr.bf16.gmra.mrb[0].mxu0 %v2903
    %v3602 = vpop.f32.mrb[0].mxu0
    %v3603 = vadd.f32 0.0, %v3602
    %v3604 = vpop.f32.mrb[0].mxu0
    %v3605 = vpop.f32.mrb[0].mxu0
    %v3606 = vpop.f32.mrb[0].mxu0
    %3607 = vdwg.mxu0
    %3608 = vmatprep.subr.bf16.mxu0 0
    %3609 = vmatpush1.bf16.xpose.msra.mxu0 %v2986
    %3610 = vmatprep.subr.bf16.mxu0 0
    %3611 = vmatpush1.bf16.xpose.msra.mxu0 %v2987
    %3612 = vmatprep.subr.bf16.mxu0 0
    %3613 = vmatpush1.bf16.xpose.msra.mxu0 0
    %3614 = vmatprep.subr.bf16.mxu0 0
    %3615 = vmatpush1.bf16.xpose.msra.mxu0 0
    %3616 = vmatprep.subr.bf16.mxu0 0
    %3617 = vmatpush1.bf16.xpose.msra.mxu0 0
    %3618 = vmatprep.subr.bf16.mxu0 0
    %3619 = vmatpush1.bf16.xpose.msra.mxu0 0
    %3620 = vmatprep.subr.bf16.mxu0 0
    %3621 = vmatpush1.bf16.xpose.msra.mxu0 0
    %3622 = vmatprep.subr.bf16.mxu0 0
    %3623 = vmatpush1.bf16.xpose.msra.mxu0 0
    %3624 = vmatprep.subr.bf16.mxu0 0
    %3625 = vmatpush1.bf16.xpose.msra.mxu0 0
    %3626 = vmatprep.subr.bf16.mxu0 0
    %3627 = vmatpush1.bf16.xpose.msra.mxu0 0
    %3628 = vmatprep.subr.bf16.mxu0 0
    %3629 = vmatpush1.bf16.xpose.msra.mxu0 0
    %3630 = vmatprep.subr.bf16.mxu0 0
    %3631 = vmatpush1.bf16.xpose.msra.mxu0 0
    %3632 = vmatprep.subr.bf16.mxu0 0
    %3633 = vmatpush1.bf16.xpose.msra.mxu0 0
    %3634 = vmatprep.subr.bf16.mxu0 0
    %3635 = vmatpush1.bf16.xpose.msra.mxu0 0
    %3636 = vmatprep.subr.bf16.mxu0 0
    %3637 = vmatpush1.bf16.xpose.msra.mxu0 0
    %3638 = vmatprep.subr.bf16.mxu0 0
    %3639 = vmatpush1.bf16.xpose.msra.mxu0 0
    %3640 = vmatprep.mubr.bf16.mxu0 0
    %3641 = vmatmul.mubr.bf16.gmra.mrb[0].mxu0 %v2904
    %v3642 = vpop.f32.mrb[0].mxu0
    %v3643 = vadd.f32 0.0, %v3642
    %v3644 = vpop.f32.mrb[0].mxu0
    %v3645 = vpop.f32.mrb[0].mxu0
    %v3646 = vpop.f32.mrb[0].mxu0
    %3647 = vdwg.mxu0
    %3648 = vmatprep.subr.bf16.mxu0 0
    %3649 = vmatpush1.bf16.xpose.msra.mxu0 %v2988
    %3650 = vmatprep.subr.bf16.mxu0 0
    %3651 = vmatpush1.bf16.xpose.msra.mxu0 %v2989
    %3652 = vmatprep.subr.bf16.mxu0 0
    %3653 = vmatpush1.bf16.xpose.msra.mxu0 0
    %3654 = vmatprep.subr.bf16.mxu0 0
    %3655 = vmatpush1.bf16.xpose.msra.mxu0 0
    %3656 = vmatprep.subr.bf16.mxu0 0
    %3657 = vmatpush1.bf16.xpose.msra.mxu0 0
    %3658 = vmatprep.subr.bf16.mxu0 0
    %3659 = vmatpush1.bf16.xpose.msra.mxu0 0
    %3660 = vmatprep.subr.bf16.mxu0 0
    %3661 = vmatpush1.bf16.xpose.msra.mxu0 0
    %3662 = vmatprep.subr.bf16.mxu0 0
    %3663 = vmatpush1.bf16.xpose.msra.mxu0 0
    %3664 = vmatprep.subr.bf16.mxu0 0
    %3665 = vmatpush1.bf16.xpose.msra.mxu0 0
    %3666 = vmatprep.subr.bf16.mxu0 0
    %3667 = vmatpush1.bf16.xpose.msra.mxu0 0
    %3668 = vmatprep.subr.bf16.mxu0 0
    %3669 = vmatpush1.bf16.xpose.msra.mxu0 0
    %3670 = vmatprep.subr.bf16.mxu0 0
    %3671 = vmatpush1.bf16.xpose.msra.mxu0 0
    %3672 = vmatprep.subr.bf16.mxu0 0
    %3673 = vmatpush1.bf16.xpose.msra.mxu0 0
    %3674 = vmatprep.subr.bf16.mxu0 0
    %3675 = vmatpush1.bf16.xpose.msra.mxu0 0
    %3676 = vmatprep.subr.bf16.mxu0 0
    %3677 = vmatpush1.bf16.xpose.msra.mxu0 0
    %3678 = vmatprep.subr.bf16.mxu0 0
    %3679 = vmatpush1.bf16.xpose.msra.mxu0 0
    %3680 = vmatprep.mubr.bf16.mxu0 0
    %3681 = vmatmul.mubr.bf16.gmra.mrb[0].mxu0 %v2905
    %v3682 = vpop.f32.mrb[0].mxu0
    %v3683 = vadd.f32 0.0, %v3682
    %v3684 = vpop.f32.mrb[0].mxu0
    %v3685 = vpop.f32.mrb[0].mxu0
    %v3686 = vpop.f32.mrb[0].mxu0
    %3687 = vdwg.mxu0
    %3688 = vmatprep.subr.bf16.mxu0 0
    %3689 = vmatpush1.bf16.xpose.msra.mxu0 %v2990
    %3690 = vmatprep.subr.bf16.mxu0 0
    %3691 = vmatpush1.bf16.xpose.msra.mxu0 %v2991
    %3692 = vmatprep.subr.bf16.mxu0 0
    %3693 = vmatpush1.bf16.xpose.msra.mxu0 0
    %3694 = vmatprep.subr.bf16.mxu0 0
    %3695 = vmatpush1.bf16.xpose.msra.mxu0 0
    %3696 = vmatprep.subr.bf16.mxu0 0
    %3697 = vmatpush1.bf16.xpose.msra.mxu0 0
    %3698 = vmatprep.subr.bf16.mxu0 0
    %3699 = vmatpush1.bf16.xpose.msra.mxu0 0
    %3700 = vmatprep.subr.bf16.mxu0 0
    %3701 = vmatpush1.bf16.xpose.msra.mxu0 0
    %3702 = vmatprep.subr.bf16.mxu0 0
    %3703 = vmatpush1.bf16.xpose.msra.mxu0 0
    %3704 = vmatprep.subr.bf16.mxu0 0
    %3705 = vmatpush1.bf16.xpose.msra.mxu0 0
    %3706 = vmatprep.subr.bf16.mxu0 0
    %3707 = vmatpush1.bf16.xpose.msra.mxu0 0
    %3708 = vmatprep.subr.bf16.mxu0 0
    %3709 = vmatpush1.bf16.xpose.msra.mxu0 0
    %3710 = vmatprep.subr.bf16.mxu0 0
    %3711 = vmatpush1.bf16.xpose.msra.mxu0 0
    %3712 = vmatprep.subr.bf16.mxu0 0
    %3713 = vmatpush1.bf16.xpose.msra.mxu0 0
    %3714 = vmatprep.subr.bf16.mxu0 0
    %3715 = vmatpush1.bf16.xpose.msra.mxu0 0
    %3716 = vmatprep.subr.bf16.mxu0 0
    %3717 = vmatpush1.bf16.xpose.msra.mxu0 0
    %3718 = vmatprep.subr.bf16.mxu0 0
    %3719 = vmatpush1.bf16.xpose.msra.mxu0 0
    %3720 = vmatprep.mubr.bf16.mxu0 0
    %3721 = vmatmul.mubr.bf16.gmra.mrb[0].mxu0 %v2906
    %v3722 = vpop.f32.mrb[0].mxu0
    %v3723 = vadd.f32 0.0, %v3722
    %v3724 = vpop.f32.mrb[0].mxu0
    %v3725 = vpop.f32.mrb[0].mxu0
    %v3726 = vpop.f32.mrb[0].mxu0
    %3727 = vdwg.mxu0
    %3728 = vmatprep.subr.bf16.mxu0 0
    %3729 = vmatpush1.bf16.xpose.msra.mxu0 %v2992
    %3730 = vmatprep.subr.bf16.mxu0 0
    %3731 = vmatpush1.bf16.xpose.msra.mxu0 %v2993
    %3732 = vmatprep.subr.bf16.mxu0 0
    %3733 = vmatpush1.bf16.xpose.msra.mxu0 0
    %3734 = vmatprep.subr.bf16.mxu0 0
    %3735 = vmatpush1.bf16.xpose.msra.mxu0 0
    %3736 = vmatprep.subr.bf16.mxu0 0
    %3737 = vmatpush1.bf16.xpose.msra.mxu0 0
    %3738 = vmatprep.subr.bf16.mxu0 0
    %3739 = vmatpush1.bf16.xpose.msra.mxu0 0
    %3740 = vmatprep.subr.bf16.mxu0 0
    %3741 = vmatpush1.bf16.xpose.msra.mxu0 0
    %3742 = vmatprep.subr.bf16.mxu0 0
    %3743 = vmatpush1.bf16.xpose.msra.mxu0 0
    %3744 = vmatprep.subr.bf16.mxu0 0
    %3745 = vmatpush1.bf16.xpose.msra.mxu0 0
    %3746 = vmatprep.subr.bf16.mxu0 0
    %3747 = vmatpush1.bf16.xpose.msra.mxu0 0
    %3748 = vmatprep.subr.bf16.mxu0 0
    %3749 = vmatpush1.bf16.xpose.msra.mxu0 0
    %3750 = vmatprep.subr.bf16.mxu0 0
    %3751 = vmatpush1.bf16.xpose.msra.mxu0 0
    %3752 = vmatprep.subr.bf16.mxu0 0
    %3753 = vmatpush1.bf16.xpose.msra.mxu0 0
    %3754 = vmatprep.subr.bf16.mxu0 0
    %3755 = vmatpush1.bf16.xpose.msra.mxu0 0
    %3756 = vmatprep.subr.bf16.mxu0 0
    %3757 = vmatpush1.bf16.xpose.msra.mxu0 0
    %3758 = vmatprep.subr.bf16.mxu0 0
    %3759 = vmatpush1.bf16.xpose.msra.mxu0 0
    %3760 = vmatprep.mubr.bf16.mxu0 0
    %3761 = vmatmul.mubr.bf16.gmra.mrb[0].mxu0 %v2907
    %v3762 = vpop.f32.mrb[0].mxu0
    %v3763 = vadd.f32 0.0, %v3762
    %v3764 = vpop.f32.mrb[0].mxu0
    %v3765 = vpop.f32.mrb[0].mxu0
    %v3766 = vpop.f32.mrb[0].mxu0
    %3767 = vdwg.mxu0
    %3768 = vmatprep.subr.bf16.mxu0 0
    %3769 = vmatpush1.bf16.xpose.msra.mxu0 %v2994
    %3770 = vmatprep.subr.bf16.mxu0 0
    %3771 = vmatpush1.bf16.xpose.msra.mxu0 %v2995
    %3772 = vmatprep.subr.bf16.mxu0 0
    %3773 = vmatpush1.bf16.xpose.msra.mxu0 0
    %3774 = vmatprep.subr.bf16.mxu0 0
    %3775 = vmatpush1.bf16.xpose.msra.mxu0 0
    %3776 = vmatprep.subr.bf16.mxu0 0
    %3777 = vmatpush1.bf16.xpose.msra.mxu0 0
    %3778 = vmatprep.subr.bf16.mxu0 0
    %3779 = vmatpush1.bf16.xpose.msra.mxu0 0
    %3780 = vmatprep.subr.bf16.mxu0 0
    %3781 = vmatpush1.bf16.xpose.msra.mxu0 0
    %3782 = vmatprep.subr.bf16.mxu0 0
    %3783 = vmatpush1.bf16.xpose.msra.mxu0 0
    %3784 = vmatprep.subr.bf16.mxu0 0
    %3785 = vmatpush1.bf16.xpose.msra.mxu0 0
    %3786 = vmatprep.subr.bf16.mxu0 0
    %3787 = vmatpush1.bf16.xpose.msra.mxu0 0
    %3788 = vmatprep.subr.bf16.mxu0 0
    %3789 = vmatpush1.bf16.xpose.msra.mxu0 0
    %3790 = vmatprep.subr.bf16.mxu0 0
    %3791 = vmatpush1.bf16.xpose.msra.mxu0 0
    %3792 = vmatprep.subr.bf16.mxu0 0
    %3793 = vmatpush1.bf16.xpose.msra.mxu0 0
    %3794 = vmatprep.subr.bf16.mxu0 0
    %3795 = vmatpush1.bf16.xpose.msra.mxu0 0
    %3796 = vmatprep.subr.bf16.mxu0 0
    %3797 = vmatpush1.bf16.xpose.msra.mxu0 0
    %3798 = vmatprep.subr.bf16.mxu0 0
    %3799 = vmatpush1.bf16.xpose.msra.mxu0 0
    %3800 = vmatprep.mubr.bf16.mxu0 0
    %3801 = vmatmul.mubr.bf16.gmra.mrb[0].mxu0 %v2908
    %v3802 = vpop.f32.mrb[0].mxu0
    %v3803 = vadd.f32 0.0, %v3802
    %v3804 = vpop.f32.mrb[0].mxu0
    %v3805 = vpop.f32.mrb[0].mxu0
    %v3806 = vpop.f32.mrb[0].mxu0
    %3807 = vdwg.mxu0
    %3808 = vmatprep.subr.bf16.mxu0 0
    %3809 = vmatpush1.bf16.xpose.msra.mxu0 %v2996
    %3810 = vmatprep.subr.bf16.mxu0 0
    %3811 = vmatpush1.bf16.xpose.msra.mxu0 %v2997
    %3812 = vmatprep.subr.bf16.mxu0 0
    %3813 = vmatpush1.bf16.xpose.msra.mxu0 0
    %3814 = vmatprep.subr.bf16.mxu0 0
    %3815 = vmatpush1.bf16.xpose.msra.mxu0 0
    %3816 = vmatprep.subr.bf16.mxu0 0
    %3817 = vmatpush1.bf16.xpose.msra.mxu0 0
    %3818 = vmatprep.subr.bf16.mxu0 0
    %3819 = vmatpush1.bf16.xpose.msra.mxu0 0
    %3820 = vmatprep.subr.bf16.mxu0 0
    %3821 = vmatpush1.bf16.xpose.msra.mxu0 0
    %3822 = vmatprep.subr.bf16.mxu0 0
    %3823 = vmatpush1.bf16.xpose.msra.mxu0 0
    %3824 = vmatprep.subr.bf16.mxu0 0
    %3825 = vmatpush1.bf16.xpose.msra.mxu0 0
    %3826 = vmatprep.subr.bf16.mxu0 0
    %3827 = vmatpush1.bf16.xpose.msra.mxu0 0
    %3828 = vmatprep.subr.bf16.mxu0 0
    %3829 = vmatpush1.bf16.xpose.msra.mxu0 0
    %3830 = vmatprep.subr.bf16.mxu0 0
    %3831 = vmatpush1.bf16.xpose.msra.mxu0 0
    %3832 = vmatprep.subr.bf16.mxu0 0
    %3833 = vmatpush1.bf16.xpose.msra.mxu0 0
    %3834 = vmatprep.subr.bf16.mxu0 0
    %3835 = vmatpush1.bf16.xpose.msra.mxu0 0
    %3836 = vmatprep.subr.bf16.mxu0 0
    %3837 = vmatpush1.bf16.xpose.msra.mxu0 0
    %3838 = vmatprep.subr.bf16.mxu0 0
    %3839 = vmatpush1.bf16.xpose.msra.mxu0 0
    %3840 = vmatprep.mubr.bf16.mxu0 0
    %3841 = vmatmul.mubr.bf16.gmra.mrb[0].mxu0 %v2909
    %v3842 = vpop.f32.mrb[0].mxu0
    %v3843 = vadd.f32 0.0, %v3842
    %v3844 = vpop.f32.mrb[0].mxu0
    %v3845 = vpop.f32.mrb[0].mxu0
    %v3846 = vpop.f32.mrb[0].mxu0
    %3847 = vdwg.mxu0
    %3848 = vmatprep.subr.bf16.mxu0 0
    %3849 = vmatpush1.bf16.xpose.msra.mxu0 %v2998
    %3850 = vmatprep.subr.bf16.mxu0 0
    %3851 = vmatpush1.bf16.xpose.msra.mxu0 %v2999
    %3852 = vmatprep.subr.bf16.mxu0 0
    %3853 = vmatpush1.bf16.xpose.msra.mxu0 0
    %3854 = vmatprep.subr.bf16.mxu0 0
    %3855 = vmatpush1.bf16.xpose.msra.mxu0 0
    %3856 = vmatprep.subr.bf16.mxu0 0
    %3857 = vmatpush1.bf16.xpose.msra.mxu0 0
    %3858 = vmatprep.subr.bf16.mxu0 0
    %3859 = vmatpush1.bf16.xpose.msra.mxu0 0
    %3860 = vmatprep.subr.bf16.mxu0 0
    %3861 = vmatpush1.bf16.xpose.msra.mxu0 0
    %3862 = vmatprep.subr.bf16.mxu0 0
    %3863 = vmatpush1.bf16.xpose.msra.mxu0 0
    %3864 = vmatprep.subr.bf16.mxu0 0
    %3865 = vmatpush1.bf16.xpose.msra.mxu0 0
    %3866 = vmatprep.subr.bf16.mxu0 0
    %3867 = vmatpush1.bf16.xpose.msra.mxu0 0
    %3868 = vmatprep.subr.bf16.mxu0 0
    %3869 = vmatpush1.bf16.xpose.msra.mxu0 0
    %3870 = vmatprep.subr.bf16.mxu0 0
    %3871 = vmatpush1.bf16.xpose.msra.mxu0 0
    %3872 = vmatprep.subr.bf16.mxu0 0
    %3873 = vmatpush1.bf16.xpose.msra.mxu0 0
    %3874 = vmatprep.subr.bf16.mxu0 0
    %3875 = vmatpush1.bf16.xpose.msra.mxu0 0
    %3876 = vmatprep.subr.bf16.mxu0 0
    %3877 = vmatpush1.bf16.xpose.msra.mxu0 0
    %3878 = vmatprep.subr.bf16.mxu0 0
    %3879 = vmatpush1.bf16.xpose.msra.mxu0 0
    %3880 = vmatprep.mubr.bf16.mxu0 0
    %3881 = vmatmul.mubr.bf16.gmra.mrb[0].mxu0 %v2910
    %v3882 = vpop.f32.mrb[0].mxu0
    %v3883 = vadd.f32 0.0, %v3882
    %v3884 = vpop.f32.mrb[0].mxu0
    %v3885 = vpop.f32.mrb[0].mxu0
    %v3886 = vpop.f32.mrb[0].mxu0
    %3887 = vdwg.mxu0
    %3888 = vmatprep.subr.bf16.mxu0 0
    %3889 = vmatpush1.bf16.xpose.msra.mxu0 %v3000
    %3890 = vmatprep.subr.bf16.mxu0 0
    %3891 = vmatpush1.bf16.xpose.msra.mxu0 %v3001
    %3892 = vmatprep.subr.bf16.mxu0 0
    %3893 = vmatpush1.bf16.xpose.msra.mxu0 0
    %3894 = vmatprep.subr.bf16.mxu0 0
    %3895 = vmatpush1.bf16.xpose.msra.mxu0 0
    %3896 = vmatprep.subr.bf16.mxu0 0
    %3897 = vmatpush1.bf16.xpose.msra.mxu0 0
    %3898 = vmatprep.subr.bf16.mxu0 0
    %3899 = vmatpush1.bf16.xpose.msra.mxu0 0
    %3900 = vmatprep.subr.bf16.mxu0 0
    %3901 = vmatpush1.bf16.xpose.msra.mxu0 0
    %3902 = vmatprep.subr.bf16.mxu0 0
    %3903 = vmatpush1.bf16.xpose.msra.mxu0 0
    %3904 = vmatprep.subr.bf16.mxu0 0
    %3905 = vmatpush1.bf16.xpose.msra.mxu0 0
    %3906 = vmatprep.subr.bf16.mxu0 0
    %3907 = vmatpush1.bf16.xpose.msra.mxu0 0
    %3908 = vmatprep.subr.bf16.mxu0 0
    %3909 = vmatpush1.bf16.xpose.msra.mxu0 0
    %3910 = vmatprep.subr.bf16.mxu0 0
    %3911 = vmatpush1.bf16.xpose.msra.mxu0 0
    %3912 = vmatprep.subr.bf16.mxu0 0
    %3913 = vmatpush1.bf16.xpose.msra.mxu0 0
    %3914 = vmatprep.subr.bf16.mxu0 0
    %3915 = vmatpush1.bf16.xpose.msra.mxu0 0
    %3916 = vmatprep.subr.bf16.mxu0 0
    %3917 = vmatpush1.bf16.xpose.msra.mxu0 0
    %3918 = vmatprep.subr.bf16.mxu0 0
    %3919 = vmatpush1.bf16.xpose.msra.mxu0 0
    %3920 = vmatprep.mubr.bf16.mxu0 0
    %3921 = vmatmul.mubr.bf16.gmra.mrb[0].mxu0 %v2911
    %v3922 = vpop.f32.mrb[0].mxu0
    %v3923 = vadd.f32 0.0, %v3922
    %v3924 = vpop.f32.mrb[0].mxu0
    %v3925 = vpop.f32.mrb[0].mxu0
    %v3926 = vpop.f32.mrb[0].mxu0
    %3927 = vdwg.mxu0
    %3928 = vmatprep.subr.bf16.mxu0 0
    %3929 = vmatpush1.bf16.xpose.msra.mxu0 %v3002
    %3930 = vmatprep.subr.bf16.mxu0 0
    %3931 = vmatpush1.bf16.xpose.msra.mxu0 %v3003
    %3932 = vmatprep.subr.bf16.mxu0 0
    %3933 = vmatpush1.bf16.xpose.msra.mxu0 0
    %3934 = vmatprep.subr.bf16.mxu0 0
    %3935 = vmatpush1.bf16.xpose.msra.mxu0 0
    %3936 = vmatprep.subr.bf16.mxu0 0
    %3937 = vmatpush1.bf16.xpose.msra.mxu0 0
    %3938 = vmatprep.subr.bf16.mxu0 0
    %3939 = vmatpush1.bf16.xpose.msra.mxu0 0
    %3940 = vmatprep.subr.bf16.mxu0 0
    %3941 = vmatpush1.bf16.xpose.msra.mxu0 0
    %3942 = vmatprep.subr.bf16.mxu0 0
    %3943 = vmatpush1.bf16.xpose.msra.mxu0 0
    %3944 = vmatprep.subr.bf16.mxu0 0
    %3945 = vmatpush1.bf16.xpose.msra.mxu0 0
    %3946 = vmatprep.subr.bf16.mxu0 0
    %3947 = vmatpush1.bf16.xpose.msra.mxu0 0
    %3948 = vmatprep.subr.bf16.mxu0 0
    %3949 = vmatpush1.bf16.xpose.msra.mxu0 0
    %3950 = vmatprep.subr.bf16.mxu0 0
    %3951 = vmatpush1.bf16.xpose.msra.mxu0 0
    %3952 = vmatprep.subr.bf16.mxu0 0
    %3953 = vmatpush1.bf16.xpose.msra.mxu0 0
    %3954 = vmatprep.subr.bf16.mxu0 0
    %3955 = vmatpush1.bf16.xpose.msra.mxu0 0
    %3956 = vmatprep.subr.bf16.mxu0 0
    %3957 = vmatpush1.bf16.xpose.msra.mxu0 0
    %3958 = vmatprep.subr.bf16.mxu0 0
    %3959 = vmatpush1.bf16.xpose.msra.mxu0 0
    %3960 = vmatprep.mubr.bf16.mxu0 0
    %3961 = vmatmul.mubr.bf16.gmra.mrb[0].mxu0 %v2912
    %v3962 = vpop.f32.mrb[0].mxu0
    %v3963 = vadd.f32 0.0, %v3962
    %v3964 = vpop.f32.mrb[0].mxu0
    %v3965 = vpop.f32.mrb[0].mxu0
    %v3966 = vpop.f32.mrb[0].mxu0
    %3967 = vdwg.mxu0
    %3968 = vmatprep.subr.bf16.mxu0 0
    %3969 = vmatpush1.bf16.xpose.msra.mxu0 %v3004
    %3970 = vmatprep.subr.bf16.mxu0 0
    %3971 = vmatpush1.bf16.xpose.msra.mxu0 %v3005
    %3972 = vmatprep.subr.bf16.mxu0 0
    %3973 = vmatpush1.bf16.xpose.msra.mxu0 0
    %3974 = vmatprep.subr.bf16.mxu0 0
    %3975 = vmatpush1.bf16.xpose.msra.mxu0 0
    %3976 = vmatprep.subr.bf16.mxu0 0
    %3977 = vmatpush1.bf16.xpose.msra.mxu0 0
    %3978 = vmatprep.subr.bf16.mxu0 0
    %3979 = vmatpush1.bf16.xpose.msra.mxu0 0
    %3980 = vmatprep.subr.bf16.mxu0 0
    %3981 = vmatpush1.bf16.xpose.msra.mxu0 0
    %3982 = vmatprep.subr.bf16.mxu0 0
    %3983 = vmatpush1.bf16.xpose.msra.mxu0 0
    %3984 = vmatprep.subr.bf16.mxu0 0
    %3985 = vmatpush1.bf16.xpose.msra.mxu0 0
    %3986 = vmatprep.subr.bf16.mxu0 0
    %3987 = vmatpush1.bf16.xpose.msra.mxu0 0
    %3988 = vmatprep.subr.bf16.mxu0 0
    %3989 = vmatpush1.bf16.xpose.msra.mxu0 0
    %3990 = vmatprep.subr.bf16.mxu0 0
    %3991 = vmatpush1.bf16.xpose.msra.mxu0 0
    %3992 = vmatprep.subr.bf16.mxu0 0
    %3993 = vmatpush1.bf16.xpose.msra.mxu0 0
    %3994 = vmatprep.subr.bf16.mxu0 0
    %3995 = vmatpush1.bf16.xpose.msra.mxu0 0
    %3996 = vmatprep.subr.bf16.mxu0 0
    %3997 = vmatpush1.bf16.xpose.msra.mxu0 0
    %3998 = vmatprep.subr.bf16.mxu0 0
    %3999 = vmatpush1.bf16.xpose.msra.mxu0 0
    %4000 = vmatprep.mubr.bf16.mxu0 0
    %4001 = vmatmul.mubr.bf16.gmra.mrb[0].mxu0 %v2913
    %v4002 = vpop.f32.mrb[0].mxu0
    %v4003 = vadd.f32 0.0, %v4002
    %v4004 = vpop.f32.mrb[0].mxu0
    %v4005 = vpop.f32.mrb[0].mxu0
    %v4006 = vpop.f32.mrb[0].mxu0
    %4007 = vdwg.mxu0
    %4008 = vmatprep.subr.bf16.mxu0 0
    %4009 = vmatpush1.bf16.xpose.msra.mxu0 %v3006
    %4010 = vmatprep.subr.bf16.mxu0 0
    %4011 = vmatpush1.bf16.xpose.msra.mxu0 %v3007
    %4012 = vmatprep.subr.bf16.mxu0 0
    %4013 = vmatpush1.bf16.xpose.msra.mxu0 0
    %4014 = vmatprep.subr.bf16.mxu0 0
    %4015 = vmatpush1.bf16.xpose.msra.mxu0 0
    %4016 = vmatprep.subr.bf16.mxu0 0
    %4017 = vmatpush1.bf16.xpose.msra.mxu0 0
    %4018 = vmatprep.subr.bf16.mxu0 0
    %4019 = vmatpush1.bf16.xpose.msra.mxu0 0
    %4020 = vmatprep.subr.bf16.mxu0 0
    %4021 = vmatpush1.bf16.xpose.msra.mxu0 0
    %4022 = vmatprep.subr.bf16.mxu0 0
    %4023 = vmatpush1.bf16.xpose.msra.mxu0 0
    %4024 = vmatprep.subr.bf16.mxu0 0
    %4025 = vmatpush1.bf16.xpose.msra.mxu0 0
    %4026 = vmatprep.subr.bf16.mxu0 0
    %4027 = vmatpush1.bf16.xpose.msra.mxu0 0
    %4028 = vmatprep.subr.bf16.mxu0 0
    %4029 = vmatpush1.bf16.xpose.msra.mxu0 0
    %4030 = vmatprep.subr.bf16.mxu0 0
    %4031 = vmatpush1.bf16.xpose.msra.mxu0 0
    %4032 = vmatprep.subr.bf16.mxu0 0
    %4033 = vmatpush1.bf16.xpose.msra.mxu0 0
    %4034 = vmatprep.subr.bf16.mxu0 0
    %4035 = vmatpush1.bf16.xpose.msra.mxu0 0
    %4036 = vmatprep.subr.bf16.mxu0 0
    %4037 = vmatpush1.bf16.xpose.msra.mxu0 0
    %4038 = vmatprep.subr.bf16.mxu0 0
    %4039 = vmatpush1.bf16.xpose.msra.mxu0 0
    %4040 = vmatprep.mubr.bf16.mxu0 0
    %4041 = vmatmul.mubr.bf16.gmra.mrb[0].mxu0 %v2914
    %v4042 = vpop.f32.mrb[0].mxu0
    %v4043 = vadd.f32 0.0, %v4042
    %v4044 = vpop.f32.mrb[0].mxu0
    %v4045 = vpop.f32.mrb[0].mxu0
    %v4046 = vpop.f32.mrb[0].mxu0
    %4047 = vdwg.mxu0
    %4048 = vmatprep.subr.bf16.mxu0 0
    %4049 = vmatpush1.bf16.xpose.msra.mxu0 %v3008
    %4050 = vmatprep.subr.bf16.mxu0 0
    %4051 = vmatpush1.bf16.xpose.msra.mxu0 %v3009
    %4052 = vmatprep.subr.bf16.mxu0 0
    %4053 = vmatpush1.bf16.xpose.msra.mxu0 0
    %4054 = vmatprep.subr.bf16.mxu0 0
    %4055 = vmatpush1.bf16.xpose.msra.mxu0 0
    %4056 = vmatprep.subr.bf16.mxu0 0
    %4057 = vmatpush1.bf16.xpose.msra.mxu0 0
    %4058 = vmatprep.subr.bf16.mxu0 0
    %4059 = vmatpush1.bf16.xpose.msra.mxu0 0
    %4060 = vmatprep.subr.bf16.mxu0 0
    %4061 = vmatpush1.bf16.xpose.msra.mxu0 0
    %4062 = vmatprep.subr.bf16.mxu0 0
    %4063 = vmatpush1.bf16.xpose.msra.mxu0 0
    %4064 = vmatprep.subr.bf16.mxu0 0
    %4065 = vmatpush1.bf16.xpose.msra.mxu0 0
    %4066 = vmatprep.subr.bf16.mxu0 0
    %4067 = vmatpush1.bf16.xpose.msra.mxu0 0
    %4068 = vmatprep.subr.bf16.mxu0 0
    %4069 = vmatpush1.bf16.xpose.msra.mxu0 0
    %4070 = vmatprep.subr.bf16.mxu0 0
    %4071 = vmatpush1.bf16.xpose.msra.mxu0 0
    %4072 = vmatprep.subr.bf16.mxu0 0
    %4073 = vmatpush1.bf16.xpose.msra.mxu0 0
    %4074 = vmatprep.subr.bf16.mxu0 0
    %4075 = vmatpush1.bf16.xpose.msra.mxu0 0
    %4076 = vmatprep.subr.bf16.mxu0 0
    %4077 = vmatpush1.bf16.xpose.msra.mxu0 0
    %4078 = vmatprep.subr.bf16.mxu0 0
    %4079 = vmatpush1.bf16.xpose.msra.mxu0 0
    %4080 = vmatprep.mubr.bf16.mxu0 0
    %4081 = vmatmul.mubr.bf16.gmra.mrb[0].mxu0 %v2915
    %v4082 = vpop.f32.mrb[0].mxu0
    %v4083 = vadd.f32 0.0, %v4082
    %v4084 = vpop.f32.mrb[0].mxu0
    %v4085 = vpop.f32.mrb[0].mxu0
    %v4086 = vpop.f32.mrb[0].mxu0
    %4087 = vdwg.mxu0
    %4088 = vmatprep.subr.bf16.mxu0 0
    %4089 = vmatpush1.bf16.xpose.msra.mxu0 %v3010
    %4090 = vmatprep.subr.bf16.mxu0 0
    %4091 = vmatpush1.bf16.xpose.msra.mxu0 %v3011
    %4092 = vmatprep.subr.bf16.mxu0 0
    %4093 = vmatpush1.bf16.xpose.msra.mxu0 0
    %4094 = vmatprep.subr.bf16.mxu0 0
    %4095 = vmatpush1.bf16.xpose.msra.mxu0 0
    %4096 = vmatprep.subr.bf16.mxu0 0
    %4097 = vmatpush1.bf16.xpose.msra.mxu0 0
    %4098 = vmatprep.subr.bf16.mxu0 0
    %4099 = vmatpush1.bf16.xpose.msra.mxu0 0
    %4100 = vmatprep.subr.bf16.mxu0 0
    %4101 = vmatpush1.bf16.xpose.msra.mxu0 0
    %4102 = vmatprep.subr.bf16.mxu0 0
    %4103 = vmatpush1.bf16.xpose.msra.mxu0 0
    %4104 = vmatprep.subr.bf16.mxu0 0
    %4105 = vmatpush1.bf16.xpose.msra.mxu0 0
    %4106 = vmatprep.subr.bf16.mxu0 0
    %4107 = vmatpush1.bf16.xpose.msra.mxu0 0
    %4108 = vmatprep.subr.bf16.mxu0 0
    %4109 = vmatpush1.bf16.xpose.msra.mxu0 0
    %4110 = vmatprep.subr.bf16.mxu0 0
    %4111 = vmatpush1.bf16.xpose.msra.mxu0 0
    %4112 = vmatprep.subr.bf16.mxu0 0
    %4113 = vmatpush1.bf16.xpose.msra.mxu0 0
    %4114 = vmatprep.subr.bf16.mxu0 0
    %4115 = vmatpush1.bf16.xpose.msra.mxu0 0
    %4116 = vmatprep.subr.bf16.mxu0 0
    %4117 = vmatpush1.bf16.xpose.msra.mxu0 0
    %4118 = vmatprep.subr.bf16.mxu0 0
    %4119 = vmatpush1.bf16.xpose.msra.mxu0 0
    %4120 = vmatprep.mubr.bf16.mxu0 0
    %4121 = vmatmul.mubr.bf16.gmra.mrb[0].mxu0 %v2916
    %v4122 = vpop.f32.mrb[0].mxu0
    %v4123 = vadd.f32 0.0, %v4122
    %v4124 = vpop.f32.mrb[0].mxu0
    %v4125 = vpop.f32.mrb[0].mxu0
    %v4126 = vpop.f32.mrb[0].mxu0
    %4127 = vdwg.mxu0
    %4128 = vmatprep.subr.bf16.mxu0 0
    %4129 = vmatpush1.bf16.xpose.msra.mxu0 %v3012
    %4130 = vmatprep.subr.bf16.mxu0 0
    %4131 = vmatpush1.bf16.xpose.msra.mxu0 %v3013
    %4132 = vmatprep.subr.bf16.mxu0 0
    %4133 = vmatpush1.bf16.xpose.msra.mxu0 0
    %4134 = vmatprep.subr.bf16.mxu0 0
    %4135 = vmatpush1.bf16.xpose.msra.mxu0 0
    %4136 = vmatprep.subr.bf16.mxu0 0
    %4137 = vmatpush1.bf16.xpose.msra.mxu0 0
    %4138 = vmatprep.subr.bf16.mxu0 0
    %4139 = vmatpush1.bf16.xpose.msra.mxu0 0
    %4140 = vmatprep.subr.bf16.mxu0 0
    %4141 = vmatpush1.bf16.xpose.msra.mxu0 0
    %4142 = vmatprep.subr.bf16.mxu0 0
    %4143 = vmatpush1.bf16.xpose.msra.mxu0 0
    %4144 = vmatprep.subr.bf16.mxu0 0
    %4145 = vmatpush1.bf16.xpose.msra.mxu0 0
    %4146 = vmatprep.subr.bf16.mxu0 0
    %4147 = vmatpush1.bf16.xpose.msra.mxu0 0
    %4148 = vmatprep.subr.bf16.mxu0 0
    %4149 = vmatpush1.bf16.xpose.msra.mxu0 0
    %4150 = vmatprep.subr.bf16.mxu0 0
    %4151 = vmatpush1.bf16.xpose.msra.mxu0 0
    %4152 = vmatprep.subr.bf16.mxu0 0
    %4153 = vmatpush1.bf16.xpose.msra.mxu0 0
    %4154 = vmatprep.subr.bf16.mxu0 0
    %4155 = vmatpush1.bf16.xpose.msra.mxu0 0
    %4156 = vmatprep.subr.bf16.mxu0 0
    %4157 = vmatpush1.bf16.xpose.msra.mxu0 0
    %4158 = vmatprep.subr.bf16.mxu0 0
    %4159 = vmatpush1.bf16.xpose.msra.mxu0 0
    %4160 = vmatprep.mubr.bf16.mxu0 0
    %4161 = vmatmul.mubr.bf16.gmra.mrb[0].mxu0 %v2917
    %v4162 = vpop.f32.mrb[0].mxu0
    %v4163 = vadd.f32 0.0, %v4162
    %v4164 = vpop.f32.mrb[0].mxu0
    %v4165 = vpop.f32.mrb[0].mxu0
    %v4166 = vpop.f32.mrb[0].mxu0
    %4167 = vdwg.mxu0
    %4168 = vmatprep.subr.bf16.mxu0 0
    %4169 = vmatpush1.bf16.xpose.msra.mxu0 %v3014
    %4170 = vmatprep.subr.bf16.mxu0 0
    %4171 = vmatpush1.bf16.xpose.msra.mxu0 %v3015
    %4172 = vmatprep.subr.bf16.mxu0 0
    %4173 = vmatpush1.bf16.xpose.msra.mxu0 0
    %4174 = vmatprep.subr.bf16.mxu0 0
    %4175 = vmatpush1.bf16.xpose.msra.mxu0 0
    %4176 = vmatprep.subr.bf16.mxu0 0
    %4177 = vmatpush1.bf16.xpose.msra.mxu0 0
    %4178 = vmatprep.subr.bf16.mxu0 0
    %4179 = vmatpush1.bf16.xpose.msra.mxu0 0
    %4180 = vmatprep.subr.bf16.mxu0 0
    %4181 = vmatpush1.bf16.xpose.msra.mxu0 0
    %4182 = vmatprep.subr.bf16.mxu0 0
    %4183 = vmatpush1.bf16.xpose.msra.mxu0 0
    %4184 = vmatprep.subr.bf16.mxu0 0
    %4185 = vmatpush1.bf16.xpose.msra.mxu0 0
    %4186 = vmatprep.subr.bf16.mxu0 0
    %4187 = vmatpush1.bf16.xpose.msra.mxu0 0
    %4188 = vmatprep.subr.bf16.mxu0 0
    %4189 = vmatpush1.bf16.xpose.msra.mxu0 0
    %4190 = vmatprep.subr.bf16.mxu0 0
    %4191 = vmatpush1.bf16.xpose.msra.mxu0 0
    %4192 = vmatprep.subr.bf16.mxu0 0
    %4193 = vmatpush1.bf16.xpose.msra.mxu0 0
    %4194 = vmatprep.subr.bf16.mxu0 0
    %4195 = vmatpush1.bf16.xpose.msra.mxu0 0
    %4196 = vmatprep.subr.bf16.mxu0 0
    %4197 = vmatpush1.bf16.xpose.msra.mxu0 0
    %4198 = vmatprep.subr.bf16.mxu0 0
    %4199 = vmatpush1.bf16.xpose.msra.mxu0 0
    %4200 = vmatprep.mubr.bf16.mxu0 0
    %4201 = vmatmul.mubr.bf16.gmra.mrb[0].mxu0 %v2918
    %v4202 = vpop.f32.mrb[0].mxu0
    %v4203 = vadd.f32 0.0, %v4202
    %v4204 = vpop.f32.mrb[0].mxu0
    %v4205 = vpop.f32.mrb[0].mxu0
    %v4206 = vpop.f32.mrb[0].mxu0
    %4207 = vdwg.mxu0
    %4208 = vmatprep.subr.bf16.mxu0 0
    %4209 = vmatpush1.bf16.xpose.msra.mxu0 %v3016
    %4210 = vmatprep.subr.bf16.mxu0 0
    %4211 = vmatpush1.bf16.xpose.msra.mxu0 %v3017
    %4212 = vmatprep.subr.bf16.mxu0 0
    %4213 = vmatpush1.bf16.xpose.msra.mxu0 0
    %4214 = vmatprep.subr.bf16.mxu0 0
    %4215 = vmatpush1.bf16.xpose.msra.mxu0 0
    %4216 = vmatprep.subr.bf16.mxu0 0
    %4217 = vmatpush1.bf16.xpose.msra.mxu0 0
    %4218 = vmatprep.subr.bf16.mxu0 0
    %4219 = vmatpush1.bf16.xpose.msra.mxu0 0
    %4220 = vmatprep.subr.bf16.mxu0 0
    %4221 = vmatpush1.bf16.xpose.msra.mxu0 0
    %4222 = vmatprep.subr.bf16.mxu0 0
    %4223 = vmatpush1.bf16.xpose.msra.mxu0 0
    %4224 = vmatprep.subr.bf16.mxu0 0
    %4225 = vmatpush1.bf16.xpose.msra.mxu0 0
    %4226 = vmatprep.subr.bf16.mxu0 0
    %4227 = vmatpush1.bf16.xpose.msra.mxu0 0
    %4228 = vmatprep.subr.bf16.mxu0 0
    %4229 = vmatpush1.bf16.xpose.msra.mxu0 0
    %4230 = vmatprep.subr.bf16.mxu0 0
    %4231 = vmatpush1.bf16.xpose.msra.mxu0 0
    %4232 = vmatprep.subr.bf16.mxu0 0
    %4233 = vmatpush1.bf16.xpose.msra.mxu0 0
    %4234 = vmatprep.subr.bf16.mxu0 0
    %4235 = vmatpush1.bf16.xpose.msra.mxu0 0
    %4236 = vmatprep.subr.bf16.mxu0 0
    %4237 = vmatpush1.bf16.xpose.msra.mxu0 0
    %4238 = vmatprep.subr.bf16.mxu0 0
    %4239 = vmatpush1.bf16.xpose.msra.mxu0 0
    %4240 = vmatprep.mubr.bf16.mxu0 0
    %4241 = vmatmul.mubr.bf16.gmra.mrb[0].mxu0 %v2919
    %v4242 = vpop.f32.mrb[0].mxu0
    %v4243 = vadd.f32 0.0, %v4242
    %v4244 = vpop.f32.mrb[0].mxu0
    %v4245 = vpop.f32.mrb[0].mxu0
    %v4246 = vpop.f32.mrb[0].mxu0
    %4247 = vdwg.mxu0
    %4248 = vmatprep.subr.bf16.mxu0 0
    %4249 = vmatpush1.bf16.xpose.msra.mxu0 %v3018
    %4250 = vmatprep.subr.bf16.mxu0 0
    %4251 = vmatpush1.bf16.xpose.msra.mxu0 %v3019
    %4252 = vmatprep.subr.bf16.mxu0 0
    %4253 = vmatpush1.bf16.xpose.msra.mxu0 0
    %4254 = vmatprep.subr.bf16.mxu0 0
    %4255 = vmatpush1.bf16.xpose.msra.mxu0 0
    %4256 = vmatprep.subr.bf16.mxu0 0
    %4257 = vmatpush1.bf16.xpose.msra.mxu0 0
    %4258 = vmatprep.subr.bf16.mxu0 0
    %4259 = vmatpush1.bf16.xpose.msra.mxu0 0
    %4260 = vmatprep.subr.bf16.mxu0 0
    %4261 = vmatpush1.bf16.xpose.msra.mxu0 0
    %4262 = vmatprep.subr.bf16.mxu0 0
    %4263 = vmatpush1.bf16.xpose.msra.mxu0 0
    %4264 = vmatprep.subr.bf16.mxu0 0
    %4265 = vmatpush1.bf16.xpose.msra.mxu0 0
    %4266 = vmatprep.subr.bf16.mxu0 0
    %4267 = vmatpush1.bf16.xpose.msra.mxu0 0
    %4268 = vmatprep.subr.bf16.mxu0 0
    %4269 = vmatpush1.bf16.xpose.msra.mxu0 0
    %4270 = vmatprep.subr.bf16.mxu0 0
    %4271 = vmatpush1.bf16.xpose.msra.mxu0 0
    %4272 = vmatprep.subr.bf16.mxu0 0
    %4273 = vmatpush1.bf16.xpose.msra.mxu0 0
    %4274 = vmatprep.subr.bf16.mxu0 0
    %4275 = vmatpush1.bf16.xpose.msra.mxu0 0
    %4276 = vmatprep.subr.bf16.mxu0 0
    %4277 = vmatpush1.bf16.xpose.msra.mxu0 0
    %4278 = vmatprep.subr.bf16.mxu0 0
    %4279 = vmatpush1.bf16.xpose.msra.mxu0 0
    %4280 = vmatprep.mubr.bf16.mxu0 0
    %4281 = vmatmul.mubr.bf16.gmra.mrb[0].mxu0 %v2920
    %v4282 = vpop.f32.mrb[0].mxu0
    %v4283 = vadd.f32 0.0, %v4282
    %v4284 = vpop.f32.mrb[0].mxu0
    %v4285 = vpop.f32.mrb[0].mxu0
    %v4286 = vpop.f32.mrb[0].mxu0
    %4287 = vdwg.mxu0
    %4288 = vmatprep.subr.bf16.mxu0 0
    %4289 = vmatpush1.bf16.xpose.msra.mxu0 %v3020
    %4290 = vmatprep.subr.bf16.mxu0 0
    %4291 = vmatpush1.bf16.xpose.msra.mxu0 %v3021
    %4292 = vmatprep.subr.bf16.mxu0 0
    %4293 = vmatpush1.bf16.xpose.msra.mxu0 0
    %4294 = vmatprep.subr.bf16.mxu0 0
    %4295 = vmatpush1.bf16.xpose.msra.mxu0 0
    %4296 = vmatprep.subr.bf16.mxu0 0
    %4297 = vmatpush1.bf16.xpose.msra.mxu0 0
    %4298 = vmatprep.subr.bf16.mxu0 0
    %4299 = vmatpush1.bf16.xpose.msra.mxu0 0
    %4300 = vmatprep.subr.bf16.mxu0 0
    %4301 = vmatpush1.bf16.xpose.msra.mxu0 0
    %4302 = vmatprep.subr.bf16.mxu0 0
    %4303 = vmatpush1.bf16.xpose.msra.mxu0 0
    %4304 = vmatprep.subr.bf16.mxu0 0
    %4305 = vmatpush1.bf16.xpose.msra.mxu0 0
    %4306 = vmatprep.subr.bf16.mxu0 0
    %4307 = vmatpush1.bf16.xpose.msra.mxu0 0
    %4308 = vmatprep.subr.bf16.mxu0 0
    %4309 = vmatpush1.bf16.xpose.msra.mxu0 0
    %4310 = vmatprep.subr.bf16.mxu0 0
    %4311 = vmatpush1.bf16.xpose.msra.mxu0 0
    %4312 = vmatprep.subr.bf16.mxu0 0
    %4313 = vmatpush1.bf16.xpose.msra.mxu0 0
    %4314 = vmatprep.subr.bf16.mxu0 0
    %4315 = vmatpush1.bf16.xpose.msra.mxu0 0
    %4316 = vmatprep.subr.bf16.mxu0 0
    %4317 = vmatpush1.bf16.xpose.msra.mxu0 0
    %4318 = vmatprep.subr.bf16.mxu0 0
    %4319 = vmatpush1.bf16.xpose.msra.mxu0 0
    %4320 = vmatprep.mubr.bf16.mxu0 0
    %4321 = vmatmul.mubr.bf16.gmra.mrb[0].mxu0 %v2921
    %v4322 = vpop.f32.mrb[0].mxu0
    %v4323 = vadd.f32 0.0, %v4322
    %v4324 = vpop.f32.mrb[0].mxu0
    %v4325 = vpop.f32.mrb[0].mxu0
    %v4326 = vpop.f32.mrb[0].mxu0
    %4327 = vdwg.mxu0
    %4328 = vmatprep.subr.bf16.mxu0 0
    %4329 = vmatpush1.bf16.xpose.msra.mxu0 %v3022
    %4330 = vmatprep.subr.bf16.mxu0 0
    %4331 = vmatpush1.bf16.xpose.msra.mxu0 %v3023
    %4332 = vmatprep.subr.bf16.mxu0 0
    %4333 = vmatpush1.bf16.xpose.msra.mxu0 0
    %4334 = vmatprep.subr.bf16.mxu0 0
    %4335 = vmatpush1.bf16.xpose.msra.mxu0 0
    %4336 = vmatprep.subr.bf16.mxu0 0
    %4337 = vmatpush1.bf16.xpose.msra.mxu0 0
    %4338 = vmatprep.subr.bf16.mxu0 0
    %4339 = vmatpush1.bf16.xpose.msra.mxu0 0
    %4340 = vmatprep.subr.bf16.mxu0 0
    %4341 = vmatpush1.bf16.xpose.msra.mxu0 0
    %4342 = vmatprep.subr.bf16.mxu0 0
    %4343 = vmatpush1.bf16.xpose.msra.mxu0 0
    %4344 = vmatprep.subr.bf16.mxu0 0
    %4345 = vmatpush1.bf16.xpose.msra.mxu0 0
    %4346 = vmatprep.subr.bf16.mxu0 0
    %4347 = vmatpush1.bf16.xpose.msra.mxu0 0
    %4348 = vmatprep.subr.bf16.mxu0 0
    %4349 = vmatpush1.bf16.xpose.msra.mxu0 0
    %4350 = vmatprep.subr.bf16.mxu0 0
    %4351 = vmatpush1.bf16.xpose.msra.mxu0 0
    %4352 = vmatprep.subr.bf16.mxu0 0
    %4353 = vmatpush1.bf16.xpose.msra.mxu0 0
    %4354 = vmatprep.subr.bf16.mxu0 0
    %4355 = vmatpush1.bf16.xpose.msra.mxu0 0
    %4356 = vmatprep.subr.bf16.mxu0 0
    %4357 = vmatpush1.bf16.xpose.msra.mxu0 0
    %4358 = vmatprep.subr.bf16.mxu0 0
    %4359 = vmatpush1.bf16.xpose.msra.mxu0 0
    %4360 = vmatprep.mubr.bf16.mxu0 0
    %4361 = vmatmul.mubr.bf16.gmra.mrb[0].mxu0 %v2922
    %v4362 = vpop.f32.mrb[0].mxu0
    %v4363 = vadd.f32 0.0, %v4362
    %v4364 = vpop.f32.mrb[0].mxu0
    %v4365 = vpop.f32.mrb[0].mxu0
    %v4366 = vpop.f32.mrb[0].mxu0
    %4367 = vdwg.mxu0
    %4368 = vmatprep.subr.bf16.mxu0 0
    %4369 = vmatpush1.bf16.xpose.msra.mxu0 %v3024
    %4370 = vmatprep.subr.bf16.mxu0 0
    %4371 = vmatpush1.bf16.xpose.msra.mxu0 %v3025
    %4372 = vmatprep.subr.bf16.mxu0 0
    %4373 = vmatpush1.bf16.xpose.msra.mxu0 0
    %4374 = vmatprep.subr.bf16.mxu0 0
    %4375 = vmatpush1.bf16.xpose.msra.mxu0 0
    %4376 = vmatprep.subr.bf16.mxu0 0
    %4377 = vmatpush1.bf16.xpose.msra.mxu0 0
    %4378 = vmatprep.subr.bf16.mxu0 0
    %4379 = vmatpush1.bf16.xpose.msra.mxu0 0
    %4380 = vmatprep.subr.bf16.mxu0 0
    %4381 = vmatpush1.bf16.xpose.msra.mxu0 0
    %4382 = vmatprep.subr.bf16.mxu0 0
    %4383 = vmatpush1.bf16.xpose.msra.mxu0 0
    %4384 = vmatprep.subr.bf16.mxu0 0
    %4385 = vmatpush1.bf16.xpose.msra.mxu0 0
    %4386 = vmatprep.subr.bf16.mxu0 0
    %4387 = vmatpush1.bf16.xpose.msra.mxu0 0
    %4388 = vmatprep.subr.bf16.mxu0 0
    %4389 = vmatpush1.bf16.xpose.msra.mxu0 0
    %4390 = vmatprep.subr.bf16.mxu0 0
    %4391 = vmatpush1.bf16.xpose.msra.mxu0 0
    %4392 = vmatprep.subr.bf16.mxu0 0
    %4393 = vmatpush1.bf16.xpose.msra.mxu0 0
    %4394 = vmatprep.subr.bf16.mxu0 0
    %4395 = vmatpush1.bf16.xpose.msra.mxu0 0
    %4396 = vmatprep.subr.bf16.mxu0 0
    %4397 = vmatpush1.bf16.xpose.msra.mxu0 0
    %4398 = vmatprep.subr.bf16.mxu0 0
    %4399 = vmatpush1.bf16.xpose.msra.mxu0 0
    %4400 = vmatprep.mubr.bf16.mxu0 0
    %4401 = vmatmul.mubr.bf16.gmra.mrb[0].mxu0 %v2923
    %v4402 = vpop.f32.mrb[0].mxu0
    %v4403 = vadd.f32 0.0, %v4402
    %v4404 = vpop.f32.mrb[0].mxu0
    %v4405 = vpop.f32.mrb[0].mxu0
    %v4406 = vpop.f32.mrb[0].mxu0
    %4407 = vdwg.mxu0
    %4408 = vmatprep.subr.bf16.mxu0 0
    %4409 = vmatpush1.bf16.xpose.msra.mxu0 %v3026
    %4410 = vmatprep.subr.bf16.mxu0 0
    %4411 = vmatpush1.bf16.xpose.msra.mxu0 %v3027
    %4412 = vmatprep.subr.bf16.mxu0 0
    %4413 = vmatpush1.bf16.xpose.msra.mxu0 0
    %4414 = vmatprep.subr.bf16.mxu0 0
    %4415 = vmatpush1.bf16.xpose.msra.mxu0 0
    %4416 = vmatprep.subr.bf16.mxu0 0
    %4417 = vmatpush1.bf16.xpose.msra.mxu0 0
    %4418 = vmatprep.subr.bf16.mxu0 0
    %4419 = vmatpush1.bf16.xpose.msra.mxu0 0
    %4420 = vmatprep.subr.bf16.mxu0 0
    %4421 = vmatpush1.bf16.xpose.msra.mxu0 0
    %4422 = vmatprep.subr.bf16.mxu0 0
    %4423 = vmatpush1.bf16.xpose.msra.mxu0 0
    %4424 = vmatprep.subr.bf16.mxu0 0
    %4425 = vmatpush1.bf16.xpose.msra.mxu0 0
    %4426 = vmatprep.subr.bf16.mxu0 0
    %4427 = vmatpush1.bf16.xpose.msra.mxu0 0
    %4428 = vmatprep.subr.bf16.mxu0 0
    %4429 = vmatpush1.bf16.xpose.msra.mxu0 0
    %4430 = vmatprep.subr.bf16.mxu0 0
    %4431 = vmatpush1.bf16.xpose.msra.mxu0 0
    %4432 = vmatprep.subr.bf16.mxu0 0
    %4433 = vmatpush1.bf16.xpose.msra.mxu0 0
    %4434 = vmatprep.subr.bf16.mxu0 0
    %4435 = vmatpush1.bf16.xpose.msra.mxu0 0
    %4436 = vmatprep.subr.bf16.mxu0 0
    %4437 = vmatpush1.bf16.xpose.msra.mxu0 0
    %4438 = vmatprep.subr.bf16.mxu0 0
    %4439 = vmatpush1.bf16.xpose.msra.mxu0 0
    %4440 = vmatprep.mubr.bf16.mxu0 0
    %4441 = vmatmul.mubr.bf16.gmra.mrb[0].mxu0 %v2924
    %v4442 = vpop.f32.mrb[0].mxu0
    %v4443 = vadd.f32 0.0, %v4442
    %v4444 = vpop.f32.mrb[0].mxu0
    %v4445 = vpop.f32.mrb[0].mxu0
    %v4446 = vpop.f32.mrb[0].mxu0
    %4447 = vdwg.mxu0
    %4448 = vmatprep.subr.bf16.mxu0 0
    %4449 = vmatpush1.bf16.xpose.msra.mxu0 %v3028
    %4450 = vmatprep.subr.bf16.mxu0 0
    %4451 = vmatpush1.bf16.xpose.msra.mxu0 %v3029
    %4452 = vmatprep.subr.bf16.mxu0 0
    %4453 = vmatpush1.bf16.xpose.msra.mxu0 0
    %4454 = vmatprep.subr.bf16.mxu0 0
    %4455 = vmatpush1.bf16.xpose.msra.mxu0 0
    %4456 = vmatprep.subr.bf16.mxu0 0
    %4457 = vmatpush1.bf16.xpose.msra.mxu0 0
    %4458 = vmatprep.subr.bf16.mxu0 0
    %4459 = vmatpush1.bf16.xpose.msra.mxu0 0
    %4460 = vmatprep.subr.bf16.mxu0 0
    %4461 = vmatpush1.bf16.xpose.msra.mxu0 0
    %4462 = vmatprep.subr.bf16.mxu0 0
    %4463 = vmatpush1.bf16.xpose.msra.mxu0 0
    %4464 = vmatprep.subr.bf16.mxu0 0
    %4465 = vmatpush1.bf16.xpose.msra.mxu0 0
    %4466 = vmatprep.subr.bf16.mxu0 0
    %4467 = vmatpush1.bf16.xpose.msra.mxu0 0
    %4468 = vmatprep.subr.bf16.mxu0 0
    %4469 = vmatpush1.bf16.xpose.msra.mxu0 0
    %4470 = vmatprep.subr.bf16.mxu0 0
    %4471 = vmatpush1.bf16.xpose.msra.mxu0 0
    %4472 = vmatprep.subr.bf16.mxu0 0
    %4473 = vmatpush1.bf16.xpose.msra.mxu0 0
    %4474 = vmatprep.subr.bf16.mxu0 0
    %4475 = vmatpush1.bf16.xpose.msra.mxu0 0
    %4476 = vmatprep.subr.bf16.mxu0 0
    %4477 = vmatpush1.bf16.xpose.msra.mxu0 0
    %4478 = vmatprep.subr.bf16.mxu0 0
    %4479 = vmatpush1.bf16.xpose.msra.mxu0 0
    %4480 = vmatprep.mubr.bf16.mxu0 0
    %4481 = vmatmul.mubr.bf16.gmra.mrb[0].mxu0 %v2925
    %v4482 = vpop.f32.mrb[0].mxu0
    %v4483 = vadd.f32 0.0, %v4482
    %v4484 = vpop.f32.mrb[0].mxu0
    %v4485 = vpop.f32.mrb[0].mxu0
    %v4486 = vpop.f32.mrb[0].mxu0
    %4487 = vdwg.mxu0
    %4488 = vmatprep.subr.bf16.mxu0 0
    %4489 = vmatpush1.bf16.xpose.msra.mxu0 %v3030
    %4490 = vmatprep.subr.bf16.mxu0 0
    %4491 = vmatpush1.bf16.xpose.msra.mxu0 %v3031
    %4492 = vmatprep.subr.bf16.mxu0 0
    %4493 = vmatpush1.bf16.xpose.msra.mxu0 0
    %4494 = vmatprep.subr.bf16.mxu0 0
    %4495 = vmatpush1.bf16.xpose.msra.mxu0 0
    %4496 = vmatprep.subr.bf16.mxu0 0
    %4497 = vmatpush1.bf16.xpose.msra.mxu0 0
    %4498 = vmatprep.subr.bf16.mxu0 0
    %4499 = vmatpush1.bf16.xpose.msra.mxu0 0
    %4500 = vmatprep.subr.bf16.mxu0 0
    %4501 = vmatpush1.bf16.xpose.msra.mxu0 0
    %4502 = vmatprep.subr.bf16.mxu0 0
    %4503 = vmatpush1.bf16.xpose.msra.mxu0 0
    %4504 = vmatprep.subr.bf16.mxu0 0
    %4505 = vmatpush1.bf16.xpose.msra.mxu0 0
    %4506 = vmatprep.subr.bf16.mxu0 0
    %4507 = vmatpush1.bf16.xpose.msra.mxu0 0
    %4508 = vmatprep.subr.bf16.mxu0 0
    %4509 = vmatpush1.bf16.xpose.msra.mxu0 0
    %4510 = vmatprep.subr.bf16.mxu0 0
    %4511 = vmatpush1.bf16.xpose.msra.mxu0 0
    %4512 = vmatprep.subr.bf16.mxu0 0
    %4513 = vmatpush1.bf16.xpose.msra.mxu0 0
    %4514 = vmatprep.subr.bf16.mxu0 0
    %4515 = vmatpush1.bf16.xpose.msra.mxu0 0
    %4516 = vmatprep.subr.bf16.mxu0 0
    %4517 = vmatpush1.bf16.xpose.msra.mxu0 0
    %4518 = vmatprep.subr.bf16.mxu0 0
    %4519 = vmatpush1.bf16.xpose.msra.mxu0 0
    %4520 = vmatprep.mubr.bf16.mxu0 0
    %4521 = vmatmul.mubr.bf16.gmra.mrb[0].mxu0 %v2926
    %v4522 = vpop.f32.mrb[0].mxu0
    %v4523 = vadd.f32 0.0, %v4522
    %v4524 = vpop.f32.mrb[0].mxu0
    %v4525 = vpop.f32.mrb[0].mxu0
    %v4526 = vpop.f32.mrb[0].mxu0
    %4527 = vdwg.mxu0
    %4528 = vmatprep.subr.bf16.mxu0 0
    %4529 = vmatpush1.bf16.xpose.msra.mxu0 %v3032
    %4530 = vmatprep.subr.bf16.mxu0 0
    %4531 = vmatpush1.bf16.xpose.msra.mxu0 %v3033
    %4532 = vmatprep.subr.bf16.mxu0 0
    %4533 = vmatpush1.bf16.xpose.msra.mxu0 0
    %4534 = vmatprep.subr.bf16.mxu0 0
    %4535 = vmatpush1.bf16.xpose.msra.mxu0 0
    %4536 = vmatprep.subr.bf16.mxu0 0
    %4537 = vmatpush1.bf16.xpose.msra.mxu0 0
    %4538 = vmatprep.subr.bf16.mxu0 0
    %4539 = vmatpush1.bf16.xpose.msra.mxu0 0
    %4540 = vmatprep.subr.bf16.mxu0 0
    %4541 = vmatpush1.bf16.xpose.msra.mxu0 0
    %4542 = vmatprep.subr.bf16.mxu0 0
    %4543 = vmatpush1.bf16.xpose.msra.mxu0 0
    %4544 = vmatprep.subr.bf16.mxu0 0
    %4545 = vmatpush1.bf16.xpose.msra.mxu0 0
    %4546 = vmatprep.subr.bf16.mxu0 0
    %4547 = vmatpush1.bf16.xpose.msra.mxu0 0
    %4548 = vmatprep.subr.bf16.mxu0 0
    %4549 = vmatpush1.bf16.xpose.msra.mxu0 0
    %4550 = vmatprep.subr.bf16.mxu0 0
    %4551 = vmatpush1.bf16.xpose.msra.mxu0 0
    %4552 = vmatprep.subr.bf16.mxu0 0
    %4553 = vmatpush1.bf16.xpose.msra.mxu0 0
    %4554 = vmatprep.subr.bf16.mxu0 0
    %4555 = vmatpush1.bf16.xpose.msra.mxu0 0
    %4556 = vmatprep.subr.bf16.mxu0 0
    %4557 = vmatpush1.bf16.xpose.msra.mxu0 0
    %4558 = vmatprep.subr.bf16.mxu0 0
    %4559 = vmatpush1.bf16.xpose.msra.mxu0 0
    %4560 = vmatprep.mubr.bf16.mxu0 0
    %4561 = vmatmul.mubr.bf16.gmra.mrb[0].mxu0 %v2927
    %v4562 = vpop.f32.mrb[0].mxu0
    %v4563 = vadd.f32 0.0, %v4562
    %v4564 = vpop.f32.mrb[0].mxu0
    %v4565 = vpop.f32.mrb[0].mxu0
    %v4566 = vpop.f32.mrb[0].mxu0
    %4567 = vdwg.mxu0
    %4568 = vmatprep.subr.bf16.mxu0 0
    %4569 = vmatpush1.bf16.xpose.msra.mxu0 %v3034
    %4570 = vmatprep.subr.bf16.mxu0 0
    %4571 = vmatpush1.bf16.xpose.msra.mxu0 %v3035
    %4572 = vmatprep.subr.bf16.mxu0 0
    %4573 = vmatpush1.bf16.xpose.msra.mxu0 0
    %4574 = vmatprep.subr.bf16.mxu0 0
    %4575 = vmatpush1.bf16.xpose.msra.mxu0 0
    %4576 = vmatprep.subr.bf16.mxu0 0
    %4577 = vmatpush1.bf16.xpose.msra.mxu0 0
    %4578 = vmatprep.subr.bf16.mxu0 0
    %4579 = vmatpush1.bf16.xpose.msra.mxu0 0
    %4580 = vmatprep.subr.bf16.mxu0 0
    %4581 = vmatpush1.bf16.xpose.msra.mxu0 0
    %4582 = vmatprep.subr.bf16.mxu0 0
    %4583 = vmatpush1.bf16.xpose.msra.mxu0 0
    %4584 = vmatprep.subr.bf16.mxu0 0
    %4585 = vmatpush1.bf16.xpose.msra.mxu0 0
    %4586 = vmatprep.subr.bf16.mxu0 0
    %4587 = vmatpush1.bf16.xpose.msra.mxu0 0
    %4588 = vmatprep.subr.bf16.mxu0 0
    %4589 = vmatpush1.bf16.xpose.msra.mxu0 0
    %4590 = vmatprep.subr.bf16.mxu0 0
    %4591 = vmatpush1.bf16.xpose.msra.mxu0 0
    %4592 = vmatprep.subr.bf16.mxu0 0
    %4593 = vmatpush1.bf16.xpose.msra.mxu0 0
    %4594 = vmatprep.subr.bf16.mxu0 0
    %4595 = vmatpush1.bf16.xpose.msra.mxu0 0
    %4596 = vmatprep.subr.bf16.mxu0 0
    %4597 = vmatpush1.bf16.xpose.msra.mxu0 0
    %4598 = vmatprep.subr.bf16.mxu0 0
    %4599 = vmatpush1.bf16.xpose.msra.mxu0 0
    %4600 = vmatprep.mubr.bf16.mxu0 0
    %4601 = vmatmul.mubr.bf16.gmra.mrb[0].mxu0 %v2928
    %v4602 = vpop.f32.mrb[0].mxu0
    %v4603 = vadd.f32 0.0, %v4602
    %v4604 = vpop.f32.mrb[0].mxu0
    %v4605 = vpop.f32.mrb[0].mxu0
    %v4606 = vpop.f32.mrb[0].mxu0
    %4607 = vdwg.mxu0
    %4608 = vmatprep.subr.bf16.mxu0 0
    %4609 = vmatpush1.bf16.xpose.msra.mxu0 %v3036
    %4610 = vmatprep.subr.bf16.mxu0 0
    %4611 = vmatpush1.bf16.xpose.msra.mxu0 %v3037
    %4612 = vmatprep.subr.bf16.mxu0 0
    %4613 = vmatpush1.bf16.xpose.msra.mxu0 0
    %4614 = vmatprep.subr.bf16.mxu0 0
    %4615 = vmatpush1.bf16.xpose.msra.mxu0 0
    %4616 = vmatprep.subr.bf16.mxu0 0
    %4617 = vmatpush1.bf16.xpose.msra.mxu0 0
    %4618 = vmatprep.subr.bf16.mxu0 0
    %4619 = vmatpush1.bf16.xpose.msra.mxu0 0
    %4620 = vmatprep.subr.bf16.mxu0 0
    %4621 = vmatpush1.bf16.xpose.msra.mxu0 0
    %4622 = vmatprep.subr.bf16.mxu0 0
    %4623 = vmatpush1.bf16.xpose.msra.mxu0 0
    %4624 = vmatprep.subr.bf16.mxu0 0
    %4625 = vmatpush1.bf16.xpose.msra.mxu0 0
    %4626 = vmatprep.subr.bf16.mxu0 0
    %4627 = vmatpush1.bf16.xpose.msra.mxu0 0
    %4628 = vmatprep.subr.bf16.mxu0 0
    %4629 = vmatpush1.bf16.xpose.msra.mxu0 0
    %4630 = vmatprep.subr.bf16.mxu0 0
    %4631 = vmatpush1.bf16.xpose.msra.mxu0 0
    %4632 = vmatprep.subr.bf16.mxu0 0
    %4633 = vmatpush1.bf16.xpose.msra.mxu0 0
    %4634 = vmatprep.subr.bf16.mxu0 0
    %4635 = vmatpush1.bf16.xpose.msra.mxu0 0
    %4636 = vmatprep.subr.bf16.mxu0 0
    %4637 = vmatpush1.bf16.xpose.msra.mxu0 0
    %4638 = vmatprep.subr.bf16.mxu0 0
    %4639 = vmatpush1.bf16.xpose.msra.mxu0 0
    %4640 = vmatprep.mubr.bf16.mxu0 0
    %4641 = vmatmul.mubr.bf16.gmra.mrb[0].mxu0 %v2929
    %v4642 = vpop.f32.mrb[0].mxu0
    %v4643 = vadd.f32 0.0, %v4642
    %v4644 = vpop.f32.mrb[0].mxu0
    %v4645 = vpop.f32.mrb[0].mxu0
    %v4646 = vpop.f32.mrb[0].mxu0
    %4647 = vdwg.mxu0
    %4648 = vmatprep.subr.bf16.mxu0 0
    %4649 = vmatpush1.bf16.xpose.msra.mxu0 %v3038
    %4650 = vmatprep.subr.bf16.mxu0 0
    %4651 = vmatpush1.bf16.xpose.msra.mxu0 %v3039
    %4652 = vmatprep.subr.bf16.mxu0 0
    %4653 = vmatpush1.bf16.xpose.msra.mxu0 0
    %4654 = vmatprep.subr.bf16.mxu0 0
    %4655 = vmatpush1.bf16.xpose.msra.mxu0 0
    %4656 = vmatprep.subr.bf16.mxu0 0
    %4657 = vmatpush1.bf16.xpose.msra.mxu0 0
    %4658 = vmatprep.subr.bf16.mxu0 0
    %4659 = vmatpush1.bf16.xpose.msra.mxu0 0
    %4660 = vmatprep.subr.bf16.mxu0 0
    %4661 = vmatpush1.bf16.xpose.msra.mxu0 0
    %4662 = vmatprep.subr.bf16.mxu0 0
    %4663 = vmatpush1.bf16.xpose.msra.mxu0 0
    %4664 = vmatprep.subr.bf16.mxu0 0
    %4665 = vmatpush1.bf16.xpose.msra.mxu0 0
    %4666 = vmatprep.subr.bf16.mxu0 0
    %4667 = vmatpush1.bf16.xpose.msra.mxu0 0
    %4668 = vmatprep.subr.bf16.mxu0 0
    %4669 = vmatpush1.bf16.xpose.msra.mxu0 0
    %4670 = vmatprep.subr.bf16.mxu0 0
    %4671 = vmatpush1.bf16.xpose.msra.mxu0 0
    %4672 = vmatprep.subr.bf16.mxu0 0
    %4673 = vmatpush1.bf16.xpose.msra.mxu0 0
    %4674 = vmatprep.subr.bf16.mxu0 0
    %4675 = vmatpush1.bf16.xpose.msra.mxu0 0
    %4676 = vmatprep.subr.bf16.mxu0 0
    %4677 = vmatpush1.bf16.xpose.msra.mxu0 0
    %4678 = vmatprep.subr.bf16.mxu0 0
    %4679 = vmatpush1.bf16.xpose.msra.mxu0 0
    %4680 = vmatprep.mubr.bf16.mxu0 0
    %4681 = vmatmul.mubr.bf16.gmra.mrb[0].mxu0 %v2930
    %v4682 = vpop.f32.mrb[0].mxu0
    %v4683 = vadd.f32 0.0, %v4682
    %v4684 = vpop.f32.mrb[0].mxu0
    %v4685 = vpop.f32.mrb[0].mxu0
    %v4686 = vpop.f32.mrb[0].mxu0
    %4687 = vdwg.mxu0
    %4688 = vmatprep.subr.bf16.mxu0 0
    %4689 = vmatpush1.bf16.xpose.msra.mxu0 %v3040
    %4690 = vmatprep.subr.bf16.mxu0 0
    %4691 = vmatpush1.bf16.xpose.msra.mxu0 %v3041
    %4692 = vmatprep.subr.bf16.mxu0 0
    %4693 = vmatpush1.bf16.xpose.msra.mxu0 0
    %4694 = vmatprep.subr.bf16.mxu0 0
    %4695 = vmatpush1.bf16.xpose.msra.mxu0 0
    %4696 = vmatprep.subr.bf16.mxu0 0
    %4697 = vmatpush1.bf16.xpose.msra.mxu0 0
    %4698 = vmatprep.subr.bf16.mxu0 0
    %4699 = vmatpush1.bf16.xpose.msra.mxu0 0
    %4700 = vmatprep.subr.bf16.mxu0 0
    %4701 = vmatpush1.bf16.xpose.msra.mxu0 0
    %4702 = vmatprep.subr.bf16.mxu0 0
    %4703 = vmatpush1.bf16.xpose.msra.mxu0 0
    %4704 = vmatprep.subr.bf16.mxu0 0
    %4705 = vmatpush1.bf16.xpose.msra.mxu0 0
    %4706 = vmatprep.subr.bf16.mxu0 0
    %4707 = vmatpush1.bf16.xpose.msra.mxu0 0
    %4708 = vmatprep.subr.bf16.mxu0 0
    %4709 = vmatpush1.bf16.xpose.msra.mxu0 0
    %4710 = vmatprep.subr.bf16.mxu0 0
    %4711 = vmatpush1.bf16.xpose.msra.mxu0 0
    %4712 = vmatprep.subr.bf16.mxu0 0
    %4713 = vmatpush1.bf16.xpose.msra.mxu0 0
    %4714 = vmatprep.subr.bf16.mxu0 0
    %4715 = vmatpush1.bf16.xpose.msra.mxu0 0
    %4716 = vmatprep.subr.bf16.mxu0 0
    %4717 = vmatpush1.bf16.xpose.msra.mxu0 0
    %4718 = vmatprep.subr.bf16.mxu0 0
    %4719 = vmatpush1.bf16.xpose.msra.mxu0 0
    %4720 = vmatprep.mubr.bf16.mxu0 0
    %4721 = vmatmul.mubr.bf16.gmra.mrb[0].mxu0 %v2931
    %v4722 = vpop.f32.mrb[0].mxu0
    %v4723 = vadd.f32 0.0, %v4722
    %v4724 = vpop.f32.mrb[0].mxu0
    %v4725 = vpop.f32.mrb[0].mxu0
    %v4726 = vpop.f32.mrb[0].mxu0
    %4727 = vdwg.mxu0
    %4728 = vmatprep.subr.bf16.mxu0 0
    %4729 = vmatpush1.bf16.xpose.msra.mxu0 %v3042
    %4730 = vmatprep.subr.bf16.mxu0 0
    %4731 = vmatpush1.bf16.xpose.msra.mxu0 %v3043
    %4732 = vmatprep.subr.bf16.mxu0 0
    %4733 = vmatpush1.bf16.xpose.msra.mxu0 0
    %4734 = vmatprep.subr.bf16.mxu0 0
    %4735 = vmatpush1.bf16.xpose.msra.mxu0 0
    %4736 = vmatprep.subr.bf16.mxu0 0
    %4737 = vmatpush1.bf16.xpose.msra.mxu0 0
    %4738 = vmatprep.subr.bf16.mxu0 0
    %4739 = vmatpush1.bf16.xpose.msra.mxu0 0
    %4740 = vmatprep.subr.bf16.mxu0 0
    %4741 = vmatpush1.bf16.xpose.msra.mxu0 0
    %4742 = vmatprep.subr.bf16.mxu0 0
    %4743 = vmatpush1.bf16.xpose.msra.mxu0 0
    %4744 = vmatprep.subr.bf16.mxu0 0
    %4745 = vmatpush1.bf16.xpose.msra.mxu0 0
    %4746 = vmatprep.subr.bf16.mxu0 0
    %4747 = vmatpush1.bf16.xpose.msra.mxu0 0
    %4748 = vmatprep.subr.bf16.mxu0 0
    %4749 = vmatpush1.bf16.xpose.msra.mxu0 0
    %4750 = vmatprep.subr.bf16.mxu0 0
    %4751 = vmatpush1.bf16.xpose.msra.mxu0 0
    %4752 = vmatprep.subr.bf16.mxu0 0
    %4753 = vmatpush1.bf16.xpose.msra.mxu0 0
    %4754 = vmatprep.subr.bf16.mxu0 0
    %4755 = vmatpush1.bf16.xpose.msra.mxu0 0
    %4756 = vmatprep.subr.bf16.mxu0 0
    %4757 = vmatpush1.bf16.xpose.msra.mxu0 0
    %4758 = vmatprep.subr.bf16.mxu0 0
    %4759 = vmatpush1.bf16.xpose.msra.mxu0 0
    %4760 = vmatprep.mubr.bf16.mxu0 0
    %4761 = vmatmul.mubr.bf16.gmra.mrb[0].mxu0 %v2932
    %v4762 = vpop.f32.mrb[0].mxu0
    %v4763 = vadd.f32 0.0, %v4762
    %v4764 = vpop.f32.mrb[0].mxu0
    %v4765 = vpop.f32.mrb[0].mxu0
    %v4766 = vpop.f32.mrb[0].mxu0
    %4767 = vdwg.mxu0
    %4768 = vmatprep.subr.bf16.mxu0 0
    %4769 = vmatpush1.bf16.xpose.msra.mxu0 %v3044
    %4770 = vmatprep.subr.bf16.mxu0 0
    %4771 = vmatpush1.bf16.xpose.msra.mxu0 %v3045
    %4772 = vmatprep.subr.bf16.mxu0 0
    %4773 = vmatpush1.bf16.xpose.msra.mxu0 0
    %4774 = vmatprep.subr.bf16.mxu0 0
    %4775 = vmatpush1.bf16.xpose.msra.mxu0 0
    %4776 = vmatprep.subr.bf16.mxu0 0
    %4777 = vmatpush1.bf16.xpose.msra.mxu0 0
    %4778 = vmatprep.subr.bf16.mxu0 0
    %4779 = vmatpush1.bf16.xpose.msra.mxu0 0
    %4780 = vmatprep.subr.bf16.mxu0 0
    %4781 = vmatpush1.bf16.xpose.msra.mxu0 0
    %4782 = vmatprep.subr.bf16.mxu0 0
    %4783 = vmatpush1.bf16.xpose.msra.mxu0 0
    %4784 = vmatprep.subr.bf16.mxu0 0
    %4785 = vmatpush1.bf16.xpose.msra.mxu0 0
    %4786 = vmatprep.subr.bf16.mxu0 0
    %4787 = vmatpush1.bf16.xpose.msra.mxu0 0
    %4788 = vmatprep.subr.bf16.mxu0 0
    %4789 = vmatpush1.bf16.xpose.msra.mxu0 0
    %4790 = vmatprep.subr.bf16.mxu0 0
    %4791 = vmatpush1.bf16.xpose.msra.mxu0 0
    %4792 = vmatprep.subr.bf16.mxu0 0
    %4793 = vmatpush1.bf16.xpose.msra.mxu0 0
    %4794 = vmatprep.subr.bf16.mxu0 0
    %4795 = vmatpush1.bf16.xpose.msra.mxu0 0
    %4796 = vmatprep.subr.bf16.mxu0 0
    %4797 = vmatpush1.bf16.xpose.msra.mxu0 0
    %4798 = vmatprep.subr.bf16.mxu0 0
    %4799 = vmatpush1.bf16.xpose.msra.mxu0 0
    %4800 = vmatprep.mubr.bf16.mxu0 0
    %4801 = vmatmul.mubr.bf16.gmra.mrb[0].mxu0 %v2933
    %v4802 = vpop.f32.mrb[0].mxu0
    %v4803 = vadd.f32 0.0, %v4802
    %v4804 = vpop.f32.mrb[0].mxu0
    %v4805 = vpop.f32.mrb[0].mxu0
    %v4806 = vpop.f32.mrb[0].mxu0
    %4807 = vdwg.mxu0
    %4808 = vmatprep.subr.bf16.mxu0 0
    %4809 = vmatpush1.bf16.xpose.msra.mxu0 %v3046
    %4810 = vmatprep.subr.bf16.mxu0 0
    %4811 = vmatpush1.bf16.xpose.msra.mxu0 %v3047
    %4812 = vmatprep.subr.bf16.mxu0 0
    %4813 = vmatpush1.bf16.xpose.msra.mxu0 0
    %4814 = vmatprep.subr.bf16.mxu0 0
    %4815 = vmatpush1.bf16.xpose.msra.mxu0 0
    %4816 = vmatprep.subr.bf16.mxu0 0
    %4817 = vmatpush1.bf16.xpose.msra.mxu0 0
    %4818 = vmatprep.subr.bf16.mxu0 0
    %4819 = vmatpush1.bf16.xpose.msra.mxu0 0
    %4820 = vmatprep.subr.bf16.mxu0 0
    %4821 = vmatpush1.bf16.xpose.msra.mxu0 0
    %4822 = vmatprep.subr.bf16.mxu0 0
    %4823 = vmatpush1.bf16.xpose.msra.mxu0 0
    %4824 = vmatprep.subr.bf16.mxu0 0
    %4825 = vmatpush1.bf16.xpose.msra.mxu0 0
    %4826 = vmatprep.subr.bf16.mxu0 0
    %4827 = vmatpush1.bf16.xpose.msra.mxu0 0
    %4828 = vmatprep.subr.bf16.mxu0 0
    %4829 = vmatpush1.bf16.xpose.msra.mxu0 0
    %4830 = vmatprep.subr.bf16.mxu0 0
    %4831 = vmatpush1.bf16.xpose.msra.mxu0 0
    %4832 = vmatprep.subr.bf16.mxu0 0
    %4833 = vmatpush1.bf16.xpose.msra.mxu0 0
    %4834 = vmatprep.subr.bf16.mxu0 0
    %4835 = vmatpush1.bf16.xpose.msra.mxu0 0
    %4836 = vmatprep.subr.bf16.mxu0 0
    %4837 = vmatpush1.bf16.xpose.msra.mxu0 0
    %4838 = vmatprep.subr.bf16.mxu0 0
    %4839 = vmatpush1.bf16.xpose.msra.mxu0 0
    %4840 = vmatprep.mubr.bf16.mxu0 0
    %4841 = vmatmul.mubr.bf16.gmra.mrb[0].mxu0 %v2934
    %v4842 = vpop.f32.mrb[0].mxu0
    %v4843 = vadd.f32 0.0, %v4842
    %v4844 = vpop.f32.mrb[0].mxu0
    %v4845 = vpop.f32.mrb[0].mxu0
    %v4846 = vpop.f32.mrb[0].mxu0
    %4847 = vdwg.mxu0
    %4848 = vmatprep.subr.bf16.mxu0 0
    %4849 = vmatpush1.bf16.xpose.msra.mxu0 %v3048
    %4850 = vmatprep.subr.bf16.mxu0 0
    %4851 = vmatpush1.bf16.xpose.msra.mxu0 %v3049
    %4852 = vmatprep.subr.bf16.mxu0 0
    %4853 = vmatpush1.bf16.xpose.msra.mxu0 0
    %4854 = vmatprep.subr.bf16.mxu0 0
    %4855 = vmatpush1.bf16.xpose.msra.mxu0 0
    %4856 = vmatprep.subr.bf16.mxu0 0
    %4857 = vmatpush1.bf16.xpose.msra.mxu0 0
    %4858 = vmatprep.subr.bf16.mxu0 0
    %4859 = vmatpush1.bf16.xpose.msra.mxu0 0
    %4860 = vmatprep.subr.bf16.mxu0 0
    %4861 = vmatpush1.bf16.xpose.msra.mxu0 0
    %4862 = vmatprep.subr.bf16.mxu0 0
    %4863 = vmatpush1.bf16.xpose.msra.mxu0 0
    %4864 = vmatprep.subr.bf16.mxu0 0
    %4865 = vmatpush1.bf16.xpose.msra.mxu0 0
    %4866 = vmatprep.subr.bf16.mxu0 0
    %4867 = vmatpush1.bf16.xpose.msra.mxu0 0
    %4868 = vmatprep.subr.bf16.mxu0 0
    %4869 = vmatpush1.bf16.xpose.msra.mxu0 0
    %4870 = vmatprep.subr.bf16.mxu0 0
    %4871 = vmatpush1.bf16.xpose.msra.mxu0 0
    %4872 = vmatprep.subr.bf16.mxu0 0
    %4873 = vmatpush1.bf16.xpose.msra.mxu0 0
    %4874 = vmatprep.subr.bf16.mxu0 0
    %4875 = vmatpush1.bf16.xpose.msra.mxu0 0
    %4876 = vmatprep.subr.bf16.mxu0 0
    %4877 = vmatpush1.bf16.xpose.msra.mxu0 0
    %4878 = vmatprep.subr.bf16.mxu0 0
    %4879 = vmatpush1.bf16.xpose.msra.mxu0 0
    %4880 = vmatprep.mubr.bf16.mxu0 0
    %4881 = vmatmul.mubr.bf16.gmra.mrb[0].mxu0 %v2935
    %v4882 = vpop.f32.mrb[0].mxu0
    %v4883 = vadd.f32 0.0, %v4882
    %v4884 = vpop.f32.mrb[0].mxu0
    %v4885 = vpop.f32.mrb[0].mxu0
    %v4886 = vpop.f32.mrb[0].mxu0
    %4887 = vdwg.mxu0
    %4888 = vmatprep.subr.bf16.mxu0 0
    %4889 = vmatpush1.bf16.xpose.msra.mxu0 %v3050
    %4890 = vmatprep.subr.bf16.mxu0 0
    %4891 = vmatpush1.bf16.xpose.msra.mxu0 %v3051
    %4892 = vmatprep.subr.bf16.mxu0 0
    %4893 = vmatpush1.bf16.xpose.msra.mxu0 0
    %4894 = vmatprep.subr.bf16.mxu0 0
    %4895 = vmatpush1.bf16.xpose.msra.mxu0 0
    %4896 = vmatprep.subr.bf16.mxu0 0
    %4897 = vmatpush1.bf16.xpose.msra.mxu0 0
    %4898 = vmatprep.subr.bf16.mxu0 0
    %4899 = vmatpush1.bf16.xpose.msra.mxu0 0
    %4900 = vmatprep.subr.bf16.mxu0 0
    %4901 = vmatpush1.bf16.xpose.msra.mxu0 0
    %4902 = vmatprep.subr.bf16.mxu0 0
    %4903 = vmatpush1.bf16.xpose.msra.mxu0 0
    %4904 = vmatprep.subr.bf16.mxu0 0
    %4905 = vmatpush1.bf16.xpose.msra.mxu0 0
    %4906 = vmatprep.subr.bf16.mxu0 0
    %4907 = vmatpush1.bf16.xpose.msra.mxu0 0
    %4908 = vmatprep.subr.bf16.mxu0 0
    %4909 = vmatpush1.bf16.xpose.msra.mxu0 0
    %4910 = vmatprep.subr.bf16.mxu0 0
    %4911 = vmatpush1.bf16.xpose.msra.mxu0 0
    %4912 = vmatprep.subr.bf16.mxu0 0
    %4913 = vmatpush1.bf16.xpose.msra.mxu0 0
    %4914 = vmatprep.subr.bf16.mxu0 0
    %4915 = vmatpush1.bf16.xpose.msra.mxu0 0
    %4916 = vmatprep.subr.bf16.mxu0 0
    %4917 = vmatpush1.bf16.xpose.msra.mxu0 0
    %4918 = vmatprep.subr.bf16.mxu0 0
    %4919 = vmatpush1.bf16.xpose.msra.mxu0 0
    %4920 = vmatprep.mubr.bf16.mxu0 0
    %4921 = vmatmul.mubr.bf16.gmra.mrb[0].mxu0 %v2936
    %v4922 = vpop.f32.mrb[0].mxu0
    %v4923 = vadd.f32 0.0, %v4922
    %v4924 = vpop.f32.mrb[0].mxu0
    %v4925 = vpop.f32.mrb[0].mxu0
    %v4926 = vpop.f32.mrb[0].mxu0
    %4927 = vdwg.mxu0
    %4928 = vmatprep.subr.bf16.mxu0 0
    %4929 = vmatpush1.bf16.xpose.msra.mxu0 %v3052
    %4930 = vmatprep.subr.bf16.mxu0 0
    %4931 = vmatpush1.bf16.xpose.msra.mxu0 %v3053
    %4932 = vmatprep.subr.bf16.mxu0 0
    %4933 = vmatpush1.bf16.xpose.msra.mxu0 0
    %4934 = vmatprep.subr.bf16.mxu0 0
    %4935 = vmatpush1.bf16.xpose.msra.mxu0 0
    %4936 = vmatprep.subr.bf16.mxu0 0
    %4937 = vmatpush1.bf16.xpose.msra.mxu0 0
    %4938 = vmatprep.subr.bf16.mxu0 0
    %4939 = vmatpush1.bf16.xpose.msra.mxu0 0
    %4940 = vmatprep.subr.bf16.mxu0 0
    %4941 = vmatpush1.bf16.xpose.msra.mxu0 0
    %4942 = vmatprep.subr.bf16.mxu0 0
    %4943 = vmatpush1.bf16.xpose.msra.mxu0 0
    %4944 = vmatprep.subr.bf16.mxu0 0
    %4945 = vmatpush1.bf16.xpose.msra.mxu0 0
    %4946 = vmatprep.subr.bf16.mxu0 0
    %4947 = vmatpush1.bf16.xpose.msra.mxu0 0
    %4948 = vmatprep.subr.bf16.mxu0 0
    %4949 = vmatpush1.bf16.xpose.msra.mxu0 0
    %4950 = vmatprep.subr.bf16.mxu0 0
    %4951 = vmatpush1.bf16.xpose.msra.mxu0 0
    %4952 = vmatprep.subr.bf16.mxu0 0
    %4953 = vmatpush1.bf16.xpose.msra.mxu0 0
    %4954 = vmatprep.subr.bf16.mxu0 0
    %4955 = vmatpush1.bf16.xpose.msra.mxu0 0
    %4956 = vmatprep.subr.bf16.mxu0 0
    %4957 = vmatpush1.bf16.xpose.msra.mxu0 0
    %4958 = vmatprep.subr.bf16.mxu0 0
    %4959 = vmatpush1.bf16.xpose.msra.mxu0 0
    %4960 = vmatprep.mubr.bf16.mxu0 0
    %4961 = vmatmul.mubr.bf16.gmra.mrb[0].mxu0 %v2937
    %v4962 = vpop.f32.mrb[0].mxu0
    %v4963 = vadd.f32 0.0, %v4962
    %v4964 = vpop.f32.mrb[0].mxu0
    %v4965 = vpop.f32.mrb[0].mxu0
    %v4966 = vpop.f32.mrb[0].mxu0
    %4967 = vdwg.mxu0
    %4968 = vmatprep.subr.bf16.mxu0 0
    %4969 = vmatpush1.bf16.xpose.msra.mxu0 %v3054
    %4970 = vmatprep.subr.bf16.mxu0 0
    %4971 = vmatpush1.bf16.xpose.msra.mxu0 %v3055
    %4972 = vmatprep.subr.bf16.mxu0 0
    %4973 = vmatpush1.bf16.xpose.msra.mxu0 0
    %4974 = vmatprep.subr.bf16.mxu0 0
    %4975 = vmatpush1.bf16.xpose.msra.mxu0 0
    %4976 = vmatprep.subr.bf16.mxu0 0
    %4977 = vmatpush1.bf16.xpose.msra.mxu0 0
    %4978 = vmatprep.subr.bf16.mxu0 0
    %4979 = vmatpush1.bf16.xpose.msra.mxu0 0
    %4980 = vmatprep.subr.bf16.mxu0 0
    %4981 = vmatpush1.bf16.xpose.msra.mxu0 0
    %4982 = vmatprep.subr.bf16.mxu0 0
    %4983 = vmatpush1.bf16.xpose.msra.mxu0 0
    %4984 = vmatprep.subr.bf16.mxu0 0
    %4985 = vmatpush1.bf16.xpose.msra.mxu0 0
    %4986 = vmatprep.subr.bf16.mxu0 0
    %4987 = vmatpush1.bf16.xpose.msra.mxu0 0
    %4988 = vmatprep.subr.bf16.mxu0 0
    %4989 = vmatpush1.bf16.xpose.msra.mxu0 0
    %4990 = vmatprep.subr.bf16.mxu0 0
    %4991 = vmatpush1.bf16.xpose.msra.mxu0 0
    %4992 = vmatprep.subr.bf16.mxu0 0
    %4993 = vmatpush1.bf16.xpose.msra.mxu0 0
    %4994 = vmatprep.subr.bf16.mxu0 0
    %4995 = vmatpush1.bf16.xpose.msra.mxu0 0
    %4996 = vmatprep.subr.bf16.mxu0 0
    %4997 = vmatpush1.bf16.xpose.msra.mxu0 0
    %4998 = vmatprep.subr.bf16.mxu0 0
    %4999 = vmatpush1.bf16.xpose.msra.mxu0 0
    %5000 = vmatprep.mubr.bf16.mxu0 0
    %5001 = vmatmul.mubr.bf16.gmra.mrb[0].mxu0 %v2938
    %v5002 = vpop.f32.mrb[0].mxu0
    %v5003 = vadd.f32 0.0, %v5002
    %v5004 = vpop.f32.mrb[0].mxu0
    %v5005 = vpop.f32.mrb[0].mxu0
    %v5006 = vpop.f32.mrb[0].mxu0
    %5007 = vdwg.mxu0
    %5008 = vmatprep.subr.bf16.mxu0 0
    %5009 = vmatpush1.bf16.xpose.msra.mxu0 %v3056
    %5010 = vmatprep.subr.bf16.mxu0 0
    %5011 = vmatpush1.bf16.xpose.msra.mxu0 %v3057
    %5012 = vmatprep.subr.bf16.mxu0 0
    %5013 = vmatpush1.bf16.xpose.msra.mxu0 0
    %5014 = vmatprep.subr.bf16.mxu0 0
    %5015 = vmatpush1.bf16.xpose.msra.mxu0 0
    %5016 = vmatprep.subr.bf16.mxu0 0
    %5017 = vmatpush1.bf16.xpose.msra.mxu0 0
    %5018 = vmatprep.subr.bf16.mxu0 0
    %5019 = vmatpush1.bf16.xpose.msra.mxu0 0
    %5020 = vmatprep.subr.bf16.mxu0 0
    %5021 = vmatpush1.bf16.xpose.msra.mxu0 0
    %5022 = vmatprep.subr.bf16.mxu0 0
    %5023 = vmatpush1.bf16.xpose.msra.mxu0 0
    %5024 = vmatprep.subr.bf16.mxu0 0
    %5025 = vmatpush1.bf16.xpose.msra.mxu0 0
    %5026 = vmatprep.subr.bf16.mxu0 0
    %5027 = vmatpush1.bf16.xpose.msra.mxu0 0
    %5028 = vmatprep.subr.bf16.mxu0 0
    %5029 = vmatpush1.bf16.xpose.msra.mxu0 0
    %5030 = vmatprep.subr.bf16.mxu0 0
    %5031 = vmatpush1.bf16.xpose.msra.mxu0 0
    %5032 = vmatprep.subr.bf16.mxu0 0
    %5033 = vmatpush1.bf16.xpose.msra.mxu0 0
    %5034 = vmatprep.subr.bf16.mxu0 0
    %5035 = vmatpush1.bf16.xpose.msra.mxu0 0
    %5036 = vmatprep.subr.bf16.mxu0 0
    %5037 = vmatpush1.bf16.xpose.msra.mxu0 0
    %5038 = vmatprep.subr.bf16.mxu0 0
    %5039 = vmatpush1.bf16.xpose.msra.mxu0 0
    %5040 = vmatprep.mubr.bf16.mxu0 0
    %5041 = vmatmul.mubr.bf16.gmra.mrb[0].mxu0 %v2939
    %v5042 = vpop.f32.mrb[0].mxu0
    %v5043 = vadd.f32 0.0, %v5042
    %v5044 = vpop.f32.mrb[0].mxu0
    %v5045 = vpop.f32.mrb[0].mxu0
    %v5046 = vpop.f32.mrb[0].mxu0
    %5047 = vdwg.mxu0
    %5048 = vmatprep.subr.bf16.mxu0 0
    %5049 = vmatpush1.bf16.xpose.msra.mxu0 %v3058
    %5050 = vmatprep.subr.bf16.mxu0 0
    %5051 = vmatpush1.bf16.xpose.msra.mxu0 %v3059
    %5052 = vmatprep.subr.bf16.mxu0 0
    %5053 = vmatpush1.bf16.xpose.msra.mxu0 0
    %5054 = vmatprep.subr.bf16.mxu0 0
    %5055 = vmatpush1.bf16.xpose.msra.mxu0 0
    %5056 = vmatprep.subr.bf16.mxu0 0
    %5057 = vmatpush1.bf16.xpose.msra.mxu0 0
    %5058 = vmatprep.subr.bf16.mxu0 0
    %5059 = vmatpush1.bf16.xpose.msra.mxu0 0
    %5060 = vmatprep.subr.bf16.mxu0 0
    %5061 = vmatpush1.bf16.xpose.msra.mxu0 0
    %5062 = vmatprep.subr.bf16.mxu0 0
    %5063 = vmatpush1.bf16.xpose.msra.mxu0 0
    %5064 = vmatprep.subr.bf16.mxu0 0
    %5065 = vmatpush1.bf16.xpose.msra.mxu0 0
    %5066 = vmatprep.subr.bf16.mxu0 0
    %5067 = vmatpush1.bf16.xpose.msra.mxu0 0
    %5068 = vmatprep.subr.bf16.mxu0 0
    %5069 = vmatpush1.bf16.xpose.msra.mxu0 0
    %5070 = vmatprep.subr.bf16.mxu0 0
    %5071 = vmatpush1.bf16.xpose.msra.mxu0 0
    %5072 = vmatprep.subr.bf16.mxu0 0
    %5073 = vmatpush1.bf16.xpose.msra.mxu0 0
    %5074 = vmatprep.subr.bf16.mxu0 0
    %5075 = vmatpush1.bf16.xpose.msra.mxu0 0
    %5076 = vmatprep.subr.bf16.mxu0 0
    %5077 = vmatpush1.bf16.xpose.msra.mxu0 0
    %5078 = vmatprep.subr.bf16.mxu0 0
    %5079 = vmatpush1.bf16.xpose.msra.mxu0 0
    %5080 = vmatprep.mubr.bf16.mxu0 0
    %5081 = vmatmul.mubr.bf16.gmra.mrb[0].mxu0 %v2940
    %v5082 = vpop.f32.mrb[0].mxu0
    %v5083 = vadd.f32 0.0, %v5082
    %v5084 = vpop.f32.mrb[0].mxu0
    %v5085 = vpop.f32.mrb[0].mxu0
    %v5086 = vpop.f32.mrb[0].mxu0
    %5087 = vdwg.mxu0
    %5088 = vmatprep.subr.bf16.mxu0 0
    %5089 = vmatpush1.bf16.xpose.msra.mxu0 %v3060
    %5090 = vmatprep.subr.bf16.mxu0 0
    %5091 = vmatpush1.bf16.xpose.msra.mxu0 %v3061
    %5092 = vmatprep.subr.bf16.mxu0 0
    %5093 = vmatpush1.bf16.xpose.msra.mxu0 0
    %5094 = vmatprep.subr.bf16.mxu0 0
    %5095 = vmatpush1.bf16.xpose.msra.mxu0 0
    %5096 = vmatprep.subr.bf16.mxu0 0
    %5097 = vmatpush1.bf16.xpose.msra.mxu0 0
    %5098 = vmatprep.subr.bf16.mxu0 0
    %5099 = vmatpush1.bf16.xpose.msra.mxu0 0
    %5100 = vmatprep.subr.bf16.mxu0 0
    %5101 = vmatpush1.bf16.xpose.msra.mxu0 0
    %5102 = vmatprep.subr.bf16.mxu0 0
    %5103 = vmatpush1.bf16.xpose.msra.mxu0 0
    %5104 = vmatprep.subr.bf16.mxu0 0
    %5105 = vmatpush1.bf16.xpose.msra.mxu0 0
    %5106 = vmatprep.subr.bf16.mxu0 0
    %5107 = vmatpush1.bf16.xpose.msra.mxu0 0
    %5108 = vmatprep.subr.bf16.mxu0 0
    %5109 = vmatpush1.bf16.xpose.msra.mxu0 0
    %5110 = vmatprep.subr.bf16.mxu0 0
    %5111 = vmatpush1.bf16.xpose.msra.mxu0 0
    %5112 = vmatprep.subr.bf16.mxu0 0
    %5113 = vmatpush1.bf16.xpose.msra.mxu0 0
    %5114 = vmatprep.subr.bf16.mxu0 0
    %5115 = vmatpush1.bf16.xpose.msra.mxu0 0
    %5116 = vmatprep.subr.bf16.mxu0 0
    %5117 = vmatpush1.bf16.xpose.msra.mxu0 0
    %5118 = vmatprep.subr.bf16.mxu0 0
    %5119 = vmatpush1.bf16.xpose.msra.mxu0 0
    %5120 = vmatprep.mubr.bf16.mxu0 0
    %5121 = vmatmul.mubr.bf16.gmra.mrb[0].mxu0 %v2941
    %v5122 = vpop.f32.mrb[0].mxu0
    %v5123 = vadd.f32 0.0, %v5122
    %v5124 = vpop.f32.mrb[0].mxu0
    %v5125 = vpop.f32.mrb[0].mxu0
    %v5126 = vpop.f32.mrb[0].mxu0
    %5127 = vdwg.mxu0
    %5128 = vmatprep.subr.bf16.mxu0 0
    %5129 = vmatpush1.bf16.xpose.msra.mxu0 %v3062
    %5130 = vmatprep.subr.bf16.mxu0 0
    %5131 = vmatpush1.bf16.xpose.msra.mxu0 %v3063
    %5132 = vmatprep.subr.bf16.mxu0 0
    %5133 = vmatpush1.bf16.xpose.msra.mxu0 0
    %5134 = vmatprep.subr.bf16.mxu0 0
    %5135 = vmatpush1.bf16.xpose.msra.mxu0 0
    %5136 = vmatprep.subr.bf16.mxu0 0
    %5137 = vmatpush1.bf16.xpose.msra.mxu0 0
    %5138 = vmatprep.subr.bf16.mxu0 0
    %5139 = vmatpush1.bf16.xpose.msra.mxu0 0
    %5140 = vmatprep.subr.bf16.mxu0 0
    %5141 = vmatpush1.bf16.xpose.msra.mxu0 0
    %5142 = vmatprep.subr.bf16.mxu0 0
    %5143 = vmatpush1.bf16.xpose.msra.mxu0 0
    %5144 = vmatprep.subr.bf16.mxu0 0
    %5145 = vmatpush1.bf16.xpose.msra.mxu0 0
    %5146 = vmatprep.subr.bf16.mxu0 0
    %5147 = vmatpush1.bf16.xpose.msra.mxu0 0
    %5148 = vmatprep.subr.bf16.mxu0 0
    %5149 = vmatpush1.bf16.xpose.msra.mxu0 0
    %5150 = vmatprep.subr.bf16.mxu0 0
    %5151 = vmatpush1.bf16.xpose.msra.mxu0 0
    %5152 = vmatprep.subr.bf16.mxu0 0
    %5153 = vmatpush1.bf16.xpose.msra.mxu0 0
    %5154 = vmatprep.subr.bf16.mxu0 0
    %5155 = vmatpush1.bf16.xpose.msra.mxu0 0
    %5156 = vmatprep.subr.bf16.mxu0 0
    %5157 = vmatpush1.bf16.xpose.msra.mxu0 0
    %5158 = vmatprep.subr.bf16.mxu0 0
    %5159 = vmatpush1.bf16.xpose.msra.mxu0 0
    %5160 = vmatprep.mubr.bf16.mxu0 0
    %5161 = vmatmul.mubr.bf16.gmra.mrb[0].mxu0 %v2942
    %v5162 = vpop.f32.mrb[0].mxu0
    %v5163 = vadd.f32 0.0, %v5162
    %v5164 = vpop.f32.mrb[0].mxu0
    %v5165 = vpop.f32.mrb[0].mxu0
    %v5166 = vpop.f32.mrb[0].mxu0
    %5167 = vdwg.mxu0
    %5168 = vmatprep.subr.bf16.mxu0 0
    %5169 = vmatpush1.bf16.xpose.msra.mxu0 %v3064
    %5170 = vmatprep.subr.bf16.mxu0 0
    %5171 = vmatpush1.bf16.xpose.msra.mxu0 %v3065
    %5172 = vmatprep.subr.bf16.mxu0 0
    %5173 = vmatpush1.bf16.xpose.msra.mxu0 0
    %5174 = vmatprep.subr.bf16.mxu0 0
    %5175 = vmatpush1.bf16.xpose.msra.mxu0 0
    %5176 = vmatprep.subr.bf16.mxu0 0
    %5177 = vmatpush1.bf16.xpose.msra.mxu0 0
    %5178 = vmatprep.subr.bf16.mxu0 0
    %5179 = vmatpush1.bf16.xpose.msra.mxu0 0
    %5180 = vmatprep.subr.bf16.mxu0 0
    %5181 = vmatpush1.bf16.xpose.msra.mxu0 0
    %5182 = vmatprep.subr.bf16.mxu0 0
    %5183 = vmatpush1.bf16.xpose.msra.mxu0 0
    %5184 = vmatprep.subr.bf16.mxu0 0
    %5185 = vmatpush1.bf16.xpose.msra.mxu0 0
    %5186 = vmatprep.subr.bf16.mxu0 0
    %5187 = vmatpush1.bf16.xpose.msra.mxu0 0
    %5188 = vmatprep.subr.bf16.mxu0 0
    %5189 = vmatpush1.bf16.xpose.msra.mxu0 0
    %5190 = vmatprep.subr.bf16.mxu0 0
    %5191 = vmatpush1.bf16.xpose.msra.mxu0 0
    %5192 = vmatprep.subr.bf16.mxu0 0
    %5193 = vmatpush1.bf16.xpose.msra.mxu0 0
    %5194 = vmatprep.subr.bf16.mxu0 0
    %5195 = vmatpush1.bf16.xpose.msra.mxu0 0
    %5196 = vmatprep.subr.bf16.mxu0 0
    %5197 = vmatpush1.bf16.xpose.msra.mxu0 0
    %5198 = vmatprep.subr.bf16.mxu0 0
    %5199 = vmatpush1.bf16.xpose.msra.mxu0 0
    %5200 = vmatprep.mubr.bf16.mxu0 0
    %5201 = vmatmul.mubr.bf16.gmra.mrb[0].mxu0 %v2943
    %v5202 = vpop.f32.mrb[0].mxu0
    %v5203 = vadd.f32 0.0, %v5202
    %v5204 = vpop.f32.mrb[0].mxu0
    %v5205 = vpop.f32.mrb[0].mxu0
    %v5206 = vpop.f32.mrb[0].mxu0
    %5207 = vdwg.mxu0
    %5208 = vmatprep.subr.bf16.mxu0 0
    %5209 = vmatpush1.bf16.xpose.msra.mxu0 %v3066
    %5210 = vmatprep.subr.bf16.mxu0 0
    %5211 = vmatpush1.bf16.xpose.msra.mxu0 %v3067
    %5212 = vmatprep.subr.bf16.mxu0 0
    %5213 = vmatpush1.bf16.xpose.msra.mxu0 0
    %5214 = vmatprep.subr.bf16.mxu0 0
    %5215 = vmatpush1.bf16.xpose.msra.mxu0 0
    %5216 = vmatprep.subr.bf16.mxu0 0
    %5217 = vmatpush1.bf16.xpose.msra.mxu0 0
    %5218 = vmatprep.subr.bf16.mxu0 0
    %5219 = vmatpush1.bf16.xpose.msra.mxu0 0
    %5220 = vmatprep.subr.bf16.mxu0 0
    %5221 = vmatpush1.bf16.xpose.msra.mxu0 0
    %5222 = vmatprep.subr.bf16.mxu0 0
    %5223 = vmatpush1.bf16.xpose.msra.mxu0 0
    %5224 = vmatprep.subr.bf16.mxu0 0
    %5225 = vmatpush1.bf16.xpose.msra.mxu0 0
    %5226 = vmatprep.subr.bf16.mxu0 0
    %5227 = vmatpush1.bf16.xpose.msra.mxu0 0
    %5228 = vmatprep.subr.bf16.mxu0 0
    %5229 = vmatpush1.bf16.xpose.msra.mxu0 0
    %5230 = vmatprep.subr.bf16.mxu0 0
    %5231 = vmatpush1.bf16.xpose.msra.mxu0 0
    %5232 = vmatprep.subr.bf16.mxu0 0
    %5233 = vmatpush1.bf16.xpose.msra.mxu0 0
    %5234 = vmatprep.subr.bf16.mxu0 0
    %5235 = vmatpush1.bf16.xpose.msra.mxu0 0
    %5236 = vmatprep.subr.bf16.mxu0 0
    %5237 = vmatpush1.bf16.xpose.msra.mxu0 0
    %5238 = vmatprep.subr.bf16.mxu0 0
    %5239 = vmatpush1.bf16.xpose.msra.mxu0 0
    %5240 = vmatprep.mubr.bf16.mxu0 0
    %5241 = vmatmul.mubr.bf16.gmra.mrb[0].mxu0 %v2944
    %v5242 = vpop.f32.mrb[0].mxu0
    %v5243 = vadd.f32 0.0, %v5242
    %v5244 = vpop.f32.mrb[0].mxu0
    %v5245 = vpop.f32.mrb[0].mxu0
    %v5246 = vpop.f32.mrb[0].mxu0
    %5247 = vdwg.mxu0
    %5248 = vmatprep.subr.bf16.mxu0 0
    %5249 = vmatpush1.bf16.xpose.msra.mxu0 %v3068
    %5250 = vmatprep.subr.bf16.mxu0 0
    %5251 = vmatpush1.bf16.xpose.msra.mxu0 %v3069
    %5252 = vmatprep.subr.bf16.mxu0 0
    %5253 = vmatpush1.bf16.xpose.msra.mxu0 0
    %5254 = vmatprep.subr.bf16.mxu0 0
    %5255 = vmatpush1.bf16.xpose.msra.mxu0 0
    %5256 = vmatprep.subr.bf16.mxu0 0
    %5257 = vmatpush1.bf16.xpose.msra.mxu0 0
    %5258 = vmatprep.subr.bf16.mxu0 0
    %5259 = vmatpush1.bf16.xpose.msra.mxu0 0
    %5260 = vmatprep.subr.bf16.mxu0 0
    %5261 = vmatpush1.bf16.xpose.msra.mxu0 0
    %5262 = vmatprep.subr.bf16.mxu0 0
    %5263 = vmatpush1.bf16.xpose.msra.mxu0 0
    %5264 = vmatprep.subr.bf16.mxu0 0
    %5265 = vmatpush1.bf16.xpose.msra.mxu0 0
    %5266 = vmatprep.subr.bf16.mxu0 0
    %5267 = vmatpush1.bf16.xpose.msra.mxu0 0
    %5268 = vmatprep.subr.bf16.mxu0 0
    %5269 = vmatpush1.bf16.xpose.msra.mxu0 0
    %5270 = vmatprep.subr.bf16.mxu0 0
    %5271 = vmatpush1.bf16.xpose.msra.mxu0 0
    %5272 = vmatprep.subr.bf16.mxu0 0
    %5273 = vmatpush1.bf16.xpose.msra.mxu0 0
    %5274 = vmatprep.subr.bf16.mxu0 0
    %5275 = vmatpush1.bf16.xpose.msra.mxu0 0
    %5276 = vmatprep.subr.bf16.mxu0 0
    %5277 = vmatpush1.bf16.xpose.msra.mxu0 0
    %5278 = vmatprep.subr.bf16.mxu0 0
    %5279 = vmatpush1.bf16.xpose.msra.mxu0 0
    %5280 = vmatprep.mubr.bf16.mxu0 0
    %5281 = vmatmul.mubr.bf16.gmra.mrb[0].mxu0 %v2945
    %v5282 = vpop.f32.mrb[0].mxu0
    %v5283 = vadd.f32 0.0, %v5282
    %v5284 = vpop.f32.mrb[0].mxu0
    %v5285 = vpop.f32.mrb[0].mxu0
    %v5286 = vpop.f32.mrb[0].mxu0
    %5287 = vdwg.mxu0
    %5288 = vmatprep.subr.bf16.mxu0 0
    %5289 = vmatpush1.bf16.xpose.msra.mxu0 %v3070
    %5290 = vmatprep.subr.bf16.mxu0 0
    %5291 = vmatpush1.bf16.xpose.msra.mxu0 %v3071
    %5292 = vmatprep.subr.bf16.mxu0 0
    %5293 = vmatpush1.bf16.xpose.msra.mxu0 0
    %5294 = vmatprep.subr.bf16.mxu0 0
    %5295 = vmatpush1.bf16.xpose.msra.mxu0 0
    %5296 = vmatprep.subr.bf16.mxu0 0
    %5297 = vmatpush1.bf16.xpose.msra.mxu0 0
    %5298 = vmatprep.subr.bf16.mxu0 0
    %5299 = vmatpush1.bf16.xpose.msra.mxu0 0
    %5300 = vmatprep.subr.bf16.mxu0 0
    %5301 = vmatpush1.bf16.xpose.msra.mxu0 0
    %5302 = vmatprep.subr.bf16.mxu0 0
    %5303 = vmatpush1.bf16.xpose.msra.mxu0 0
    %5304 = vmatprep.subr.bf16.mxu0 0
    %5305 = vmatpush1.bf16.xpose.msra.mxu0 0
    %5306 = vmatprep.subr.bf16.mxu0 0
    %5307 = vmatpush1.bf16.xpose.msra.mxu0 0
    %5308 = vmatprep.subr.bf16.mxu0 0
    %5309 = vmatpush1.bf16.xpose.msra.mxu0 0
    %5310 = vmatprep.subr.bf16.mxu0 0
    %5311 = vmatpush1.bf16.xpose.msra.mxu0 0
    %5312 = vmatprep.subr.bf16.mxu0 0
    %5313 = vmatpush1.bf16.xpose.msra.mxu0 0
    %5314 = vmatprep.subr.bf16.mxu0 0
    %5315 = vmatpush1.bf16.xpose.msra.mxu0 0
    %5316 = vmatprep.subr.bf16.mxu0 0
    %5317 = vmatpush1.bf16.xpose.msra.mxu0 0
    %5318 = vmatprep.subr.bf16.mxu0 0
    %5319 = vmatpush1.bf16.xpose.msra.mxu0 0
    %5320 = vmatprep.mubr.bf16.mxu0 0
    %5321 = vmatmul.mubr.bf16.gmra.mrb[0].mxu0 %v2946
    %v5322 = vpop.f32.mrb[0].mxu0
    %v5323 = vadd.f32 0.0, %v5322
    %v5324 = vpop.f32.mrb[0].mxu0
    %v5325 = vpop.f32.mrb[0].mxu0
    %v5326 = vpop.f32.mrb[0].mxu0
    %5327 = vdwg.mxu0
    %5328 = vmatprep.subr.bf16.mxu0 0
    %5329 = vmatpush1.bf16.xpose.msra.mxu0 %v3072
    %5330 = vmatprep.subr.bf16.mxu0 0
    %5331 = vmatpush1.bf16.xpose.msra.mxu0 %v3073
    %5332 = vmatprep.subr.bf16.mxu0 0
    %5333 = vmatpush1.bf16.xpose.msra.mxu0 0
    %5334 = vmatprep.subr.bf16.mxu0 0
    %5335 = vmatpush1.bf16.xpose.msra.mxu0 0
    %5336 = vmatprep.subr.bf16.mxu0 0
    %5337 = vmatpush1.bf16.xpose.msra.mxu0 0
    %5338 = vmatprep.subr.bf16.mxu0 0
    %5339 = vmatpush1.bf16.xpose.msra.mxu0 0
    %5340 = vmatprep.subr.bf16.mxu0 0
    %5341 = vmatpush1.bf16.xpose.msra.mxu0 0
    %5342 = vmatprep.subr.bf16.mxu0 0
    %5343 = vmatpush1.bf16.xpose.msra.mxu0 0
    %5344 = vmatprep.subr.bf16.mxu0 0
    %5345 = vmatpush1.bf16.xpose.msra.mxu0 0
    %5346 = vmatprep.subr.bf16.mxu0 0
    %5347 = vmatpush1.bf16.xpose.msra.mxu0 0
    %5348 = vmatprep.subr.bf16.mxu0 0
    %5349 = vmatpush1.bf16.xpose.msra.mxu0 0
    %5350 = vmatprep.subr.bf16.mxu0 0
    %5351 = vmatpush1.bf16.xpose.msra.mxu0 0
    %5352 = vmatprep.subr.bf16.mxu0 0
    %5353 = vmatpush1.bf16.xpose.msra.mxu0 0
    %5354 = vmatprep.subr.bf16.mxu0 0
    %5355 = vmatpush1.bf16.xpose.msra.mxu0 0
    %5356 = vmatprep.subr.bf16.mxu0 0
    %5357 = vmatpush1.bf16.xpose.msra.mxu0 0
    %5358 = vmatprep.subr.bf16.mxu0 0
    %5359 = vmatpush1.bf16.xpose.msra.mxu0 0
    %5360 = vmatprep.mubr.bf16.mxu0 0
    %5361 = vmatmul.mubr.bf16.gmra.mrb[0].mxu0 %v2947
    %v5362 = vpop.f32.mrb[0].mxu0
    %v5363 = vadd.f32 0.0, %v5362
    %v5364 = vpop.f32.mrb[0].mxu0
    %v5365 = vpop.f32.mrb[0].mxu0
    %v5366 = vpop.f32.mrb[0].mxu0
    %5367 = vdwg.mxu0
    %5368 = vmatprep.subr.bf16.mxu0 0
    %5369 = vmatpush1.bf16.xpose.msra.mxu0 %v3074
    %5370 = vmatprep.subr.bf16.mxu0 0
    %5371 = vmatpush1.bf16.xpose.msra.mxu0 %v3075
    %5372 = vmatprep.subr.bf16.mxu0 0
    %5373 = vmatpush1.bf16.xpose.msra.mxu0 0
    %5374 = vmatprep.subr.bf16.mxu0 0
    %5375 = vmatpush1.bf16.xpose.msra.mxu0 0
    %5376 = vmatprep.subr.bf16.mxu0 0
    %5377 = vmatpush1.bf16.xpose.msra.mxu0 0
    %5378 = vmatprep.subr.bf16.mxu0 0
    %5379 = vmatpush1.bf16.xpose.msra.mxu0 0
    %5380 = vmatprep.subr.bf16.mxu0 0
    %5381 = vmatpush1.bf16.xpose.msra.mxu0 0
    %5382 = vmatprep.subr.bf16.mxu0 0
    %5383 = vmatpush1.bf16.xpose.msra.mxu0 0
    %5384 = vmatprep.subr.bf16.mxu0 0
    %5385 = vmatpush1.bf16.xpose.msra.mxu0 0
    %5386 = vmatprep.subr.bf16.mxu0 0
    %5387 = vmatpush1.bf16.xpose.msra.mxu0 0
    %5388 = vmatprep.subr.bf16.mxu0 0
    %5389 = vmatpush1.bf16.xpose.msra.mxu0 0
    %5390 = vmatprep.subr.bf16.mxu0 0
    %5391 = vmatpush1.bf16.xpose.msra.mxu0 0
    %5392 = vmatprep.subr.bf16.mxu0 0
    %5393 = vmatpush1.bf16.xpose.msra.mxu0 0
    %5394 = vmatprep.subr.bf16.mxu0 0
    %5395 = vmatpush1.bf16.xpose.msra.mxu0 0
    %5396 = vmatprep.subr.bf16.mxu0 0
    %5397 = vmatpush1.bf16.xpose.msra.mxu0 0
    %5398 = vmatprep.subr.bf16.mxu0 0
    %5399 = vmatpush1.bf16.xpose.msra.mxu0 0
    %5400 = vmatprep.mubr.bf16.mxu0 0
    %5401 = vmatmul.mubr.bf16.gmra.mrb[0].mxu0 %v2948
    %v5402 = vpop.f32.mrb[0].mxu0
    %v5403 = vadd.f32 0.0, %v5402
    %v5404 = vpop.f32.mrb[0].mxu0
    %v5405 = vpop.f32.mrb[0].mxu0
    %v5406 = vpop.f32.mrb[0].mxu0
    %5407 = vdwg.mxu0
    %5408 = vmatprep.subr.bf16.mxu0 0
    %5409 = vmatpush1.bf16.xpose.msra.mxu0 %v3076
    %5410 = vmatprep.subr.bf16.mxu0 0
    %5411 = vmatpush1.bf16.xpose.msra.mxu0 %v3077
    %5412 = vmatprep.subr.bf16.mxu0 0
    %5413 = vmatpush1.bf16.xpose.msra.mxu0 0
    %5414 = vmatprep.subr.bf16.mxu0 0
    %5415 = vmatpush1.bf16.xpose.msra.mxu0 0
    %5416 = vmatprep.subr.bf16.mxu0 0
    %5417 = vmatpush1.bf16.xpose.msra.mxu0 0
    %5418 = vmatprep.subr.bf16.mxu0 0
    %5419 = vmatpush1.bf16.xpose.msra.mxu0 0
    %5420 = vmatprep.subr.bf16.mxu0 0
    %5421 = vmatpush1.bf16.xpose.msra.mxu0 0
    %5422 = vmatprep.subr.bf16.mxu0 0
    %5423 = vmatpush1.bf16.xpose.msra.mxu0 0
    %5424 = vmatprep.subr.bf16.mxu0 0
    %5425 = vmatpush1.bf16.xpose.msra.mxu0 0
    %5426 = vmatprep.subr.bf16.mxu0 0
    %5427 = vmatpush1.bf16.xpose.msra.mxu0 0
    %5428 = vmatprep.subr.bf16.mxu0 0
    %5429 = vmatpush1.bf16.xpose.msra.mxu0 0
    %5430 = vmatprep.subr.bf16.mxu0 0
    %5431 = vmatpush1.bf16.xpose.msra.mxu0 0
    %5432 = vmatprep.subr.bf16.mxu0 0
    %5433 = vmatpush1.bf16.xpose.msra.mxu0 0
    %5434 = vmatprep.subr.bf16.mxu0 0
    %5435 = vmatpush1.bf16.xpose.msra.mxu0 0
    %5436 = vmatprep.subr.bf16.mxu0 0
    %5437 = vmatpush1.bf16.xpose.msra.mxu0 0
    %5438 = vmatprep.subr.bf16.mxu0 0
    %5439 = vmatpush1.bf16.xpose.msra.mxu0 0
    %5440 = vmatprep.mubr.bf16.mxu0 0
    %5441 = vmatmul.mubr.bf16.gmra.mrb[0].mxu0 %v2949
    %v5442 = vpop.f32.mrb[0].mxu0
    %v5443 = vadd.f32 0.0, %v5442
    %v5444 = vpop.f32.mrb[0].mxu0
    %v5445 = vpop.f32.mrb[0].mxu0
    %v5446 = vpop.f32.mrb[0].mxu0
    %5447 = vdwg.mxu0
    %5448 = vmatprep.subr.bf16.mxu0 0
    %5449 = vmatpush1.bf16.xpose.msra.mxu0 %v3078
    %5450 = vmatprep.subr.bf16.mxu0 0
    %5451 = vmatpush1.bf16.xpose.msra.mxu0 %v3079
    %5452 = vmatprep.subr.bf16.mxu0 0
    %5453 = vmatpush1.bf16.xpose.msra.mxu0 0
    %5454 = vmatprep.subr.bf16.mxu0 0
    %5455 = vmatpush1.bf16.xpose.msra.mxu0 0
    %5456 = vmatprep.subr.bf16.mxu0 0
    %5457 = vmatpush1.bf16.xpose.msra.mxu0 0
    %5458 = vmatprep.subr.bf16.mxu0 0
    %5459 = vmatpush1.bf16.xpose.msra.mxu0 0
    %5460 = vmatprep.subr.bf16.mxu0 0
    %5461 = vmatpush1.bf16.xpose.msra.mxu0 0
    %5462 = vmatprep.subr.bf16.mxu0 0
    %5463 = vmatpush1.bf16.xpose.msra.mxu0 0
    %5464 = vmatprep.subr.bf16.mxu0 0
    %5465 = vmatpush1.bf16.xpose.msra.mxu0 0
    %5466 = vmatprep.subr.bf16.mxu0 0
    %5467 = vmatpush1.bf16.xpose.msra.mxu0 0
    %5468 = vmatprep.subr.bf16.mxu0 0
    %5469 = vmatpush1.bf16.xpose.msra.mxu0 0
    %5470 = vmatprep.subr.bf16.mxu0 0
    %5471 = vmatpush1.bf16.xpose.msra.mxu0 0
    %5472 = vmatprep.subr.bf16.mxu0 0
    %5473 = vmatpush1.bf16.xpose.msra.mxu0 0
    %5474 = vmatprep.subr.bf16.mxu0 0
    %5475 = vmatpush1.bf16.xpose.msra.mxu0 0
    %5476 = vmatprep.subr.bf16.mxu0 0
    %5477 = vmatpush1.bf16.xpose.msra.mxu0 0
    %5478 = vmatprep.subr.bf16.mxu0 0
    %5479 = vmatpush1.bf16.xpose.msra.mxu0 0
    %5480 = vmatprep.mubr.bf16.mxu0 0
    %5481 = vmatmul.mubr.bf16.gmra.mrb[0].mxu0 %v2950
    %v5482 = vpop.f32.mrb[0].mxu0
    %v5483 = vadd.f32 0.0, %v5482
    %v5484 = vpop.f32.mrb[0].mxu0
    %v5485 = vpop.f32.mrb[0].mxu0
    %v5486 = vpop.f32.mrb[0].mxu0
    %5487 = vdwg.mxu0
    %5488 = vmatprep.subr.bf16.mxu0 0
    %5489 = vmatpush1.bf16.xpose.msra.mxu0 %v3080
    %5490 = vmatprep.subr.bf16.mxu0 0
    %5491 = vmatpush1.bf16.xpose.msra.mxu0 %v3081
    %5492 = vmatprep.subr.bf16.mxu0 0
    %5493 = vmatpush1.bf16.xpose.msra.mxu0 0
    %5494 = vmatprep.subr.bf16.mxu0 0
    %5495 = vmatpush1.bf16.xpose.msra.mxu0 0
    %5496 = vmatprep.subr.bf16.mxu0 0
    %5497 = vmatpush1.bf16.xpose.msra.mxu0 0
    %5498 = vmatprep.subr.bf16.mxu0 0
    %5499 = vmatpush1.bf16.xpose.msra.mxu0 0
    %5500 = vmatprep.subr.bf16.mxu0 0
    %5501 = vmatpush1.bf16.xpose.msra.mxu0 0
    %5502 = vmatprep.subr.bf16.mxu0 0
    %5503 = vmatpush1.bf16.xpose.msra.mxu0 0
    %5504 = vmatprep.subr.bf16.mxu0 0
    %5505 = vmatpush1.bf16.xpose.msra.mxu0 0
    %5506 = vmatprep.subr.bf16.mxu0 0
    %5507 = vmatpush1.bf16.xpose.msra.mxu0 0
    %5508 = vmatprep.subr.bf16.mxu0 0
    %5509 = vmatpush1.bf16.xpose.msra.mxu0 0
    %5510 = vmatprep.subr.bf16.mxu0 0
    %5511 = vmatpush1.bf16.xpose.msra.mxu0 0
    %5512 = vmatprep.subr.bf16.mxu0 0
    %5513 = vmatpush1.bf16.xpose.msra.mxu0 0
    %5514 = vmatprep.subr.bf16.mxu0 0
    %5515 = vmatpush1.bf16.xpose.msra.mxu0 0
    %5516 = vmatprep.subr.bf16.mxu0 0
    %5517 = vmatpush1.bf16.xpose.msra.mxu0 0
    %5518 = vmatprep.subr.bf16.mxu0 0
    %5519 = vmatpush1.bf16.xpose.msra.mxu0 0
    %5520 = vmatprep.mubr.bf16.mxu0 0
    %5521 = vmatmul.mubr.bf16.gmra.mrb[0].mxu0 %v2951
    %v5522 = vpop.f32.mrb[0].mxu0
    %v5523 = vadd.f32 0.0, %v5522
    %v5524 = vpop.f32.mrb[0].mxu0
    %v5525 = vpop.f32.mrb[0].mxu0
    %v5526 = vpop.f32.mrb[0].mxu0
    %5527 = vdwg.mxu0
    %5528 = vmatprep.subr.bf16.mxu0 0
    %5529 = vmatpush1.bf16.xpose.msra.mxu0 %v3082
    %5530 = vmatprep.subr.bf16.mxu0 0
    %5531 = vmatpush1.bf16.xpose.msra.mxu0 %v3083
    %5532 = vmatprep.subr.bf16.mxu0 0
    %5533 = vmatpush1.bf16.xpose.msra.mxu0 0
    %5534 = vmatprep.subr.bf16.mxu0 0
    %5535 = vmatpush1.bf16.xpose.msra.mxu0 0
    %5536 = vmatprep.subr.bf16.mxu0 0
    %5537 = vmatpush1.bf16.xpose.msra.mxu0 0
    %5538 = vmatprep.subr.bf16.mxu0 0
    %5539 = vmatpush1.bf16.xpose.msra.mxu0 0
    %5540 = vmatprep.subr.bf16.mxu0 0
    %5541 = vmatpush1.bf16.xpose.msra.mxu0 0
    %5542 = vmatprep.subr.bf16.mxu0 0
    %5543 = vmatpush1.bf16.xpose.msra.mxu0 0
    %5544 = vmatprep.subr.bf16.mxu0 0
    %5545 = vmatpush1.bf16.xpose.msra.mxu0 0
    %5546 = vmatprep.subr.bf16.mxu0 0
    %5547 = vmatpush1.bf16.xpose.msra.mxu0 0
    %5548 = vmatprep.subr.bf16.mxu0 0
    %5549 = vmatpush1.bf16.xpose.msra.mxu0 0
    %5550 = vmatprep.subr.bf16.mxu0 0
    %5551 = vmatpush1.bf16.xpose.msra.mxu0 0
    %5552 = vmatprep.subr.bf16.mxu0 0
    %5553 = vmatpush1.bf16.xpose.msra.mxu0 0
    %5554 = vmatprep.subr.bf16.mxu0 0
    %5555 = vmatpush1.bf16.xpose.msra.mxu0 0
    %5556 = vmatprep.subr.bf16.mxu0 0
    %5557 = vmatpush1.bf16.xpose.msra.mxu0 0
    %5558 = vmatprep.subr.bf16.mxu0 0
    %5559 = vmatpush1.bf16.xpose.msra.mxu0 0
    %5560 = vmatprep.mubr.bf16.mxu0 0
    %5561 = vmatmul.mubr.bf16.gmra.mrb[0].mxu0 %v2952
    %v5562 = vpop.f32.mrb[0].mxu0
    %v5563 = vadd.f32 0.0, %v5562
    %v5564 = vpop.f32.mrb[0].mxu0
    %v5565 = vpop.f32.mrb[0].mxu0
    %v5566 = vpop.f32.mrb[0].mxu0
    %5567 = vdwg.mxu0
    %5568 = vmatprep.subr.bf16.mxu0 0
    %5569 = vmatpush1.bf16.xpose.msra.mxu0 %v3084
    %5570 = vmatprep.subr.bf16.mxu0 0
    %5571 = vmatpush1.bf16.xpose.msra.mxu0 %v3085
    %5572 = vmatprep.subr.bf16.mxu0 0
    %5573 = vmatpush1.bf16.xpose.msra.mxu0 0
    %5574 = vmatprep.subr.bf16.mxu0 0
    %5575 = vmatpush1.bf16.xpose.msra.mxu0 0
    %5576 = vmatprep.subr.bf16.mxu0 0
    %5577 = vmatpush1.bf16.xpose.msra.mxu0 0
    %5578 = vmatprep.subr.bf16.mxu0 0
    %5579 = vmatpush1.bf16.xpose.msra.mxu0 0
    %5580 = vmatprep.subr.bf16.mxu0 0
    %5581 = vmatpush1.bf16.xpose.msra.mxu0 0
    %5582 = vmatprep.subr.bf16.mxu0 0
    %5583 = vmatpush1.bf16.xpose.msra.mxu0 0
    %5584 = vmatprep.subr.bf16.mxu0 0
    %5585 = vmatpush1.bf16.xpose.msra.mxu0 0
    %5586 = vmatprep.subr.bf16.mxu0 0
    %5587 = vmatpush1.bf16.xpose.msra.mxu0 0
    %5588 = vmatprep.subr.bf16.mxu0 0
    %5589 = vmatpush1.bf16.xpose.msra.mxu0 0
    %5590 = vmatprep.subr.bf16.mxu0 0
    %5591 = vmatpush1.bf16.xpose.msra.mxu0 0
    %5592 = vmatprep.subr.bf16.mxu0 0
    %5593 = vmatpush1.bf16.xpose.msra.mxu0 0
    %5594 = vmatprep.subr.bf16.mxu0 0
    %5595 = vmatpush1.bf16.xpose.msra.mxu0 0
    %5596 = vmatprep.subr.bf16.mxu0 0
    %5597 = vmatpush1.bf16.xpose.msra.mxu0 0
    %5598 = vmatprep.subr.bf16.mxu0 0
    %5599 = vmatpush1.bf16.xpose.msra.mxu0 0
    %5600 = vmatprep.mubr.bf16.mxu0 0
    %5601 = vmatmul.mubr.bf16.gmra.mrb[0].mxu0 %v2953
    %v5602 = vpop.f32.mrb[0].mxu0
    %v5603 = vadd.f32 0.0, %v5602
    %v5604 = vpop.f32.mrb[0].mxu0
    %v5605 = vpop.f32.mrb[0].mxu0
    %v5606 = vpop.f32.mrb[0].mxu0
    %5607 = vdwg.mxu0
    %5608 = vmatprep.subr.bf16.mxu0 0
    %5609 = vmatpush1.bf16.xpose.msra.mxu0 %v3086
    %5610 = vmatprep.subr.bf16.mxu0 0
    %5611 = vmatpush1.bf16.xpose.msra.mxu0 %v3087
    %5612 = vmatprep.subr.bf16.mxu0 0
    %5613 = vmatpush1.bf16.xpose.msra.mxu0 0
    %5614 = vmatprep.subr.bf16.mxu0 0
    %5615 = vmatpush1.bf16.xpose.msra.mxu0 0
    %5616 = vmatprep.subr.bf16.mxu0 0
    %5617 = vmatpush1.bf16.xpose.msra.mxu0 0
    %5618 = vmatprep.subr.bf16.mxu0 0
    %5619 = vmatpush1.bf16.xpose.msra.mxu0 0
    %5620 = vmatprep.subr.bf16.mxu0 0
    %5621 = vmatpush1.bf16.xpose.msra.mxu0 0
    %5622 = vmatprep.subr.bf16.mxu0 0
    %5623 = vmatpush1.bf16.xpose.msra.mxu0 0
    %5624 = vmatprep.subr.bf16.mxu0 0
    %5625 = vmatpush1.bf16.xpose.msra.mxu0 0
    %5626 = vmatprep.subr.bf16.mxu0 0
    %5627 = vmatpush1.bf16.xpose.msra.mxu0 0
    %5628 = vmatprep.subr.bf16.mxu0 0
    %5629 = vmatpush1.bf16.xpose.msra.mxu0 0
    %5630 = vmatprep.subr.bf16.mxu0 0
    %5631 = vmatpush1.bf16.xpose.msra.mxu0 0
    %5632 = vmatprep.subr.bf16.mxu0 0
    %5633 = vmatpush1.bf16.xpose.msra.mxu0 0
    %5634 = vmatprep.subr.bf16.mxu0 0
    %5635 = vmatpush1.bf16.xpose.msra.mxu0 0
    %5636 = vmatprep.subr.bf16.mxu0 0
    %5637 = vmatpush1.bf16.xpose.msra.mxu0 0
    %5638 = vmatprep.subr.bf16.mxu0 0
    %5639 = vmatpush1.bf16.xpose.msra.mxu0 0
    %5640 = vmatprep.mubr.bf16.mxu0 0
    %5641 = vmatmul.mubr.bf16.gmra.mrb[0].mxu0 %v2954
    %v5642 = vpop.f32.mrb[0].mxu0
    %v5643 = vadd.f32 0.0, %v5642
    %v5644 = vpop.f32.mrb[0].mxu0
    %v5645 = vpop.f32.mrb[0].mxu0
    %v5646 = vpop.f32.mrb[0].mxu0
    %5647 = vdwg.mxu0
    %vm5648 = vcmask 261120
    %v5649 = vsel %vm5648, %v3123, 0.0
    %v5650 = vsel %vm5648, %v3163, 0.0
    %v5651 = vadd.f32 %v5649, %v5650
    %v5652 = vsel %vm5648, %v3203, 0.0
    %v5653 = vadd.f32 %v5651, %v5652
    %v5654 = vsel %vm5648, %v3243, 0.0
    %v5655 = vadd.f32 %v5653, %v5654
    %v5656 = vsel %vm5648, %v3283, 0.0
    %v5657 = vadd.f32 %v5655, %v5656
    %v5658 = vsel %vm5648, %v3323, 0.0
    %v5659 = vadd.f32 %v5657, %v5658
    %v5660 = vsel %vm5648, %v3363, 0.0
    %v5661 = vadd.f32 %v5659, %v5660
    %v5662 = vsel %vm5648, %v3403, 0.0
    %v5663 = vadd.f32 %v5661, %v5662
    %v5664 = vsel %vm5648, %v3443, 0.0
    %v5665 = vadd.f32 %v5663, %v5664
    %v5666 = vsel %vm5648, %v3483, 0.0
    %v5667 = vadd.f32 %v5665, %v5666
    %v5668 = vsel %vm5648, %v3523, 0.0
    %v5669 = vadd.f32 %v5667, %v5668
    %v5670 = vsel %vm5648, %v3563, 0.0
    %v5671 = vadd.f32 %v5669, %v5670
    %v5672 = vsel %vm5648, %v3603, 0.0
    %v5673 = vadd.f32 %v5671, %v5672
    %v5674 = vsel %vm5648, %v3643, 0.0
    %v5675 = vadd.f32 %v5673, %v5674
    %v5676 = vsel %vm5648, %v3683, 0.0
    %v5677 = vadd.f32 %v5675, %v5676
    %v5678 = vsel %vm5648, %v3723, 0.0
    %v5679 = vadd.f32 %v5677, %v5678
    %v5680 = vsel %vm5648, %v3763, 0.0
    %v5681 = vadd.f32 %v5679, %v5680
    %v5682 = vsel %vm5648, %v3803, 0.0
    %v5683 = vadd.f32 %v5681, %v5682
    %v5684 = vsel %vm5648, %v3843, 0.0
    %v5685 = vadd.f32 %v5683, %v5684
    %v5686 = vsel %vm5648, %v3883, 0.0
    %v5687 = vadd.f32 %v5685, %v5686
    %v5688 = vsel %vm5648, %v3923, 0.0
    %v5689 = vadd.f32 %v5687, %v5688
    %v5690 = vsel %vm5648, %v3963, 0.0
    %v5691 = vadd.f32 %v5689, %v5690
    %v5692 = vsel %vm5648, %v4003, 0.0
    %v5693 = vadd.f32 %v5691, %v5692
    %v5694 = vsel %vm5648, %v4043, 0.0
    %v5695 = vadd.f32 %v5693, %v5694
    %v5696 = vsel %vm5648, %v4083, 0.0
    %v5697 = vadd.f32 %v5695, %v5696
    %v5698 = vsel %vm5648, %v4123, 0.0
    %v5699 = vadd.f32 %v5697, %v5698
    %v5700 = vsel %vm5648, %v4163, 0.0
    %v5701 = vadd.f32 %v5699, %v5700
    %v5702 = vsel %vm5648, %v4203, 0.0
    %v5703 = vadd.f32 %v5701, %v5702
    %v5704 = vsel %vm5648, %v4243, 0.0
    %v5705 = vadd.f32 %v5703, %v5704
    %v5706 = vsel %vm5648, %v4283, 0.0
    %v5707 = vadd.f32 %v5705, %v5706
    %v5708 = vsel %vm5648, %v4323, 0.0
    %v5709 = vadd.f32 %v5707, %v5708
    %v5710 = vsel %vm5648, %v4363, 0.0
    %v5711 = vadd.f32 %v5709, %v5710
    %v5712 = vsel %vm5648, %v4403, 0.0
    %v5713 = vadd.f32 %v5711, %v5712
    %v5714 = vsel %vm5648, %v4443, 0.0
    %v5715 = vadd.f32 %v5713, %v5714
    %v5716 = vsel %vm5648, %v4483, 0.0
    %v5717 = vadd.f32 %v5715, %v5716
    %v5718 = vsel %vm5648, %v4523, 0.0
    %v5719 = vadd.f32 %v5717, %v5718
    %v5720 = vsel %vm5648, %v4563, 0.0
    %v5721 = vadd.f32 %v5719, %v5720
    %v5722 = vsel %vm5648, %v4603, 0.0
    %v5723 = vadd.f32 %v5721, %v5722
    %v5724 = vsel %vm5648, %v4643, 0.0
    %v5725 = vadd.f32 %v5723, %v5724
    %v5726 = vsel %vm5648, %v4683, 0.0
    %v5727 = vadd.f32 %v5725, %v5726
    %v5728 = vsel %vm5648, %v4723, 0.0
    %v5729 = vadd.f32 %v5727, %v5728
    %v5730 = vsel %vm5648, %v4763, 0.0
    %v5731 = vadd.f32 %v5729, %v5730
    %v5732 = vsel %vm5648, %v4803, 0.0
    %v5733 = vadd.f32 %v5731, %v5732
    %v5734 = vsel %vm5648, %v4843, 0.0
    %v5735 = vadd.f32 %v5733, %v5734
    %v5736 = vsel %vm5648, %v4883, 0.0
    %v5737 = vadd.f32 %v5735, %v5736
    %v5738 = vsel %vm5648, %v4923, 0.0
    %v5739 = vadd.f32 %v5737, %v5738
    %v5740 = vsel %vm5648, %v4963, 0.0
    %v5741 = vadd.f32 %v5739, %v5740
    %v5742 = vsel %vm5648, %v5003, 0.0
    %v5743 = vadd.f32 %v5741, %v5742
    %v5744 = vsel %vm5648, %v5043, 0.0
    %v5745 = vadd.f32 %v5743, %v5744
    %v5746 = vsel %vm5648, %v5083, 0.0
    %v5747 = vadd.f32 %v5745, %v5746
    %v5748 = vsel %vm5648, %v5123, 0.0
    %v5749 = vadd.f32 %v5747, %v5748
    %v5750 = vsel %vm5648, %v5163, 0.0
    %v5751 = vadd.f32 %v5749, %v5750
    %v5752 = vsel %vm5648, %v5203, 0.0
    %v5753 = vadd.f32 %v5751, %v5752
    %v5754 = vsel %vm5648, %v5243, 0.0
    %v5755 = vadd.f32 %v5753, %v5754
    %v5756 = vsel %vm5648, %v5283, 0.0
    %v5757 = vadd.f32 %v5755, %v5756
    %v5758 = vsel %vm5648, %v5323, 0.0
    %v5759 = vadd.f32 %v5757, %v5758
    %v5760 = vsel %vm5648, %v5363, 0.0
    %v5761 = vadd.f32 %v5759, %v5760
    %v5762 = vsel %vm5648, %v5403, 0.0
    %v5763 = vadd.f32 %v5761, %v5762
    %v5764 = vsel %vm5648, %v5443, 0.0
    %v5765 = vadd.f32 %v5763, %v5764
    %v5766 = vsel %vm5648, %v5483, 0.0
    %v5767 = vadd.f32 %v5765, %v5766
    %v5768 = vsel %vm5648, %v5523, 0.0
    %v5769 = vadd.f32 %v5767, %v5768
    %v5770 = vsel %vm5648, %v5563, 0.0
    %v5771 = vadd.f32 %v5769, %v5770
    %v5772 = vsel %vm5648, %v5603, 0.0
    %v5773 = vadd.f32 %v5771, %v5772
    %v5774 = vsel %vm5648, %v5643, 0.0
    %v5775 = vadd.f32 %v5773, %v5774
    %v5776 = vld [vmem:[%s10] sm:$0x1]
    %v5778 = vlaneseq
    %v5779 = vshrl.u32 %v5778, 7
    %v5780 = vsub.s32 0, %v5779
    %v5781 = vrot.slane %v5776, %v5780
    %v5783 = vadd.f32 %v5775, %v5781
    %v5784 = vld [vmem:[%s11] sm:$0xff]
    %v5785 = vld [vmem:[%s11 + $0x8] sm:$0xff]
    %v5786 = vld [vmem:[%s11 + $0x10] sm:$0xff]
    %v5787 = vld [vmem:[%s11 + $0x18] sm:$0xff]
    %v5788 = vld [vmem:[%s12] sm:$0x1]
    %v5790 = vlaneseq
    %v5791 = vshrl.u32 %v5790, 7
    %v5792 = vsub.s32 0, %v5791
    %v5793 = vrot.slane %v5788, %v5792
    %v5796 = vsel %vm5648, %v5783, 0
    %5798 = vmatprep.subr.mxu0 0.0
    %5799 = vmatpush1.msra.mxu0 %v5784
    %5800 = vmatprep.subr.mxu0 0.0
    %5801 = vmatpush1.msra.mxu0 %v5785
    %5802 = vmatprep.subr.mxu0 0.0
    %5803 = vmatpush1.msra.mxu0 %v5786
    %5804 = vmatprep.subr.mxu0 0.0
    %5805 = vmatpush1.msra.mxu0 %v5787
    %5806 = vmatprep.subr.mxu0 0.0
    %5807 = vmatpush1.msra.mxu0 0.0
    %5808 = vmatprep.subr.mxu0 0.0
    %5809 = vmatpush1.msra.mxu0 0.0
    %5810 = vmatprep.subr.mxu0 0.0
    %5811 = vmatpush1.msra.mxu0 0.0
    %5812 = vmatprep.subr.mxu0 0.0
    %5813 = vmatpush1.msra.mxu0 0.0
    %5814 = vmatprep.subr.mxu0 0.0
    %5815 = vmatpush1.msra.mxu0 0.0
    %5816 = vmatprep.subr.mxu0 0.0
    %5817 = vmatpush1.msra.mxu0 0.0
    %5818 = vmatprep.subr.mxu0 0.0
    %5819 = vmatpush1.msra.mxu0 0.0
    %5820 = vmatprep.subr.mxu0 0.0
    %5821 = vmatpush1.msra.mxu0 0.0
    %5822 = vmatprep.subr.mxu0 0.0
    %5823 = vmatpush1.msra.mxu0 0.0
    %5824 = vmatprep.subr.mxu0 0.0
    %5825 = vmatpush1.msra.mxu0 0.0
    %5826 = vmatprep.subr.mxu0 0.0
    %5827 = vmatpush1.msra.mxu0 0.0
    %5828 = vmatprep.subr.mxu0 0.0
    %5829 = vmatpush1.msra.mxu0 0.0
    %5830 = vmatprep.subr.mxu0 0.0
    %5831 = vmatpush1.msra.mxu0 0.0
    %5832 = vmatprep.subr.mxu0 0.0
    %5833 = vmatpush1.msra.mxu0 0.0
    %5834 = vmatprep.subr.mxu0 0.0
    %5835 = vmatpush1.msra.mxu0 0.0
    %5836 = vmatprep.subr.mxu0 0.0
    %5837 = vmatpush1.msra.mxu0 0.0
    %5838 = vmatprep.subr.mxu0 0.0
    %5839 = vmatpush1.msra.mxu0 0.0
    %5840 = vmatprep.subr.mxu0 0.0
    %5841 = vmatpush1.msra.mxu0 0.0
    %5842 = vmatprep.subr.mxu0 0.0
    %5843 = vmatpush1.msra.mxu0 0.0
    %5844 = vmatprep.subr.mxu0 0.0
    %5845 = vmatpush1.msra.mxu0 0.0
    %5846 = vmatprep.subr.mxu0 0.0
    %5847 = vmatpush1.msra.mxu0 0.0
    %5848 = vmatprep.subr.mxu0 0.0
    %5849 = vmatpush1.msra.mxu0 0.0
    %5850 = vmatprep.subr.mxu0 0.0
    %5851 = vmatpush1.msra.mxu0 0.0
    %5852 = vmatprep.subr.mxu0 0.0
    %5853 = vmatpush1.msra.mxu0 0.0
    %5854 = vmatprep.subr.mxu0 0.0
    %5855 = vmatpush1.msra.mxu0 0.0
    %5856 = vmatprep.subr.mxu0 0.0
    %5857 = vmatpush1.msra.mxu0 0.0
    %5858 = vmatprep.subr.mxu0 0.0
    %5859 = vmatpush1.msra.mxu0 0.0
    %5860 = vmatprep.subr.mxu0 0.0
    %5861 = vmatpush1.msra.mxu0 0.0
    %5862 = vmatprep.mubr.f32.mxu0 0.0
    %5863 = vmatmul.mubr.f32.gmra.mrb[0].mxu0 %v5796
    %v5864 = vpop.f32.mrb[0].mxu0
    %v5865 = vadd.f32 %v5793, %v5864
    %v5866 = vpop.f32.mrb[0].mxu0
    %5867 = vdwg.mxu0
    %v5868 = vld [vmem:[%s13] sm:$0xff]
    %v5869 = vld [vmem:[%s13 + $0x8] sm:$0xff]
    %v5870 = vld [vmem:[%s13 + $0x10] sm:$0xff]
    %v5871 = vld [vmem:[%s13 + $0x18] sm:$0xff]
    %v5872 = vld [vmem:[%s14] sm:$0x1]
    %v5874 = vlaneseq
    %v5875 = vshrl.u32 %v5874, 7
    %v5876 = vsub.s32 0, %v5875
    %v5877 = vrot.slane %v5872, %v5876
    %v5880 = vsel %vm5648, %v5865, 0
    %5882 = vmatprep.subr.mxu0 0.0
    %5883 = vmatpush1.msra.mxu0 %v5868
    %5884 = vmatprep.subr.mxu0 0.0
    %5885 = vmatpush1.msra.mxu0 %v5869
    %5886 = vmatprep.subr.mxu0 0.0
    %5887 = vmatpush1.msra.mxu0 %v5870
    %5888 = vmatprep.subr.mxu0 0.0
    %5889 = vmatpush1.msra.mxu0 %v5871
    %5890 = vmatprep.subr.mxu0 0.0
    %5891 = vmatpush1.msra.mxu0 0.0
    %5892 = vmatprep.subr.mxu0 0.0
    %5893 = vmatpush1.msra.mxu0 0.0
    %5894 = vmatprep.subr.mxu0 0.0
    %5895 = vmatpush1.msra.mxu0 0.0
    %5896 = vmatprep.subr.mxu0 0.0
    %5897 = vmatpush1.msra.mxu0 0.0
    %5898 = vmatprep.subr.mxu0 0.0
    %5899 = vmatpush1.msra.mxu0 0.0
    %5900 = vmatprep.subr.mxu0 0.0
    %5901 = vmatpush1.msra.mxu0 0.0
    %5902 = vmatprep.subr.mxu0 0.0
    %5903 = vmatpush1.msra.mxu0 0.0
    %5904 = vmatprep.subr.mxu0 0.0
    %5905 = vmatpush1.msra.mxu0 0.0
    %5906 = vmatprep.subr.mxu0 0.0
    %5907 = vmatpush1.msra.mxu0 0.0
    %5908 = vmatprep.subr.mxu0 0.0
    %5909 = vmatpush1.msra.mxu0 0.0
    %5910 = vmatprep.subr.mxu0 0.0
    %5911 = vmatpush1.msra.mxu0 0.0
    %5912 = vmatprep.subr.mxu0 0.0
    %5913 = vmatpush1.msra.mxu0 0.0
    %5914 = vmatprep.subr.mxu0 0.0
    %5915 = vmatpush1.msra.mxu0 0.0
    %5916 = vmatprep.subr.mxu0 0.0
    %5917 = vmatpush1.msra.mxu0 0.0
    %5918 = vmatprep.subr.mxu0 0.0
    %5919 = vmatpush1.msra.mxu0 0.0
    %5920 = vmatprep.subr.mxu0 0.0
    %5921 = vmatpush1.msra.mxu0 0.0
    %5922 = vmatprep.subr.mxu0 0.0
    %5923 = vmatpush1.msra.mxu0 0.0
    %5924 = vmatprep.subr.mxu0 0.0
    %5925 = vmatpush1.msra.mxu0 0.0
    %5926 = vmatprep.subr.mxu0 0.0
    %5927 = vmatpush1.msra.mxu0 0.0
    %5928 = vmatprep.subr.mxu0 0.0
    %5929 = vmatpush1.msra.mxu0 0.0
    %5930 = vmatprep.subr.mxu0 0.0
    %5931 = vmatpush1.msra.mxu0 0.0
    %5932 = vmatprep.subr.mxu0 0.0
    %5933 = vmatpush1.msra.mxu0 0.0
    %5934 = vmatprep.subr.mxu0 0.0
    %5935 = vmatpush1.msra.mxu0 0.0
    %5936 = vmatprep.subr.mxu0 0.0
    %5937 = vmatpush1.msra.mxu0 0.0
    %5938 = vmatprep.subr.mxu0 0.0
    %5939 = vmatpush1.msra.mxu0 0.0
    %5940 = vmatprep.subr.mxu0 0.0
    %5941 = vmatpush1.msra.mxu0 0.0
    %5942 = vmatprep.subr.mxu0 0.0
    %5943 = vmatpush1.msra.mxu0 0.0
    %5944 = vmatprep.subr.mxu0 0.0
    %5945 = vmatpush1.msra.mxu0 0.0
    %5946 = vmatprep.mubr.f32.mxu0 0.0
    %5947 = vmatmul.mubr.f32.gmra.mrb[0].mxu0 %v5880
    %v5948 = vpop.f32.mrb[0].mxu0
    %v5949 = vadd.f32 %v5877, %v5948
    %v5950 = vpop.f32.mrb[0].mxu0
    %5951 = vdwg.mxu0
    %vm5952 = vcmask 58368
    %5953 = vst.msk [vmem:[#allocation4] sm:$0x3] %vm5952, %v5949
    // Predicated region
    $region62: #{speech_accent_forward.1} parent=1 // pred_check
      _
    $region63: #{speech_accent_forward.1} parent=1 // pred_check_branch
      %5955 = sbr.rel (0) target = $region65
    $region64: #{speech_accent_forward.1} parent=1 // pred_region
      %s5957 = ssub.s32 32, 32
      %5958 = vsyncadd [#allocation5], %s5957
      %s5960 = sshll.u32 [#allocation4], 4
      %s5961 = int_to_ptr.vmem [resolvable:$true] %s5960
      %5963 = dma.vmem_to_hbm [thread:$0]  %s5961, 32, %s15, [#allocation5]
    $region65: #{speech_accent_forward.1} parent=1 // pred_fallthru
      _
    // Predicated region
    $region66: #{speech_accent_forward.1} parent=1 // pred_check
      _
    $region67: #{speech_accent_forward.1} parent=1 // pred_check_branch
      %5965 = sbr.rel (0) target = $region69
    $region68: #{speech_accent_forward.1} parent=1 // pred_region
      %5966 = dma.done [#allocation5], 32
    $region69: #{speech_accent_forward.1} parent=1 // pred_fallthru
      _
    %5967 = vsyncpa [#allocation5], 1
  %5968 = vsyncmov [#allocation3]
  %s5969 = vpop.sfrf %5968
  %p5970 = scmp.eq.s32.totalorder %s5969, 0
  %p5971 = pneg %p5970
  %5973 = shalt.err (%p5971)

</llo_original>
